<compile_context>
chip_gen: v7x
topology: tpu7x:2x2x1
jax: 0.10.0
libtpu: 0.0.40
codegen_flags: <defaults>
</compile_context>

<pallas_src>
import jax
import jax.numpy as jnp
from jax import lax
from jax.experimental import pallas as pl
from jax.experimental.pallas import tpu as pltpu

NEG = -1e30  # finite "-inf" used for tag padding (avoids inf-inf NaNs)


def _round_up(x, m):
    return ((x + m - 1) // m) * m


def _pick_batch_tile(bp, requested=None):
    """Largest multiple-of-16 divisor of bp that is <= the requested cap."""
    if requested is None:
        cap = min(bp, 128)
    else:
        cap = max(16, min(_round_up(requested, 16), bp))
    bt = 16
    for cand in range(16, cap + 1, 16):
        if bp % cand == 0:
            bt = cand
    return bt


# ----------------------------------------------------------------------------
# Fused kernel: BiLSTM -> Linear -> CRF Viterbi DP -> backtrack.
# Per grid step it sees one batch tile Bt (multiple of 16); E/H/4H padded to
# multiples of 128, tag axis padded only to Nt = round_up(N, 8).
# ----------------------------------------------------------------------------
def _ner_fused_kernel(emb_ref, mask_ref,
                      wih_ref, b_ref,
                      whh_f_ref, whh_b_ref,
                      wlin_f_ref, wlin_b_ref, blin_ref,
                      trans_ref, start_ref, end_ref,
                      tags_ref,
                      gx_scr, hf_scr, hb_scr, em_scr, hist_scr):
    T, Bt, Ep = emb_ref.shape
    Hp = whh_f_ref.shape[0]            # whh packed as (Hp, 4Hp) bf16
    H4 = 4 * Hp
    Np = em_scr.shape[2]
    Nt = trans_ref.shape[0]
    Tp = tags_ref.shape[1]

    # ---- 1. fused input-to-hidden projection: ONE bf16 MXU matmul ----------
    emb2d = emb_ref[...].reshape(T * Bt, Ep)                       # bf16
    gx = jnp.dot(emb2d, wih_ref[...],
                 preferred_element_type=jnp.float32) + b_ref[...]  # (T*Bt, 8Hp)
    gx_scr[...] = gx.astype(jnp.bfloat16).reshape(gx_scr.shape)

    # ---- 2. interleaved fwd/bwd recurrences (two independent chains) -------
    whh_f = whh_f_ref[...]             # bf16, hoisted loads
    whh_b = whh_b_ref[...]

    def cell(gx_bf, h, c, whh):
        g = gx_bf.astype(jnp.float32) + jnp.dot(
            h.astype(jnp.bfloat16), whh, preferred_element_type=jnp.float32)
        i = jax.nn.sigmoid(g[:, 0:Hp])
        f = jax.nn.sigmoid(g[:, Hp:2 * Hp])
        gg = jnp.tanh(g[:, 2 * Hp:3 * Hp])
        o = jax.nn.sigmoid(g[:, 3 * Hp:4 * Hp])
        c_new = f * c + i * gg
        h_new = o * jnp.tanh(c_new)
        return h_new, c_new

    def rec_step(k, carry):
        hf, cf, hb, cb = carry
        tb = T - 1 - k
        g_f = gx_scr[k]                 # (Bt, 8Hp) bf16
        g_b = gx_scr[tb]
        hf, cf = cell(g_f[:, :H4], hf, cf, whh_f)
        hb, cb = cell(g_b[:, H4:], hb, cb, whh_b)
        hf_scr[k] = hf.astype(jnp.bfloat16)
        hb_scr[tb] = hb.astype(jnp.bfloat16)
        return (hf, cf, hb, cb)

    z = jnp.zeros((Bt, Hp), jnp.float32)
    lax.fori_loop(0, T, rec_step, (z, z, z, z))

    # ---- 3. linear projection to emissions (bf16 MXU, f32 acc, in VMEM) ----
    hf2d = hf_scr[...].reshape(T * Bt, Hp)
    hb2d = hb_scr[...].reshape(T * Bt, Hp)
    em = (jnp.dot(hf2d, wlin_f_ref[...], preferred_element_type=jnp.float32)
          + jnp.dot(hb2d, wlin_b_ref[...], preferred_element_type=jnp.float32)
          + blin_ref[...])                                          # (T*Bt, Np)
    em_scr[...] = em.reshape(em_scr.shape)

    # ---- 4. CRF Viterbi DP on the small Nt tag axis (masked carry) ----------
    trans_t = trans_ref[...]                      # (Nt, Nt), [j, i] = trans[i->j]
    score0 = start_ref[...] + em_scr[0][:, :Nt]   # (Bt, Nt)

    def vit_step(t, score):
        # nxt[b, j, i] = score[b, i] + trans[i->j]; emission added after max.
        nxt = score[:, None, :] + trans_t[None, :, :]              # (Bt, Nt, Nt)
        best = jnp.max(nxt, axis=-1)                               # (Bt, Nt)
        iota3 = lax.broadcasted_iota(jnp.int32, nxt.shape, 2)
        idx = jnp.min(jnp.where(nxt == best[:, :, None], iota3, Nt), axis=-1)
        hist_scr[t] = idx                                          # int32
        new_score = best + em_scr[t][:, :Nt]
        m = mask_ref[t]                                            # (Bt, 1)
        return jnp.where(m > 0, new_score, score)

    score = lax.fori_loop(1, T, vit_step, score0)
    final = score + end_ref[...]                                   # (Bt, Nt)

    # ---- 5. backtrack; accumulate path in registers, single lane-dense store
    lane_nt = lax.broadcasted_iota(jnp.int32, (Bt, Nt), 1)
    lane_tp = lax.broadcasted_iota(jnp.int32, (Bt, Tp), 1)
    fmax = jnp.max(final, axis=-1, keepdims=True)
    cur0 = jnp.min(jnp.where(final == fmax, lane_nt, Nt),
                   axis=-1, keepdims=True).astype(jnp.int32)       # (Bt, 1)
    tags0 = jnp.where(lane_tp == (T - 1), cur0, 0)                 # (Bt, Tp)

    def back_step(k, carry):
        cur, tags = carry
        t = T - 1 - k
        h_t = hist_scr[t]                                          # (Bt, Nt)
        prev = jnp.sum(jnp.where(lane_nt == cur, h_t, 0),
                       axis=-1, keepdims=True)                     # (Bt, 1)
        m = mask_ref[t]
        prev = jnp.where(m > 0, prev, cur)
        tags = jnp.where(lane_tp == (t - 1), prev, tags)
        return (prev, tags)

    _, tags = lax.fori_loop(0, T - 1, back_step, (cur0, tags0))
    tags_ref[...] = tags


# ----------------------------------------------------------------------------
# Parameters (deterministic, PyTorch-like init).
# ----------------------------------------------------------------------------
def make_params(key, vocab_size, embedding_dim, hidden_dim, num_tags):
    H = hidden_dim // 2
    ks = jax.random.split(key, 12)
    lstm_s = 1.0 / (H ** 0.5)
    lin_s = 1.0 / (hidden_dim ** 0.5)

    def u(k, shape, s):
        return jax.random.uniform(k, shape, jnp.float32, -s, s)

    return dict(
        embedding=jax.random.normal(ks[0], (vocab_size, embedding_dim), jnp.float32),
        wih_f=u(ks[1], (4 * H, embedding_dim), lstm_s),
        whh_f=u(ks[2], (4 * H, H), lstm_s),
        b_f=u(ks[3], (4 * H,), lstm_s),          # = b_ih + b_hh folded together
        wih_b=u(ks[4], (4 * H, embedding_dim), lstm_s),
        whh_b=u(ks[5], (4 * H, H), lstm_s),
        b_b=u(ks[6], (4 * H,), lstm_s),
        w_lin=u(ks[7], (num_tags, hidden_dim), lin_s),
        b_lin=u(ks[8], (num_tags,), lin_s),
        trans=0.1 * jax.random.normal(ks[9], (num_tags, num_tags), jnp.float32),
        start=0.1 * jax.random.normal(ks[10], (num_tags,), jnp.float32),
        end=0.1 * jax.random.normal(ks[11], (num_tags,), jnp.float32),
    )


# ----------------------------------------------------------------------------
# Forward wrapper (NERLSTM_CRF.forward equivalent).
# ----------------------------------------------------------------------------
def ner_lstm_crf_forward(params, x, mask, *, batch_tile=None):
    """x: (B, T) int32 token ids, mask: (B, T) {0,1}. Returns tags (B, T) int32."""
    B, T = x.shape
    E = params["embedding"].shape[1]
    H = params["whh_f"].shape[1]
    N = params["trans"].shape[0]

    Bp = _round_up(B, 16)          # 16: native bf16 sublane tile
    Ep = _round_up(E, 128)
    Hp = _round_up(H, 128)
    Np = _round_up(N, 128)
    Nt = _round_up(N, 8)
    Tp = _round_up(T, 128)
    Bt = _pick_batch_tile(Bp, batch_tile)
    grid = (Bp // Bt,)

    # Embedding gather is glue (data-dependent row gather); gathered in bf16.
    # nn.Dropout is identity at inference time (eval mode).
    emb = params["embedding"].astype(jnp.bfloat16)[x]                   # (B, T, E)
    emb_tm = jnp.transpose(emb, (1, 0, 2))                               # (T, B, E)
    emb_tm = jnp.pad(emb_tm, ((0, 0), (0, Bp - B), (0, Ep - E)))

    mask_tm = jnp.transpose(mask.astype(jnp.float32), (1, 0))[:, :, None]
    mask_tm = jnp.pad(mask_tm, ((0, 0), (0, Bp - B), (0, 0)))            # (T, Bp, 1)

    # --- pack LSTM weights: transpose + gate-block pad (i,f,g,o at g*Hp) ----
    def pack_gates_w(w, in_dim, in_pad):     # w: (4H, in)  ->  (in_pad, 4Hp)
        wt = w.T
        out = jnp.zeros((in_pad, 4 * Hp), jnp.float32)
        for g in range(4):
            out = out.at[:in_dim, g * Hp:g * Hp + H].set(wt[:, g * H:(g + 1) * H])
        return out

    def pack_gates_b(b):                     # (4H,) -> (1, 4Hp)
        out = jnp.zeros((1, 4 * Hp), jnp.float32)
        for g in range(4):
            out = out.at[0, g * Hp:g * Hp + H].set(b[g * H:(g + 1) * H])
        return out

    # fused input-to-hidden weight: [fwd gates | bwd gates] -> (Ep, 8Hp) bf16
    wih_cat = jnp.concatenate(
        [pack_gates_w(params["wih_f"], E, Ep),
         pack_gates_w(params["wih_b"], E, Ep)], axis=1).astype(jnp.bfloat16)
    b_cat = jnp.concatenate(
        [pack_gates_b(params["b_f"]), pack_gates_b(params["b_b"])], axis=1)  # (1, 8Hp)

    whh_f = pack_gates_w(params["whh_f"], H, Hp).astype(jnp.bfloat16)        # (Hp, 4Hp)
    whh_b = pack_gates_w(params["whh_b"], H, Hp).astype(jnp.bfloat16)

    # --- linear (split for concat([h_fwd, h_bwd])) + CRF params -------------
    wlin_t = params["w_lin"].T                                               # (2H, N)
    wlin_f = jnp.zeros((Hp, Np), jnp.float32).at[:H, :N].set(wlin_t[:H]) \
                                             .astype(jnp.bfloat16)
    wlin_b = jnp.zeros((Hp, Np), jnp.float32).at[:H, :N].set(wlin_t[H:]) \
                                             .astype(jnp.bfloat16)
    blin = jnp.full((1, Np), NEG, jnp.float32).at[0, :N].set(params["b_lin"])

    # CRF params on the small Nt tag axis only.
    trans_small = jnp.full((Nt, Nt), NEG, jnp.float32).at[:N, :N].set(params["trans"].T)
    start_small = jnp.full((1, Nt), NEG, jnp.float32).at[0, :N].set(params["start"])
    end_small = jnp.full((1, Nt), NEG, jnp.float32).at[0, :N].set(params["end"])

    vmem = pl.BlockSpec(memory_space=pltpu.MemorySpace.VMEM)   # full, grid-invariant

    grid_spec = pltpu.PrefetchScalarGridSpec(
        num_scalar_prefetch=0,
        grid=grid,
        in_specs=[
            pl.BlockSpec((T, Bt, Ep), lambda b: (0, b, 0)),    # embeddings (bf16)
            pl.BlockSpec((T, Bt, 1), lambda b: (0, b, 0)),     # mask
            vmem,                                              # wih_cat
            vmem,                                              # b_cat
            vmem, vmem,                                        # whh_f, whh_b
            vmem, vmem, vmem,                                  # wlin_f, wlin_b, blin
            vmem, vmem, vmem,                                  # trans, start, end
        ],
        out_specs=pl.BlockSpec((Bt, Tp), lambda b: (b, 0)),    # lane-dense tags
        scratch_shapes=[
            pltpu.VMEM((T, Bt, 8 * Hp), jnp.bfloat16),   # fused gates_x (fwd|bwd)
            pltpu.VMEM((T, Bt, Hp), jnp.bfloat16),       # h fwd
            pltpu.VMEM((T, Bt, Hp), jnp.bfloat16),       # h bwd
            pltpu.VMEM((T, Bt, Np), jnp.float32),        # emissions
            pltpu.VMEM((T, Bt, Nt), jnp.int32),          # viterbi backpointers
            # TODO(synk): int8 backpointers would shave a bit more VMEM once the
            # small-Nt packed-store path is worth the extra lowering risk.
        ],
    )

    tags_pad = pl.pallas_call(
        _ner_fused_kernel,
        out_shape=jax.ShapeDtypeStruct((Bp, Tp), jnp.int32),
        grid_spec=grid_spec,
        compiler_params=pltpu.CompilerParams(
            dimension_semantics=("parallel",),
            vmem_limit_bytes=48 * 1024 * 1024),
    )(emb_tm, mask_tm, wih_cat, b_cat, whh_f, whh_b,
      wlin_f, wlin_b, blin, trans_small, start_small, end_small)

    # TODO(synk): for very long sequences on v7x (64 MiB VMEM) pass batch_tile=32
    # so the per-tile scratch (dominated by the bf16 gates buffer) stays resident.
    return tags_pad[:B, :T].astype(jnp.int32)


if __name__ == "__main__":
    key = jax.random.PRNGKey(0)
    pkey, xkey = jax.random.split(key)

    # small, forward-consistent shapes
    vocab_size, embedding_dim, hidden_dim, num_tags = 50, 32, 32, 8
    B, T = 2, 8

    params = make_params(pkey, vocab_size, embedding_dim, hidden_dim, num_tags)
    x = jax.random.randint(xkey, (B, T), 0, vocab_size, dtype=jnp.int32)
    mask = jnp.ones((B, T), dtype=jnp.int32)

    tags = ner_lstm_crf_forward(params, x, mask)
    jax.block_until_ready(tags)
    assert tags.shape == (B, T) and tags.dtype == jnp.int32
    assert bool(jnp.all((tags >= 0) & (tags < num_tags)))
    print("KERNEL_OK")
</pallas_src>

<mosaic_0001>
module attributes {stable_mosaic.version = 11 : i64} {
  func.func @_ner_fused_kernel(%arg0: i32, %arg1: memref<8x16x128xbf16, #tpu.memory_space<vmem>>, %arg2: memref<8x16x1xf32, #tpu.memory_space<vmem>>, %arg3: memref<128x1024xbf16, #tpu.memory_space<vmem>>, %arg4: memref<1x1024xf32, #tpu.memory_space<vmem>>, %arg5: memref<128x512xbf16, #tpu.memory_space<vmem>>, %arg6: memref<128x512xbf16, #tpu.memory_space<vmem>>, %arg7: memref<128x128xbf16, #tpu.memory_space<vmem>>, %arg8: memref<128x128xbf16, #tpu.memory_space<vmem>>, %arg9: memref<1x128xf32, #tpu.memory_space<vmem>>, %arg10: memref<8x8xf32, #tpu.memory_space<vmem>>, %arg11: memref<1x8xf32, #tpu.memory_space<vmem>>, %arg12: memref<1x8xf32, #tpu.memory_space<vmem>>, %arg13: memref<16x128xi32, #tpu.memory_space<vmem>>, %arg14: memref<8x16x1024xbf16, #tpu.memory_space<vmem>>, %arg15: memref<8x16x128xbf16, #tpu.memory_space<vmem>>, %arg16: memref<8x16x128xbf16, #tpu.memory_space<vmem>>, %arg17: memref<8x16x128xf32, #tpu.memory_space<vmem>>, %arg18: memref<8x16x8xi32, #tpu.memory_space<vmem>>) attributes {dimension_semantics = [#tpu.dimension_semantics<parallel>], iteration_bounds = array<i64: 1>, scalar_prefetch = 0 : i64, scratch_operands = 5 : i64, tpu.core_type = #tpu.core_type<tc>, window_params = [{transform_indices = @transform_0, window_bounds = array<i64: 8, 16, 128>}, {transform_indices = @transform_1, window_bounds = array<i64: 8, 16, 1>}, {pipeline_mode = #tpu.pipeline_mode<synchronous>, transform_indices = @transform_2, window_bounds = array<i64: 128, 1024>}, {pipeline_mode = #tpu.pipeline_mode<synchronous>, transform_indices = @transform_3, window_bounds = array<i64: 1, 1024>}, {pipeline_mode = #tpu.pipeline_mode<synchronous>, transform_indices = @transform_4, window_bounds = array<i64: 128, 512>}, {pipeline_mode = #tpu.pipeline_mode<synchronous>, transform_indices = @transform_5, window_bounds = array<i64: 128, 512>}, {pipeline_mode = #tpu.pipeline_mode<synchronous>, transform_indices = @transform_6, window_bounds = array<i64: 128, 128>}, {pipeline_mode = #tpu.pipeline_mode<synchronous>, transform_indices = @transform_7, window_bounds = array<i64: 128, 128>}, {pipeline_mode = #tpu.pipeline_mode<synchronous>, transform_indices = @transform_8, window_bounds = array<i64: 1, 128>}, {pipeline_mode = #tpu.pipeline_mode<synchronous>, transform_indices = @transform_9, window_bounds = array<i64: 8, 8>}, {pipeline_mode = #tpu.pipeline_mode<synchronous>, transform_indices = @transform_10, window_bounds = array<i64: 1, 8>}, {pipeline_mode = #tpu.pipeline_mode<synchronous>, transform_indices = @transform_11, window_bounds = array<i64: 1, 8>}, {transform_indices = @transform_12, window_bounds = array<i64: 16, 128>}]} {
    %c0 = arith.constant 0 : index
    %c0_0 = arith.constant 0 : index
    %c0_1 = arith.constant 0 : index
    %0 = vector.load %arg1[%c0, %c0_0, %c0_1] : memref<8x16x128xbf16, #tpu.memory_space<vmem>>, vector<8x16x128xbf16>
    %1 = vector.shape_cast %0 : vector<8x16x128xbf16> to vector<128x128xbf16>
    %c0_2 = arith.constant 0 : index
    %c0_3 = arith.constant 0 : index
    %2 = vector.load %arg3[%c0_2, %c0_3] : memref<128x1024xbf16, #tpu.memory_space<vmem>>, vector<128x1024xbf16>
    %cst = arith.constant dense<0.000000e+00> : vector<128x1024xf32>
    %3 = tpu.matmul %1, %2, %cst {dimension_numbers = #tpu.dot_dimension_numbers<[1], [0], [0], [1], [0, 0, 1, 1], [], []>} : vector<128x128xbf16>, vector<128x1024xbf16>, vector<128x1024xf32> -> vector<128x1024xf32>
    %c0_4 = arith.constant 0 : index
    %c0_5 = arith.constant 0 : index
    %4 = vector.load %arg4[%c0_4, %c0_5] : memref<1x1024xf32, #tpu.memory_space<vmem>>, vector<1x1024xf32>
    %5 = vector.broadcast %4 : vector<1x1024xf32> to vector<128x1024xf32>
    %6 = arith.addf %3, %5 : vector<128x1024xf32>
    %7 = arith.truncf %6 : vector<128x1024xf32> to vector<128x1024xbf16>
    %8 = vector.shape_cast %7 : vector<128x1024xbf16> to vector<8x16x1024xbf16>
    %c0_6 = arith.constant 0 : index
    %c0_7 = arith.constant 0 : index
    %c0_8 = arith.constant 0 : index
    %9 = vector.load %arg14[%c0_6, %c0_7, %c0_8] : memref<8x16x1024xbf16, #tpu.memory_space<vmem>>, vector<8x16x1024xbf16>
    tpu.vector_store %arg14[%c0_6, %c0_7, %c0_8], %8 {strides = array<i32>} : memref<8x16x1024xbf16, #tpu.memory_space<vmem>>, vector<8x16x1024xbf16>,
    %c0_9 = arith.constant 0 : index
    %c0_10 = arith.constant 0 : index
    %10 = vector.load %arg5[%c0_9, %c0_10] : memref<128x512xbf16, #tpu.memory_space<vmem>>, vector<128x512xbf16>
    %c0_11 = arith.constant 0 : index
    %c0_12 = arith.constant 0 : index
    %11 = vector.load %arg6[%c0_11, %c0_12] : memref<128x512xbf16, #tpu.memory_space<vmem>>, vector<128x512xbf16>
    %cst_13 = arith.constant 0.000000e+00 : f32
    %12 = vector.broadcast %cst_13 : f32 to vector<16x128xf32>
    %c0_i32 = arith.constant 0 : i32
    %c8_i32 = arith.constant 8 : i32
    %13 = arith.addi %c0_i32, %c8_i32 : i32
    %c1_i32 = arith.constant 1 : i32
    %14:4 = scf.for %arg19 = %c0_i32 to %13 step %c1_i32 iter_args(%arg20 = %12, %arg21 = %12, %arg22 = %12, %arg23 = %12) -> (vector<16x128xf32>, vector<16x128xf32>, vector<16x128xf32>, vector<16x128xf32>)  : i32 {
      %c7_i32_55 = arith.constant 7 : i32
      %60 = arith.subi %c7_i32_55, %arg19 : i32
      %61 = arith.index_cast %arg19 : i32 to index
      %c0_56 = arith.constant 0 : index
      %c0_57 = arith.constant 0 : index
      %62 = vector.load %arg14[%61, %c0_56, %c0_57] : memref<8x16x1024xbf16, #tpu.memory_space<vmem>>, vector<1x16x1024xbf16>
      %63 = vector.shape_cast %62 : vector<1x16x1024xbf16> to vector<16x1024xbf16>
      %64 = arith.index_cast %60 : i32 to index
      %c0_58 = arith.constant 0 : index
      %c0_59 = arith.constant 0 : index
      %65 = vector.load %arg14[%64, %c0_58, %c0_59] : memref<8x16x1024xbf16, #tpu.memory_space<vmem>>, vector<1x16x1024xbf16>
      %66 = vector.shape_cast %65 : vector<1x16x1024xbf16> to vector<16x1024xbf16>
      %67 = vector.extract_strided_slice %63 {offsets = [0, 0], sizes = [16, 512], strides = [1, 1]} : vector<16x1024xbf16> to vector<16x512xbf16>
      %68 = arith.extf %67 : vector<16x512xbf16> to vector<16x512xf32>
      %69 = arith.truncf %arg20 : vector<16x128xf32> to vector<16x128xbf16>
      %cst_60 = arith.constant dense<0.000000e+00> : vector<16x512xf32>
      %70 = tpu.matmul %69, %10, %cst_60 {dimension_numbers = #tpu.dot_dimension_numbers<[1], [0], [0], [1], [0, 0, 1, 1], [], []>} : vector<16x128xbf16>, vector<128x512xbf16>, vector<16x512xf32> -> vector<16x512xf32>
      %71 = arith.addf %68, %70 : vector<16x512xf32>
      %72 = vector.extract_strided_slice %71 {offsets = [0, 0], sizes = [16, 128], strides = [1, 1]} : vector<16x512xf32> to vector<16x128xf32>
      %73 = arith.negf %72 : vector<16x128xf32>
      %74 = math.exp %73 : vector<16x128xf32>
      %cst_61 = arith.constant 1.000000e+00 : f32
      %75 = vector.broadcast %cst_61 : f32 to vector<16x128xf32>
      %76 = arith.addf %75, %74 : vector<16x128xf32>
      %77 = arith.divf %75, %76 : vector<16x128xf32>
      %78 = vector.extract_strided_slice %71 {offsets = [0, 128], sizes = [16, 128], strides = [1, 1]} : vector<16x512xf32> to vector<16x128xf32>
      %79 = arith.negf %78 : vector<16x128xf32>
      %80 = math.exp %79 : vector<16x128xf32>
      %cst_62 = arith.constant 1.000000e+00 : f32
      %81 = vector.broadcast %cst_62 : f32 to vector<16x128xf32>
      %82 = arith.addf %81, %80 : vector<16x128xf32>
      %83 = arith.divf %81, %82 : vector<16x128xf32>
      %84 = vector.extract_strided_slice %71 {offsets = [0, 256], sizes = [16, 128], strides = [1, 1]} : vector<16x512xf32> to vector<16x128xf32>
      %85 = math.tanh %84 : vector<16x128xf32>
      %86 = vector.extract_strided_slice %71 {offsets = [0, 384], sizes = [16, 128], strides = [1, 1]} : vector<16x512xf32> to vector<16x128xf32>
      %87 = arith.negf %86 : vector<16x128xf32>
      %88 = math.exp %87 : vector<16x128xf32>
      %cst_63 = arith.constant 1.000000e+00 : f32
      %89 = vector.broadcast %cst_63 : f32 to vector<16x128xf32>
      %90 = arith.addf %89, %88 : vector<16x128xf32>
      %91 = arith.divf %89, %90 : vector<16x128xf32>
      %92 = arith.mulf %83, %arg21 : vector<16x128xf32>
      %93 = arith.mulf %77, %85 : vector<16x128xf32>
      %94 = arith.addf %92, %93 : vector<16x128xf32>
      %95 = math.tanh %94 : vector<16x128xf32>
      %96 = arith.mulf %91, %95 : vector<16x128xf32>
      %97 = vector.extract_strided_slice %66 {offsets = [0, 512], sizes = [16, 512], strides = [1, 1]} : vector<16x1024xbf16> to vector<16x512xbf16>
      %98 = arith.extf %97 : vector<16x512xbf16> to vector<16x512xf32>
      %99 = arith.truncf %arg22 : vector<16x128xf32> to vector<16x128xbf16>
      %cst_64 = arith.constant dense<0.000000e+00> : vector<16x512xf32>
      %100 = tpu.matmul %99, %11, %cst_64 {dimension_numbers = #tpu.dot_dimension_numbers<[1], [0], [0], [1], [0, 0, 1, 1], [], []>} : vector<16x128xbf16>, vector<128x512xbf16>, vector<16x512xf32> -> vector<16x512xf32>
      %101 = arith.addf %98, %100 : vector<16x512xf32>
      %102 = vector.extract_strided_slice %101 {offsets = [0, 0], sizes = [16, 128], strides = [1, 1]} : vector<16x512xf32> to vector<16x128xf32>
      %103 = arith.negf %102 : vector<16x128xf32>
      %104 = math.exp %103 : vector<16x128xf32>
      %cst_65 = arith.constant 1.000000e+00 : f32
      %105 = vector.broadcast %cst_65 : f32 to vector<16x128xf32>
      %106 = arith.addf %105, %104 : vector<16x128xf32>
      %107 = arith.divf %105, %106 : vector<16x128xf32>
      %108 = vector.extract_strided_slice %101 {offsets = [0, 128], sizes = [16, 128], strides = [1, 1]} : vector<16x512xf32> to vector<16x128xf32>
      %109 = arith.negf %108 : vector<16x128xf32>
      %110 = math.exp %109 : vector<16x128xf32>
      %cst_66 = arith.constant 1.000000e+00 : f32
      %111 = vector.broadcast %cst_66 : f32 to vector<16x128xf32>
      %112 = arith.addf %111, %110 : vector<16x128xf32>
      %113 = arith.divf %111, %112 : vector<16x128xf32>
      %114 = vector.extract_strided_slice %101 {offsets = [0, 256], sizes = [16, 128], strides = [1, 1]} : vector<16x512xf32> to vector<16x128xf32>
      %115 = math.tanh %114 : vector<16x128xf32>
      %116 = vector.extract_strided_slice %101 {offsets = [0, 384], sizes = [16, 128], strides = [1, 1]} : vector<16x512xf32> to vector<16x128xf32>
      %117 = arith.negf %116 : vector<16x128xf32>
      %118 = math.exp %117 : vector<16x128xf32>
      %cst_67 = arith.constant 1.000000e+00 : f32
      %119 = vector.broadcast %cst_67 : f32 to vector<16x128xf32>
      %120 = arith.addf %119, %118 : vector<16x128xf32>
      %121 = arith.divf %119, %120 : vector<16x128xf32>
      %122 = arith.mulf %113, %arg23 : vector<16x128xf32>
      %123 = arith.mulf %107, %115 : vector<16x128xf32>
      %124 = arith.addf %122, %123 : vector<16x128xf32>
      %125 = math.tanh %124 : vector<16x128xf32>
      %126 = arith.mulf %121, %125 : vector<16x128xf32>
      %127 = arith.truncf %96 : vector<16x128xf32> to vector<16x128xbf16>
      %128 = arith.index_cast %arg19 : i32 to index
      %c0_68 = arith.constant 0 : index
      %c0_69 = arith.constant 0 : index
      %129 = vector.load %arg15[%128, %c0_68, %c0_69] : memref<8x16x128xbf16, #tpu.memory_space<vmem>>, vector<1x16x128xbf16>
      %130 = vector.shape_cast %129 : vector<1x16x128xbf16> to vector<16x128xbf16>
      %131 = vector.shape_cast %127 : vector<16x128xbf16> to vector<1x16x128xbf16>
      tpu.vector_store %arg15[%128, %c0_68, %c0_69], %131 {strides = array<i32>} : memref<8x16x128xbf16, #tpu.memory_space<vmem>>, vector<1x16x128xbf16>,
      %132 = arith.truncf %126 : vector<16x128xf32> to vector<16x128xbf16>
      %133 = arith.index_cast %60 : i32 to index
      %c0_70 = arith.constant 0 : index
      %c0_71 = arith.constant 0 : index
      %134 = vector.load %arg16[%133, %c0_70, %c0_71] : memref<8x16x128xbf16, #tpu.memory_space<vmem>>, vector<1x16x128xbf16>
      %135 = vector.shape_cast %134 : vector<1x16x128xbf16> to vector<16x128xbf16>
      %136 = vector.shape_cast %132 : vector<16x128xbf16> to vector<1x16x128xbf16>
      tpu.vector_store %arg16[%133, %c0_70, %c0_71], %136 {strides = array<i32>} : memref<8x16x128xbf16, #tpu.memory_space<vmem>>, vector<1x16x128xbf16>,
      scf.yield %96, %94, %126, %124 : vector<16x128xf32>, vector<16x128xf32>, vector<16x128xf32>, vector<16x128xf32>
    }
    %c8_i32_14 = arith.constant 8 : i32
    %c0_15 = arith.constant 0 : index
    %c0_16 = arith.constant 0 : index
    %c0_17 = arith.constant 0 : index
    %15 = vector.load %arg15[%c0_15, %c0_16, %c0_17] : memref<8x16x128xbf16, #tpu.memory_space<vmem>>, vector<8x16x128xbf16>
    %16 = vector.shape_cast %15 : vector<8x16x128xbf16> to vector<128x128xbf16>
    %c0_18 = arith.constant 0 : index
    %c0_19 = arith.constant 0 : index
    %c0_20 = arith.constant 0 : index
    %17 = vector.load %arg16[%c0_18, %c0_19, %c0_20] : memref<8x16x128xbf16, #tpu.memory_space<vmem>>, vector<8x16x128xbf16>
    %18 = vector.shape_cast %17 : vector<8x16x128xbf16> to vector<128x128xbf16>
    %c0_21 = arith.constant 0 : index
    %c0_22 = arith.constant 0 : index
    %19 = vector.load %arg7[%c0_21, %c0_22] : memref<128x128xbf16, #tpu.memory_space<vmem>>, vector<128x128xbf16>
    %cst_23 = arith.constant dense<0.000000e+00> : vector<128x128xf32>
    %20 = tpu.matmul %16, %19, %cst_23 {dimension_numbers = #tpu.dot_dimension_numbers<[1], [0], [0], [1], [0, 0, 1, 1], [], []>} : vector<128x128xbf16>, vector<128x128xbf16>, vector<128x128xf32> -> vector<128x128xf32>
    %c0_24 = arith.constant 0 : index
    %c0_25 = arith.constant 0 : index
    %21 = vector.load %arg8[%c0_24, %c0_25] : memref<128x128xbf16, #tpu.memory_space<vmem>>, vector<128x128xbf16>
    %cst_26 = arith.constant dense<0.000000e+00> : vector<128x128xf32>
    %22 = tpu.matmul %18, %21, %cst_26 {dimension_numbers = #tpu.dot_dimension_numbers<[1], [0], [0], [1], [0, 0, 1, 1], [], []>} : vector<128x128xbf16>, vector<128x128xbf16>, vector<128x128xf32> -> vector<128x128xf32>
    %23 = arith.addf %20, %22 : vector<128x128xf32>
    %c0_27 = arith.constant 0 : index
    %c0_28 = arith.constant 0 : index
    %24 = vector.load %arg9[%c0_27, %c0_28] : memref<1x128xf32, #tpu.memory_space<vmem>>, vector<1x128xf32>
    %25 = vector.broadcast %24 : vector<1x128xf32> to vector<128x128xf32>
    %26 = arith.addf %23, %25 : vector<128x128xf32>
    %27 = vector.shape_cast %26 : vector<128x128xf32> to vector<8x16x128xf32>
    %c0_29 = arith.constant 0 : index
    %c0_30 = arith.constant 0 : index
    %c0_31 = arith.constant 0 : index
    %28 = vector.load %arg17[%c0_29, %c0_30, %c0_31] : memref<8x16x128xf32, #tpu.memory_space<vmem>>, vector<8x16x128xf32>
    tpu.vector_store %arg17[%c0_29, %c0_30, %c0_31], %27 {strides = array<i32>} : memref<8x16x128xf32, #tpu.memory_space<vmem>>, vector<8x16x128xf32>,
    %c0_32 = arith.constant 0 : index
    %c0_33 = arith.constant 0 : index
    %29 = vector.load %arg10[%c0_32, %c0_33] : memref<8x8xf32, #tpu.memory_space<vmem>>, vector<8x8xf32>
    %c0_34 = arith.constant 0 : index
    %c0_35 = arith.constant 0 : index
    %30 = vector.load %arg11[%c0_34, %c0_35] : memref<1x8xf32, #tpu.memory_space<vmem>>, vector<1x8xf32>
    %c0_36 = arith.constant 0 : index
    %c0_37 = arith.constant 0 : index
    %c0_38 = arith.constant 0 : index
    %31 = vector.load %arg17[%c0_36, %c0_37, %c0_38] : memref<8x16x128xf32, #tpu.memory_space<vmem>>, vector<1x16x128xf32>
    %32 = vector.shape_cast %31 : vector<1x16x128xf32> to vector<16x128xf32>
    %33 = vector.extract_strided_slice %32 {offsets = [0, 0], sizes = [16, 8], strides = [1, 1]} : vector<16x128xf32> to vector<16x8xf32>
    %34 = vector.broadcast %30 : vector<1x8xf32> to vector<16x8xf32>
    %35 = arith.addf %34, %33 : vector<16x8xf32>
    %c1_i32_39 = arith.constant 1 : i32
    %c7_i32 = arith.constant 7 : i32
    %36 = arith.addi %c1_i32_39, %c7_i32 : i32
    %c1_i32_40 = arith.constant 1 : i32
    %37 = scf.for %arg19 = %c1_i32_39 to %36 step %c1_i32_40 iter_args(%arg20 = %35) -> (vector<16x8xf32>)  : i32 {
      %60 = vector.shape_cast %arg20 : vector<16x8xf32> to vector<16x1x8xf32>
      %61 = vector.shape_cast %29 : vector<8x8xf32> to vector<1x8x8xf32>
      %62 = vector.broadcast %60 : vector<16x1x8xf32> to vector<16x8x8xf32>
      %63 = vector.broadcast %61 : vector<1x8x8xf32> to vector<16x8x8xf32>
      %64 = arith.addf %62, %63 : vector<16x8x8xf32>
      %cst_55 = arith.constant dense<0xFF800000> : vector<16x8xf32>
      %65 = vector.multi_reduction <maximumf>, %64, %cst_55 [2] : vector<16x8x8xf32> to vector<16x8xf32>
      %66 = tpu.iota {dimensions = array<i32: 2>} : vector<16x8x8xi32>
      %67 = vector.shape_cast %65 : vector<16x8xf32> to vector<16x8x1xf32>
      %68 = vector.broadcast %67 : vector<16x8x1xf32> to vector<16x8x8xf32>
      %69 = arith.cmpf oeq, %64, %68 : vector<16x8x8xf32>
      %c8_i32_56 = arith.constant 8 : i32
      %70 = vector.broadcast %c8_i32_56 : i32 to vector<16x8x8xi32>
      %71 = arith.select %69, %66, %70 : vector<16x8x8xi1>, vector<16x8x8xi32>
      %cst_57 = arith.constant dense<2147483647> : vector<16x8xi32>
      %72 = vector.multi_reduction <minsi>, %71, %cst_57 [2] : vector<16x8x8xi32> to vector<16x8xi32>
      %73 = arith.index_cast %arg19 : i32 to index
      %c0_58 = arith.constant 0 : index
      %c0_59 = arith.constant 0 : index
      %74 = vector.load %arg18[%73, %c0_58, %c0_59] : memref<8x16x8xi32, #tpu.memory_space<vmem>>, vector<1x16x8xi32>
      %75 = vector.shape_cast %74 : vector<1x16x8xi32> to vector<16x8xi32>
      %76 = vector.shape_cast %72 : vector<16x8xi32> to vector<1x16x8xi32>
      tpu.vector_store %arg18[%73, %c0_58, %c0_59], %76 {strides = array<i32>} : memref<8x16x8xi32, #tpu.memory_space<vmem>>, vector<1x16x8xi32>,
      %77 = arith.index_cast %arg19 : i32 to index
      %c0_60 = arith.constant 0 : index
      %c0_61 = arith.constant 0 : index
      %78 = vector.load %arg17[%77, %c0_60, %c0_61] : memref<8x16x128xf32, #tpu.memory_space<vmem>>, vector<1x16x128xf32>
      %79 = vector.shape_cast %78 : vector<1x16x128xf32> to vector<16x128xf32>
      %80 = vector.extract_strided_slice %79 {offsets = [0, 0], sizes = [16, 8], strides = [1, 1]} : vector<16x128xf32> to vector<16x8xf32>
      %81 = arith.addf %65, %80 : vector<16x8xf32>
      %82 = arith.index_cast %arg19 : i32 to index
      %c0_62 = arith.constant 0 : index
      %c0_63 = arith.constant 0 : index
      %83 = vector.load %arg2[%82, %c0_62, %c0_63] : memref<8x16x1xf32, #tpu.memory_space<vmem>>, vector<1x16x1xf32>
      %84 = vector.shape_cast %83 : vector<1x16x1xf32> to vector<16x1xf32>
      %cst_64 = arith.constant 0.000000e+00 : f32
      %85 = vector.broadcast %cst_64 : f32 to vector<16x1xf32>
      %86 = arith.cmpf ogt, %84, %85 : vector<16x1xf32>
      %87 = vector.shape_cast %86 : vector<16x1xi1> to vector<16x1xi1>
      %88 = vector.broadcast %87 : vector<16x1xi1> to vector<16x8xi1>
      %89 = arith.select %88, %81, %arg20 : vector<16x8xi1>, vector<16x8xf32>
      scf.yield %89 : vector<16x8xf32>
    }
    %c7_i32_41 = arith.constant 7 : i32
    %c0_42 = arith.constant 0 : index
    %c0_43 = arith.constant 0 : index
    %38 = vector.load %arg12[%c0_42, %c0_43] : memref<1x8xf32, #tpu.memory_space<vmem>>, vector<1x8xf32>
    %39 = vector.broadcast %38 : vector<1x8xf32> to vector<16x8xf32>
    %40 = arith.addf %37, %39 : vector<16x8xf32>
    %41 = tpu.iota {dimensions = array<i32: 1>} : vector<16x8xi32>
    %42 = tpu.iota {dimensions = array<i32: 1>} : vector<16x128xi32>
    %cst_44 = arith.constant dense<0xFF800000> : vector<16xf32>
    %43 = vector.multi_reduction <maximumf>, %40, %cst_44 [1] : vector<16x8xf32> to vector<16xf32>
    %44 = vector.shape_cast %43 : vector<16xf32> to vector<16x1xf32>
    %45 = vector.broadcast %44 : vector<16x1xf32> to vector<16x8xf32>
    %46 = arith.cmpf oeq, %40, %45 : vector<16x8xf32>
    %c8_i32_45 = arith.constant 8 : i32
    %47 = vector.broadcast %c8_i32_45 : i32 to vector<16x8xi32>
    %48 = arith.select %46, %41, %47 : vector<16x8xi1>, vector<16x8xi32>
    %cst_46 = arith.constant dense<2147483647> : vector<16xi32>
    %49 = vector.multi_reduction <minsi>, %48, %cst_46 [1] : vector<16x8xi32> to vector<16xi32>
    %50 = vector.shape_cast %49 : vector<16xi32> to vector<16x1xi32>
    %c7_i32_47 = arith.constant 7 : i32
    %51 = vector.broadcast %c7_i32_47 : i32 to vector<16x128xi32>
    %52 = arith.cmpi eq, %42, %51 : vector<16x128xi32>
    %c0_i32_48 = arith.constant 0 : i32
    %53 = vector.shape_cast %50 : vector<16x1xi32> to vector<16x1xi32>
    %54 = vector.broadcast %53 : vector<16x1xi32> to vector<16x128xi32>
    %55 = vector.broadcast %c0_i32_48 : i32 to vector<16x128xi32>
    %56 = arith.select %52, %54, %55 : vector<16x128xi1>, vector<16x128xi32>
    %c0_i32_49 = arith.constant 0 : i32
    %c7_i32_50 = arith.constant 7 : i32
    %57 = arith.addi %c0_i32_49, %c7_i32_50 : i32
    %c1_i32_51 = arith.constant 1 : i32
    %58:2 = scf.for %arg19 = %c0_i32_49 to %57 step %c1_i32_51 iter_args(%arg20 = %50, %arg21 = %56) -> (vector<16x1xi32>, vector<16x128xi32>)  : i32 {
      %c7_i32_55 = arith.constant 7 : i32
      %60 = arith.subi %c7_i32_55, %arg19 : i32
      %61 = arith.index_cast %60 : i32 to index
      %c0_56 = arith.constant 0 : index
      %c0_57 = arith.constant 0 : index
      %62 = vector.load %arg18[%61, %c0_56, %c0_57] : memref<8x16x8xi32, #tpu.memory_space<vmem>>, vector<1x16x8xi32>
      %63 = vector.shape_cast %62 : vector<1x16x8xi32> to vector<16x8xi32>
      %64 = vector.broadcast %arg20 : vector<16x1xi32> to vector<16x8xi32>
      %65 = arith.cmpi eq, %41, %64 : vector<16x8xi32>
      %c0_i32_58 = arith.constant 0 : i32
      %66 = vector.broadcast %c0_i32_58 : i32 to vector<16x8xi32>
      %67 = arith.select %65, %63, %66 : vector<16x8xi1>, vector<16x8xi32>
      %cst_59 = arith.constant dense<0> : vector<16xi32>
      %68 = vector.multi_reduction <add>, %67, %cst_59 [1] : vector<16x8xi32> to vector<16xi32>
      %69 = vector.shape_cast %68 : vector<16xi32> to vector<16x1xi32>
      %70 = arith.index_cast %60 : i32 to index
      %c0_60 = arith.constant 0 : index
      %c0_61 = arith.constant 0 : index
      %71 = vector.load %arg2[%70, %c0_60, %c0_61] : memref<8x16x1xf32, #tpu.memory_space<vmem>>, vector<1x16x1xf32>
      %72 = vector.shape_cast %71 : vector<1x16x1xf32> to vector<16x1xf32>
      %cst_62 = arith.constant 0.000000e+00 : f32
      %73 = vector.broadcast %cst_62 : f32 to vector<16x1xf32>
      %74 = arith.cmpf ogt, %72, %73 : vector<16x1xf32>
      %75 = arith.select %74, %69, %arg20 : vector<16x1xi1>, vector<16x1xi32>
      %c1_i32_63 = arith.constant 1 : i32
      %76 = arith.subi %60, %c1_i32_63 : i32
      %77 = vector.broadcast %76 : i32 to vector<16x128xi32>
      %78 = arith.cmpi eq, %42, %77 : vector<16x128xi32>
      %79 = vector.shape_cast %75 : vector<16x1xi32> to vector<16x1xi32>
      %80 = vector.broadcast %79 : vector<16x1xi32> to vector<16x128xi32>
      %81 = arith.select %78, %80, %arg21 : vector<16x128xi1>, vector<16x128xi32>
      scf.yield %75, %81 : vector<16x1xi32>, vector<16x128xi32>
    }
    %c7_i32_52 = arith.constant 7 : i32
    %c0_53 = arith.constant 0 : index
    %c0_54 = arith.constant 0 : index
    %59 = vector.load %arg13[%c0_53, %c0_54] : memref<16x128xi32, #tpu.memory_space<vmem>>, vector<16x128xi32>
    tpu.vector_store %arg13[%c0_53, %c0_54], %58#1 {strides = array<i32>} : memref<16x128xi32, #tpu.memory_space<vmem>>, vector<16x128xi32>,
    return
  }
  func.func @transform_0(%arg0: i32) -> (i32, i32, i32) {
    %c0_i32 = arith.constant 0 : i32
    %c0_i32_0 = arith.constant 0 : i32
    %c0_i32_1 = arith.constant 0 : i32
    return %c0_i32, %arg0, %c0_i32_0 : i32, i32, i32
  }
  func.func @transform_1(%arg0: i32) -> (i32, i32, i32) {
    %c0_i32 = arith.constant 0 : i32
    %c0_i32_0 = arith.constant 0 : i32
    %c0_i32_1 = arith.constant 0 : i32
    return %c0_i32, %arg0, %c0_i32_0 : i32, i32, i32
  }
  func.func @transform_2(%arg0: i32) -> (i32, i32) {
    %c0_i32 = arith.constant 0 : i32
    %c0_i32_0 = arith.constant 0 : i32
    %c0_i32_1 = arith.constant 0 : i32
    return %c0_i32, %c0_i32_0 : i32, i32
  }
  func.func @transform_3(%arg0: i32) -> (i32, i32) {
    %c0_i32 = arith.constant 0 : i32
    %c0_i32_0 = arith.constant 0 : i32
    %c0_i32_1 = arith.constant 0 : i32
    return %c0_i32, %c0_i32_0 : i32, i32
  }
  func.func @transform_4(%arg0: i32) -> (i32, i32) {
    %c0_i32 = arith.constant 0 : i32
    %c0_i32_0 = arith.constant 0 : i32
    %c0_i32_1 = arith.constant 0 : i32
    return %c0_i32, %c0_i32_0 : i32, i32
  }
  func.func @transform_5(%arg0: i32) -> (i32, i32) {
    %c0_i32 = arith.constant 0 : i32
    %c0_i32_0 = arith.constant 0 : i32
    %c0_i32_1 = arith.constant 0 : i32
    return %c0_i32, %c0_i32_0 : i32, i32
  }
  func.func @transform_6(%arg0: i32) -> (i32, i32) {
    %c0_i32 = arith.constant 0 : i32
    %c0_i32_0 = arith.constant 0 : i32
    %c0_i32_1 = arith.constant 0 : i32
    return %c0_i32, %c0_i32_0 : i32, i32
  }
  func.func @transform_7(%arg0: i32) -> (i32, i32) {
    %c0_i32 = arith.constant 0 : i32
    %c0_i32_0 = arith.constant 0 : i32
    %c0_i32_1 = arith.constant 0 : i32
    return %c0_i32, %c0_i32_0 : i32, i32
  }
  func.func @transform_8(%arg0: i32) -> (i32, i32) {
    %c0_i32 = arith.constant 0 : i32
    %c0_i32_0 = arith.constant 0 : i32
    %c0_i32_1 = arith.constant 0 : i32
    return %c0_i32, %c0_i32_0 : i32, i32
  }
  func.func @transform_9(%arg0: i32) -> (i32, i32) {
    %c0_i32 = arith.constant 0 : i32
    %c0_i32_0 = arith.constant 0 : i32
    %c0_i32_1 = arith.constant 0 : i32
    return %c0_i32, %c0_i32_0 : i32, i32
  }
  func.func @transform_10(%arg0: i32) -> (i32, i32) {
    %c0_i32 = arith.constant 0 : i32
    %c0_i32_0 = arith.constant 0 : i32
    %c0_i32_1 = arith.constant 0 : i32
    return %c0_i32, %c0_i32_0 : i32, i32
  }
  func.func @transform_11(%arg0: i32) -> (i32, i32) {
    %c0_i32 = arith.constant 0 : i32
    %c0_i32_0 = arith.constant 0 : i32
    %c0_i32_1 = arith.constant 0 : i32
    return %c0_i32, %c0_i32_0 : i32, i32
  }
  func.func @transform_12(%arg0: i32) -> (i32, i32) {
    %c0_i32 = arith.constant 0 : i32
    %c0_i32_0 = arith.constant 0 : i32
    return %arg0, %c0_i32 : i32, i32
  }
}

</mosaic_0001>

<llo_original>
// kernel: tpu_custom_call.1
$region0: #{tpu_custom_call.1}
  #allocation0 [shape = 'u32[]', space=smem, size = 0x4, offset = 0x4, fixed_abs, tag = 'smem constant byte address 0x4 - core index']
  #allocation1 [shape = 'u32[144,128]{1,0:T(1,128)}', space=vmem, size = 0x12000, scoped, tag = 'internal scratch']
  #allocation2 [shape = 'bf16[8,16,1024]{2,1,0:T(16,128)(2,1)}', space=vmem, size = 0x40000, scoped, tag = 'scratch operand']
  #allocation3 [shape = 'bf16[8,16,128]{2,1,0:T(16,128)(2,1)}', space=vmem, size = 0x8000, scoped, tag = 'scratch operand']
  #allocation4 [shape = 'bf16[8,16,128]{2,1,0:T(16,128)(2,1)}', space=vmem, size = 0x8000, scoped, tag = 'scratch operand']
  #allocation5 [shape = 'f32[8,16,128]{2,1,0:T(8,128)}', space=vmem, size = 0x10000, scoped, tag = 'scratch operand']
  #allocation6 [shape = 's32[8,16,8]{2,1,0:T(8,128)}', space=vmem, size = 0x10000, scoped, tag = 'scratch operand']
  %s0 = inlined_call_operand.vmem [shape: bf16[8,16,128], index: 0, kind: input, shape index: {}]
  %s1 = inlined_call_operand.vmem [shape: f32[8,16,1], index: 1, kind: input, shape index: {}]
  %s2 = inlined_call_operand.hbm [shape: bf16[128,1024], index: 2, kind: input, shape index: {}]
  %s3 = inlined_call_operand.vmem [shape: f32[1,1024], index: 3, kind: input, shape index: {}]
  %s4 = inlined_call_operand.hbm [shape: bf16[128,512], index: 4, kind: input, shape index: {}]
  %s5 = inlined_call_operand.hbm [shape: bf16[128,512], index: 5, kind: input, shape index: {}]
  %s6 = inlined_call_operand.vmem [shape: bf16[128,128], index: 6, kind: input, shape index: {}]
  %s7 = inlined_call_operand.hbm [shape: bf16[128,128], index: 7, kind: input, shape index: {}]
  %s8 = inlined_call_operand.vmem [shape: f32[1,128], index: 8, kind: input, shape index: {}]
  %s9 = inlined_call_operand.vmem [shape: f32[8,8], index: 9, kind: input, shape index: {}]
  %s10 = inlined_call_operand.vmem [shape: f32[1,8], index: 10, kind: input, shape index: {}]
  %s11 = inlined_call_operand.vmem [shape: f32[1,8], index: 11, kind: input, shape index: {}]
  %s12 = inlined_call_operand.hbm [shape: s32[16,128], index: 12, kind: output, shape index: {}]
  %s13 = sld [smem:[#allocation0]]
  $region95: #{tpu_custom_call.1} parent=0
    _
  %s15 = ssub.s32 1, %s13
  %s16 = scalar_select 0, %s15, %s13
  $region1: #{tpu_custom_call.1} parent=0
    #allocation7 [shape = 'u8[262144]{0}', space=vmem, size = 0x40000, scoped, tag = 'input window, operand 2, single buffered']
    #allocation8 [shape = 's32[1]{0}', space=sflag, size = 0x4, scoped, tag = 'scoped memory for tpu_custom_call.1']
    #allocation9 [shape = 's32[1]{0}', space=sflag, size = 0x4, scoped, tag = 'scoped memory for tpu_custom_call.1']
    #allocation10 [shape = 'u8[131072]{0}', space=vmem, size = 0x20000, scoped, tag = 'input window, operand 4, single buffered']
    #allocation11 [shape = 's32[1]{0}', space=sflag, size = 0x4, scoped, tag = 'scoped memory for tpu_custom_call.1']
    #allocation12 [shape = 'u8[131072]{0}', space=vmem, size = 0x20000, scoped, tag = 'input window, operand 5, single buffered']
    #allocation13 [shape = 'u8[32768]{0}', space=vmem, size = 0x8000, scoped, tag = 'input window, operand 7, single buffered']
    #allocation14 [shape = 's32[1]{0}', space=sflag, size = 0x4, scoped, tag = 'scoped memory for tpu_custom_call.1']
    #allocation15 [shape = 'u8[8192]{0}', space=vmem, size = 0x2000, scoped, tag = 'output window, operand 0, single buffered']
    %17 = vsyncpa [#allocation8], 0
    %18 = vsyncpa [#allocation11], 0
    %19 = vsyncpa [#allocation14], 0
    %20 = vsyncpa [#allocation9], 0
    // Predicated region
    $region2: #{tpu_custom_call.1} parent=1 // pred_check
      _
    $region3: #{tpu_custom_call.1} parent=1 // pred_check_branch
      %22 = sbr.rel (0) target = $region5
    $region4: #{tpu_custom_call.1} parent=1 // pred_region
      _
    $region5: #{tpu_custom_call.1} parent=1 // pred_fallthru
      _
    // Predicated region
    $region6: #{tpu_custom_call.1} parent=1 // pred_check
      _
    $region7: #{tpu_custom_call.1} parent=1 // pred_check_branch
      %24 = sbr.rel (0) target = $region9
    $region8: #{tpu_custom_call.1} parent=1 // pred_region
      _
    $region9: #{tpu_custom_call.1} parent=1 // pred_fallthru
      _
    // Predicated region
    $region10: #{tpu_custom_call.1} parent=1 // pred_check
      _
    $region11: #{tpu_custom_call.1} parent=1 // pred_check_branch
      %26 = sbr.rel (0) target = $region13
    $region12: #{tpu_custom_call.1} parent=1 // pred_region
      %s28 = ssub.s32 8192, 8192
      %29 = vsyncadd [#allocation8], %s28
      %s30 = sshll.u32 [#allocation7], 4
      %s31 = int_to_ptr.vmem [resolvable:$true] %s30
      %36 = dma.hbm_to_vmem [thread:$0]  %s2, 8192, %s31, [#allocation8], 512, 512, 32
    $region13: #{tpu_custom_call.1} parent=1 // pred_fallthru
      _
    // Predicated region
    $region14: #{tpu_custom_call.1} parent=1 // pred_check
      _
    $region15: #{tpu_custom_call.1} parent=1 // pred_check_branch
      %38 = sbr.rel (0) target = $region17
    $region16: #{tpu_custom_call.1} parent=1 // pred_region
      _
    $region17: #{tpu_custom_call.1} parent=1 // pred_fallthru
      _
    // Predicated region
    $region18: #{tpu_custom_call.1} parent=1 // pred_check
      _
    $region19: #{tpu_custom_call.1} parent=1 // pred_check_branch
      %40 = sbr.rel (0) target = $region21
    $region20: #{tpu_custom_call.1} parent=1 // pred_region
      %s42 = ssub.s32 4096, 4096
      %43 = vsyncadd [#allocation11], %s42
      %s44 = sshll.u32 [#allocation10], 4
      %s45 = int_to_ptr.vmem [resolvable:$true] %s44
      %50 = dma.hbm_to_vmem [thread:$0]  %s4, 4096, %s45, [#allocation11], 256, 256, 16
    $region21: #{tpu_custom_call.1} parent=1 // pred_fallthru
      _
    // Predicated region
    $region22: #{tpu_custom_call.1} parent=1 // pred_check
      _
    $region23: #{tpu_custom_call.1} parent=1 // pred_check_branch
      %52 = sbr.rel (0) target = $region25
    $region24: #{tpu_custom_call.1} parent=1 // pred_region
      %s54 = ssub.s32 4096, 4096
      %55 = vsyncadd [#allocation11], %s54
      %s56 = sshll.u32 [#allocation12], 4
      %s57 = int_to_ptr.vmem [resolvable:$true] %s56
      %62 = dma.hbm_to_vmem [thread:$0]  %s5, 4096, %s57, [#allocation11], 256, 256, 16
    $region25: #{tpu_custom_call.1} parent=1 // pred_fallthru
      _
    // Predicated region
    $region26: #{tpu_custom_call.1} parent=1 // pred_check
      _
    $region27: #{tpu_custom_call.1} parent=1 // pred_check_branch
      %64 = sbr.rel (0) target = $region29
    $region28: #{tpu_custom_call.1} parent=1 // pred_region
      _
    $region29: #{tpu_custom_call.1} parent=1 // pred_fallthru
      _
    // Predicated region
    $region30: #{tpu_custom_call.1} parent=1 // pred_check
      _
    $region31: #{tpu_custom_call.1} parent=1 // pred_check_branch
      %66 = sbr.rel (0) target = $region33
    $region32: #{tpu_custom_call.1} parent=1 // pred_region
      %s68 = ssub.s32 1024, 1024
      %69 = vsyncadd [#allocation14], %s68
      %s70 = sshll.u32 [#allocation13], 4
      %s71 = int_to_ptr.vmem [resolvable:$true] %s70
      %76 = dma.hbm_to_vmem [thread:$0]  %s7, 1024, %s71, [#allocation14], 64, 64, 4
    $region33: #{tpu_custom_call.1} parent=1 // pred_fallthru
      _
    // Predicated region
    $region34: #{tpu_custom_call.1} parent=1 // pred_check
      _
    $region35: #{tpu_custom_call.1} parent=1 // pred_check_branch
      %78 = sbr.rel (0) target = $region37
    $region36: #{tpu_custom_call.1} parent=1 // pred_region
      _
    $region37: #{tpu_custom_call.1} parent=1 // pred_fallthru
      _
    // Predicated region
    $region38: #{tpu_custom_call.1} parent=1 // pred_check
      _
    $region39: #{tpu_custom_call.1} parent=1 // pred_check_branch
      %80 = sbr.rel (0) target = $region41
    $region40: #{tpu_custom_call.1} parent=1 // pred_region
      _
    $region41: #{tpu_custom_call.1} parent=1 // pred_fallthru
      _
    // Predicated region
    $region42: #{tpu_custom_call.1} parent=1 // pred_check
      _
    $region43: #{tpu_custom_call.1} parent=1 // pred_check_branch
      %82 = sbr.rel (0) target = $region45
    $region44: #{tpu_custom_call.1} parent=1 // pred_region
      _
    $region45: #{tpu_custom_call.1} parent=1 // pred_fallthru
      _
    // Predicated region
    $region46: #{tpu_custom_call.1} parent=1 // pred_check
      _
    $region47: #{tpu_custom_call.1} parent=1 // pred_check_branch
      %84 = sbr.rel (0) target = $region49
    $region48: #{tpu_custom_call.1} parent=1 // pred_region
      _
    $region49: #{tpu_custom_call.1} parent=1 // pred_fallthru
      _
    // Predicated region
    $region50: #{tpu_custom_call.1} parent=1 // pred_check
      _
    $region51: #{tpu_custom_call.1} parent=1 // pred_check_branch
      %86 = sbr.rel (0) target = $region53
    $region52: #{tpu_custom_call.1} parent=1 // pred_region
      %87 = dma.done [#allocation8], 8192
    $region53: #{tpu_custom_call.1} parent=1 // pred_fallthru
      _
    // Predicated region
    $region54: #{tpu_custom_call.1} parent=1 // pred_check
      _
    $region55: #{tpu_custom_call.1} parent=1 // pred_check_branch
      %89 = sbr.rel (0) target = $region57
    $region56: #{tpu_custom_call.1} parent=1 // pred_region
      %90 = dma.done [#allocation11], 4096
    $region57: #{tpu_custom_call.1} parent=1 // pred_fallthru
      _
    // Predicated region
    $region58: #{tpu_custom_call.1} parent=1 // pred_check
      _
    $region59: #{tpu_custom_call.1} parent=1 // pred_check_branch
      %92 = sbr.rel (0) target = $region61
    $region60: #{tpu_custom_call.1} parent=1 // pred_region
      %93 = dma.done [#allocation11], 4096
    $region61: #{tpu_custom_call.1} parent=1 // pred_fallthru
      _
    // Predicated region
    $region62: #{tpu_custom_call.1} parent=1 // pred_check
      _
    $region63: #{tpu_custom_call.1} parent=1 // pred_check_branch
      %95 = sbr.rel (0) target = $region65
    $region64: #{tpu_custom_call.1} parent=1 // pred_region
      %96 = dma.done [#allocation14], 1024
    $region65: #{tpu_custom_call.1} parent=1 // pred_fallthru
      _
    %v98 = vld [vmem:[%s0] sm:$0xf]
    %v99 = vld [vmem:[%s0 + $0x4] sm:$0xf]
    %v100 = vld [vmem:[%s0 + $0x8] sm:$0xf]
    %v101 = vld [vmem:[%s0 + $0xc] sm:$0xf]
    %v102 = vld [vmem:[%s0 + $0x10] sm:$0xf]
    %v103 = vld [vmem:[%s0 + $0x14] sm:$0xf]
    %v104 = vld [vmem:[%s0 + $0x18] sm:$0xf]
    %v105 = vld [vmem:[%s0 + $0x1c] sm:$0xf]
    %v106 = vld [vmem:[%s0 + $0x20] sm:$0xf]
    %v107 = vld [vmem:[%s0 + $0x24] sm:$0xf]
    %v108 = vld [vmem:[%s0 + $0x28] sm:$0xf]
    %v109 = vld [vmem:[%s0 + $0x2c] sm:$0xf]
    %v110 = vld [vmem:[%s0 + $0x30] sm:$0xf]
    %v111 = vld [vmem:[%s0 + $0x34] sm:$0xf]
    %v112 = vld [vmem:[%s0 + $0x38] sm:$0xf]
    %v113 = vld [vmem:[%s0 + $0x3c] sm:$0xf]
    %v114 = vld [vmem:[#allocation7] sm:$0xff]
    %v115 = vld [vmem:[#allocation7 + $0x8] sm:$0xff]
    %v116 = vld [vmem:[#allocation7 + $0x10] sm:$0xff]
    %v117 = vld [vmem:[#allocation7 + $0x18] sm:$0xff]
    %v118 = vld [vmem:[#allocation7 + $0x20] sm:$0xff]
    %v119 = vld [vmem:[#allocation7 + $0x28] sm:$0xff]
    %v120 = vld [vmem:[#allocation7 + $0x30] sm:$0xff]
    %v121 = vld [vmem:[#allocation7 + $0x38] sm:$0xff]
    %v122 = vld [vmem:[#allocation7 + $0x40] sm:$0xff]
    %v123 = vld [vmem:[#allocation7 + $0x48] sm:$0xff]
    %v124 = vld [vmem:[#allocation7 + $0x50] sm:$0xff]
    %v125 = vld [vmem:[#allocation7 + $0x58] sm:$0xff]
    %v126 = vld [vmem:[#allocation7 + $0x60] sm:$0xff]
    %v127 = vld [vmem:[#allocation7 + $0x68] sm:$0xff]
    %v128 = vld [vmem:[#allocation7 + $0x70] sm:$0xff]
    %v129 = vld [vmem:[#allocation7 + $0x78] sm:$0xff]
    %v130 = vld [vmem:[#allocation7 + $0x80] sm:$0xff]
    %v131 = vld [vmem:[#allocation7 + $0x88] sm:$0xff]
    %v132 = vld [vmem:[#allocation7 + $0x90] sm:$0xff]
    %v133 = vld [vmem:[#allocation7 + $0x98] sm:$0xff]
    %v134 = vld [vmem:[#allocation7 + $0xa0] sm:$0xff]
    %v135 = vld [vmem:[#allocation7 + $0xa8] sm:$0xff]
    %v136 = vld [vmem:[#allocation7 + $0xb0] sm:$0xff]
    %v137 = vld [vmem:[#allocation7 + $0xb8] sm:$0xff]
    %v138 = vld [vmem:[#allocation7 + $0xc0] sm:$0xff]
    %v139 = vld [vmem:[#allocation7 + $0xc8] sm:$0xff]
    %v140 = vld [vmem:[#allocation7 + $0xd0] sm:$0xff]
    %v141 = vld [vmem:[#allocation7 + $0xd8] sm:$0xff]
    %v142 = vld [vmem:[#allocation7 + $0xe0] sm:$0xff]
    %v143 = vld [vmem:[#allocation7 + $0xe8] sm:$0xff]
    %v144 = vld [vmem:[#allocation7 + $0xf0] sm:$0xff]
    %v145 = vld [vmem:[#allocation7 + $0xf8] sm:$0xff]
    %v146 = vld [vmem:[#allocation7 + $0x100] sm:$0xff]
    %v147 = vld [vmem:[#allocation7 + $0x108] sm:$0xff]
    %v148 = vld [vmem:[#allocation7 + $0x110] sm:$0xff]
    %v149 = vld [vmem:[#allocation7 + $0x118] sm:$0xff]
    %v150 = vld [vmem:[#allocation7 + $0x120] sm:$0xff]
    %v151 = vld [vmem:[#allocation7 + $0x128] sm:$0xff]
    %v152 = vld [vmem:[#allocation7 + $0x130] sm:$0xff]
    %v153 = vld [vmem:[#allocation7 + $0x138] sm:$0xff]
    %v154 = vld [vmem:[#allocation7 + $0x140] sm:$0xff]
    %v155 = vld [vmem:[#allocation7 + $0x148] sm:$0xff]
    %v156 = vld [vmem:[#allocation7 + $0x150] sm:$0xff]
    %v157 = vld [vmem:[#allocation7 + $0x158] sm:$0xff]
    %v158 = vld [vmem:[#allocation7 + $0x160] sm:$0xff]
    %v159 = vld [vmem:[#allocation7 + $0x168] sm:$0xff]
    %v160 = vld [vmem:[#allocation7 + $0x170] sm:$0xff]
    %v161 = vld [vmem:[#allocation7 + $0x178] sm:$0xff]
    %v162 = vld [vmem:[#allocation7 + $0x180] sm:$0xff]
    %v163 = vld [vmem:[#allocation7 + $0x188] sm:$0xff]
    %v164 = vld [vmem:[#allocation7 + $0x190] sm:$0xff]
    %v165 = vld [vmem:[#allocation7 + $0x198] sm:$0xff]
    %v166 = vld [vmem:[#allocation7 + $0x1a0] sm:$0xff]
    %v167 = vld [vmem:[#allocation7 + $0x1a8] sm:$0xff]
    %v168 = vld [vmem:[#allocation7 + $0x1b0] sm:$0xff]
    %v169 = vld [vmem:[#allocation7 + $0x1b8] sm:$0xff]
    %v170 = vld [vmem:[#allocation7 + $0x1c0] sm:$0xff]
    %v171 = vld [vmem:[#allocation7 + $0x1c8] sm:$0xff]
    %v172 = vld [vmem:[#allocation7 + $0x1d0] sm:$0xff]
    %v173 = vld [vmem:[#allocation7 + $0x1d8] sm:$0xff]
    %v174 = vld [vmem:[#allocation7 + $0x1e0] sm:$0xff]
    %v175 = vld [vmem:[#allocation7 + $0x1e8] sm:$0xff]
    %v176 = vld [vmem:[#allocation7 + $0x1f0] sm:$0xff]
    %v177 = vld [vmem:[#allocation7 + $0x1f8] sm:$0xff]
    %v178 = vld [vmem:[%s3] sm:$0xff]
    %v180 = vlaneseq
    %v181 = vshrl.u32 %v180, 7
    %v182 = vsub.s32 0, %v181
    %v183 = vrot.slane %v178, %v182
    %v184 = vlaneseq
    %v185 = vshrl.u32 %v184, 7
    %v186 = vsub.s32 1, %v185
    %v187 = vrot.slane %v178, %v186
    %v188 = vlaneseq
    %v189 = vshrl.u32 %v188, 7
    %v190 = vsub.s32 2, %v189
    %v191 = vrot.slane %v178, %v190
    %v192 = vlaneseq
    %v193 = vshrl.u32 %v192, 7
    %v194 = vsub.s32 3, %v193
    %v195 = vrot.slane %v178, %v194
    %v196 = vlaneseq
    %v197 = vshrl.u32 %v196, 7
    %v198 = vsub.s32 4, %v197
    %v199 = vrot.slane %v178, %v198
    %v200 = vlaneseq
    %v201 = vshrl.u32 %v200, 7
    %v202 = vsub.s32 5, %v201
    %v203 = vrot.slane %v178, %v202
    %v204 = vlaneseq
    %v205 = vshrl.u32 %v204, 7
    %v206 = vsub.s32 6, %v205
    %v207 = vrot.slane %v178, %v206
    %v208 = vlaneseq
    %v209 = vshrl.u32 %v208, 7
    %v210 = vsub.s32 7, %v209
    %v211 = vrot.slane %v178, %v210
    %v236 = vunpack.c.l.b16 %v98
    %v237 = vunpack.c.l.b16 %v99
    %v238 = vunpack.c.l.b16 %v100
    %v239 = vunpack.c.l.b16 %v101
    %v240 = vunpack.c.l.b16 %v102
    %v241 = vunpack.c.l.b16 %v103
    %v242 = vunpack.c.l.b16 %v104
    %v243 = vunpack.c.l.b16 %v105
    %v244 = vunpack.c.l.b16 %v106
    %v245 = vunpack.c.l.b16 %v107
    %v246 = vunpack.c.l.b16 %v108
    %v247 = vunpack.c.l.b16 %v109
    %v248 = vunpack.c.l.b16 %v110
    %v249 = vunpack.c.l.b16 %v111
    %v250 = vunpack.c.l.b16 %v112
    %v251 = vunpack.c.l.b16 %v113
    %v252 = vpack.c.b16 %v237, %v236
    %v253 = vpack.c.b16 %v239, %v238
    %v254 = vpack.c.b16 %v241, %v240
    %v255 = vpack.c.b16 %v243, %v242
    %v256 = vpack.c.b16 %v245, %v244
    %v257 = vpack.c.b16 %v247, %v246
    %v258 = vpack.c.b16 %v249, %v248
    %v259 = vpack.c.b16 %v251, %v250
    %v332 = vunpack.c.l.b16 %v114
    %v333 = vunpack.c.h.b16 %v114
    %v334 = vunpack.c.l.b16 %v115
    %v335 = vunpack.c.h.b16 %v115
    %v336 = vunpack.c.l.b16 %v116
    %v337 = vunpack.c.h.b16 %v116
    %v338 = vunpack.c.l.b16 %v117
    %v339 = vunpack.c.h.b16 %v117
    %v340 = vunpack.c.l.b16 %v118
    %v341 = vunpack.c.h.b16 %v118
    %v342 = vunpack.c.l.b16 %v119
    %v343 = vunpack.c.h.b16 %v119
    %v344 = vunpack.c.l.b16 %v120
    %v345 = vunpack.c.h.b16 %v120
    %v346 = vunpack.c.l.b16 %v121
    %v347 = vunpack.c.h.b16 %v121
    %v348 = vunpack.c.l.b16 %v122
    %v349 = vunpack.c.h.b16 %v122
    %v350 = vunpack.c.l.b16 %v123
    %v351 = vunpack.c.h.b16 %v123
    %v352 = vunpack.c.l.b16 %v124
    %v353 = vunpack.c.h.b16 %v124
    %v354 = vunpack.c.l.b16 %v125
    %v355 = vunpack.c.h.b16 %v125
    %v356 = vunpack.c.l.b16 %v126
    %v357 = vunpack.c.h.b16 %v126
    %v358 = vunpack.c.l.b16 %v127
    %v359 = vunpack.c.h.b16 %v127
    %v360 = vunpack.c.l.b16 %v128
    %v361 = vunpack.c.h.b16 %v128
    %v362 = vunpack.c.l.b16 %v129
    %v363 = vunpack.c.h.b16 %v129
    %v364 = vunpack.c.l.b16 %v130
    %v365 = vunpack.c.h.b16 %v130
    %v366 = vunpack.c.l.b16 %v131
    %v367 = vunpack.c.h.b16 %v131
    %v368 = vunpack.c.l.b16 %v132
    %v369 = vunpack.c.h.b16 %v132
    %v370 = vunpack.c.l.b16 %v133
    %v371 = vunpack.c.h.b16 %v133
    %v372 = vunpack.c.l.b16 %v134
    %v373 = vunpack.c.h.b16 %v134
    %v374 = vunpack.c.l.b16 %v135
    %v375 = vunpack.c.h.b16 %v135
    %v376 = vunpack.c.l.b16 %v136
    %v377 = vunpack.c.h.b16 %v136
    %v378 = vunpack.c.l.b16 %v137
    %v379 = vunpack.c.h.b16 %v137
    %v380 = vunpack.c.l.b16 %v138
    %v381 = vunpack.c.h.b16 %v138
    %v382 = vunpack.c.l.b16 %v139
    %v383 = vunpack.c.h.b16 %v139
    %v384 = vunpack.c.l.b16 %v140
    %v385 = vunpack.c.h.b16 %v140
    %v386 = vunpack.c.l.b16 %v141
    %v387 = vunpack.c.h.b16 %v141
    %v388 = vunpack.c.l.b16 %v142
    %v389 = vunpack.c.h.b16 %v142
    %v390 = vunpack.c.l.b16 %v143
    %v391 = vunpack.c.h.b16 %v143
    %v392 = vunpack.c.l.b16 %v144
    %v393 = vunpack.c.h.b16 %v144
    %v394 = vunpack.c.l.b16 %v145
    %v395 = vunpack.c.h.b16 %v145
    %v396 = vunpack.c.l.b16 %v146
    %v397 = vunpack.c.h.b16 %v146
    %v398 = vunpack.c.l.b16 %v147
    %v399 = vunpack.c.h.b16 %v147
    %v400 = vunpack.c.l.b16 %v148
    %v401 = vunpack.c.h.b16 %v148
    %v402 = vunpack.c.l.b16 %v149
    %v403 = vunpack.c.h.b16 %v149
    %v404 = vunpack.c.l.b16 %v150
    %v405 = vunpack.c.h.b16 %v150
    %v406 = vunpack.c.l.b16 %v151
    %v407 = vunpack.c.h.b16 %v151
    %v408 = vunpack.c.l.b16 %v152
    %v409 = vunpack.c.h.b16 %v152
    %v410 = vunpack.c.l.b16 %v153
    %v411 = vunpack.c.h.b16 %v153
    %v412 = vunpack.c.l.b16 %v154
    %v413 = vunpack.c.h.b16 %v154
    %v414 = vunpack.c.l.b16 %v155
    %v415 = vunpack.c.h.b16 %v155
    %v416 = vunpack.c.l.b16 %v156
    %v417 = vunpack.c.h.b16 %v156
    %v418 = vunpack.c.l.b16 %v157
    %v419 = vunpack.c.h.b16 %v157
    %v420 = vunpack.c.l.b16 %v158
    %v421 = vunpack.c.h.b16 %v158
    %v422 = vunpack.c.l.b16 %v159
    %v423 = vunpack.c.h.b16 %v159
    %v424 = vunpack.c.l.b16 %v160
    %v425 = vunpack.c.h.b16 %v160
    %v426 = vunpack.c.l.b16 %v161
    %v427 = vunpack.c.h.b16 %v161
    %v428 = vunpack.c.l.b16 %v162
    %v429 = vunpack.c.h.b16 %v162
    %v430 = vunpack.c.l.b16 %v163
    %v431 = vunpack.c.h.b16 %v163
    %v432 = vunpack.c.l.b16 %v164
    %v433 = vunpack.c.h.b16 %v164
    %v434 = vunpack.c.l.b16 %v165
    %v435 = vunpack.c.h.b16 %v165
    %v436 = vunpack.c.l.b16 %v166
    %v437 = vunpack.c.h.b16 %v166
    %v438 = vunpack.c.l.b16 %v167
    %v439 = vunpack.c.h.b16 %v167
    %v440 = vunpack.c.l.b16 %v168
    %v441 = vunpack.c.h.b16 %v168
    %v442 = vunpack.c.l.b16 %v169
    %v443 = vunpack.c.h.b16 %v169
    %v444 = vunpack.c.l.b16 %v170
    %v445 = vunpack.c.h.b16 %v170
    %v446 = vunpack.c.l.b16 %v171
    %v447 = vunpack.c.h.b16 %v171
    %v448 = vunpack.c.l.b16 %v172
    %v449 = vunpack.c.h.b16 %v172
    %v450 = vunpack.c.l.b16 %v173
    %v451 = vunpack.c.h.b16 %v173
    %v452 = vunpack.c.l.b16 %v174
    %v453 = vunpack.c.h.b16 %v174
    %v454 = vunpack.c.l.b16 %v175
    %v455 = vunpack.c.h.b16 %v175
    %v456 = vunpack.c.l.b16 %v176
    %v457 = vunpack.c.h.b16 %v176
    %v458 = vunpack.c.l.b16 %v177
    %v459 = vunpack.c.h.b16 %v177
    %v460 = vpack.c.b16 %v340, %v332
    %v461 = vpack.c.b16 %v341, %v333
    %v462 = vpack.c.b16 %v342, %v334
    %v463 = vpack.c.b16 %v343, %v335
    %v464 = vpack.c.b16 %v344, %v336
    %v465 = vpack.c.b16 %v345, %v337
    %v466 = vpack.c.b16 %v346, %v338
    %v467 = vpack.c.b16 %v347, %v339
    %v468 = vpack.c.b16 %v356, %v348
    %v469 = vpack.c.b16 %v357, %v349
    %v470 = vpack.c.b16 %v358, %v350
    %v471 = vpack.c.b16 %v359, %v351
    %v472 = vpack.c.b16 %v360, %v352
    %v473 = vpack.c.b16 %v361, %v353
    %v474 = vpack.c.b16 %v362, %v354
    %v475 = vpack.c.b16 %v363, %v355
    %v476 = vpack.c.b16 %v372, %v364
    %v477 = vpack.c.b16 %v373, %v365
    %v478 = vpack.c.b16 %v374, %v366
    %v479 = vpack.c.b16 %v375, %v367
    %v480 = vpack.c.b16 %v376, %v368
    %v481 = vpack.c.b16 %v377, %v369
    %v482 = vpack.c.b16 %v378, %v370
    %v483 = vpack.c.b16 %v379, %v371
    %v484 = vpack.c.b16 %v388, %v380
    %v485 = vpack.c.b16 %v389, %v381
    %v486 = vpack.c.b16 %v390, %v382
    %v487 = vpack.c.b16 %v391, %v383
    %v488 = vpack.c.b16 %v392, %v384
    %v489 = vpack.c.b16 %v393, %v385
    %v490 = vpack.c.b16 %v394, %v386
    %v491 = vpack.c.b16 %v395, %v387
    %v492 = vpack.c.b16 %v404, %v396
    %v493 = vpack.c.b16 %v405, %v397
    %v494 = vpack.c.b16 %v406, %v398
    %v495 = vpack.c.b16 %v407, %v399
    %v496 = vpack.c.b16 %v408, %v400
    %v497 = vpack.c.b16 %v409, %v401
    %v498 = vpack.c.b16 %v410, %v402
    %v499 = vpack.c.b16 %v411, %v403
    %v500 = vpack.c.b16 %v420, %v412
    %v501 = vpack.c.b16 %v421, %v413
    %v502 = vpack.c.b16 %v422, %v414
    %v503 = vpack.c.b16 %v423, %v415
    %v504 = vpack.c.b16 %v424, %v416
    %v505 = vpack.c.b16 %v425, %v417
    %v506 = vpack.c.b16 %v426, %v418
    %v507 = vpack.c.b16 %v427, %v419
    %v508 = vpack.c.b16 %v436, %v428
    %v509 = vpack.c.b16 %v437, %v429
    %v510 = vpack.c.b16 %v438, %v430
    %v511 = vpack.c.b16 %v439, %v431
    %v512 = vpack.c.b16 %v440, %v432
    %v513 = vpack.c.b16 %v441, %v433
    %v514 = vpack.c.b16 %v442, %v434
    %v515 = vpack.c.b16 %v443, %v435
    %v516 = vpack.c.b16 %v452, %v444
    %v517 = vpack.c.b16 %v453, %v445
    %v518 = vpack.c.b16 %v454, %v446
    %v519 = vpack.c.b16 %v455, %v447
    %v520 = vpack.c.b16 %v456, %v448
    %v521 = vpack.c.b16 %v457, %v449
    %v522 = vpack.c.b16 %v458, %v450
    %v523 = vpack.c.b16 %v459, %v451
    %588 = vmatprep.subr.bf16.mxu0 %v461
    %589 = vmatpush1.bf16.msra.mxu0 %v460
    %590 = vmatprep.subr.bf16.mxu0 %v469
    %591 = vmatpush1.bf16.msra.mxu0 %v468
    %592 = vmatprep.subr.bf16.mxu0 %v477
    %593 = vmatpush1.bf16.msra.mxu0 %v476
    %594 = vmatprep.subr.bf16.mxu0 %v485
    %595 = vmatpush1.bf16.msra.mxu0 %v484
    %596 = vmatprep.subr.bf16.mxu0 %v493
    %597 = vmatpush1.bf16.msra.mxu0 %v492
    %598 = vmatprep.subr.bf16.mxu0 %v501
    %599 = vmatpush1.bf16.msra.mxu0 %v500
    %600 = vmatprep.subr.bf16.mxu0 %v509
    %601 = vmatpush1.bf16.msra.mxu0 %v508
    %602 = vmatprep.subr.bf16.mxu0 %v517
    %603 = vmatpush1.bf16.msra.mxu0 %v516
    %604 = vmatprep.subr.bf16.mxu0 0
    %605 = vmatpush1.bf16.msra.mxu0 0
    %606 = vmatprep.subr.bf16.mxu0 0
    %607 = vmatpush1.bf16.msra.mxu0 0
    %608 = vmatprep.subr.bf16.mxu0 0
    %609 = vmatpush1.bf16.msra.mxu0 0
    %610 = vmatprep.subr.bf16.mxu0 0
    %611 = vmatpush1.bf16.msra.mxu0 0
    %612 = vmatprep.subr.bf16.mxu0 0
    %613 = vmatpush1.bf16.msra.mxu0 0
    %614 = vmatprep.subr.bf16.mxu0 0
    %615 = vmatpush1.bf16.msra.mxu0 0
    %616 = vmatprep.subr.bf16.mxu0 0
    %617 = vmatpush1.bf16.msra.mxu0 0
    %618 = vmatprep.subr.bf16.mxu0 0
    %619 = vmatpush1.bf16.msra.mxu0 0
    %620 = vmatprep.mubr.bf16.mxu0 0
    %621 = vmatmul.mubr.bf16.gmra.mrb[0].mxu0 %v252
    %v622 = vpop.f32.mrb[0].mxu0
    %v623 = vadd.f32 %v183, %v622
    %v624 = vpop.f32.mrb[0].mxu0
    %v625 = vadd.f32 %v187, %v624
    %v626 = vpop.f32.mrb[0].mxu0
    %v627 = vadd.f32 %v183, %v626
    %v628 = vpop.f32.mrb[0].mxu0
    %v629 = vadd.f32 %v187, %v628
    %630 = vmatprep.mubr.bf16.mxu0 0
    %631 = vmatmul.mubr.bf16.gmra.mrb[0].mxu0 %v253
    %v632 = vpop.f32.mrb[0].mxu0
    %v633 = vadd.f32 %v183, %v632
    %v634 = vpop.f32.mrb[0].mxu0
    %v635 = vadd.f32 %v187, %v634
    %v636 = vpop.f32.mrb[0].mxu0
    %v637 = vadd.f32 %v183, %v636
    %v638 = vpop.f32.mrb[0].mxu0
    %v639 = vadd.f32 %v187, %v638
    %640 = vmatprep.mubr.bf16.mxu0 0
    %641 = vmatmul.mubr.bf16.gmra.mrb[0].mxu0 %v254
    %v642 = vpop.f32.mrb[0].mxu0
    %v643 = vadd.f32 %v183, %v642
    %v644 = vpop.f32.mrb[0].mxu0
    %v645 = vadd.f32 %v187, %v644
    %v646 = vpop.f32.mrb[0].mxu0
    %v647 = vadd.f32 %v183, %v646
    %v648 = vpop.f32.mrb[0].mxu0
    %v649 = vadd.f32 %v187, %v648
    %650 = vmatprep.mubr.bf16.mxu0 0
    %651 = vmatmul.mubr.bf16.gmra.mrb[0].mxu0 %v255
    %v652 = vpop.f32.mrb[0].mxu0
    %v653 = vadd.f32 %v183, %v652
    %v654 = vpop.f32.mrb[0].mxu0
    %v655 = vadd.f32 %v187, %v654
    %v656 = vpop.f32.mrb[0].mxu0
    %v657 = vadd.f32 %v183, %v656
    %v658 = vpop.f32.mrb[0].mxu0
    %v659 = vadd.f32 %v187, %v658
    %660 = vmatprep.mubr.bf16.mxu0 0
    %661 = vmatmul.mubr.bf16.gmra.mrb[0].mxu0 %v256
    %v662 = vpop.f32.mrb[0].mxu0
    %v663 = vadd.f32 %v183, %v662
    %v664 = vpop.f32.mrb[0].mxu0
    %v665 = vadd.f32 %v187, %v664
    %v666 = vpop.f32.mrb[0].mxu0
    %v667 = vadd.f32 %v183, %v666
    %v668 = vpop.f32.mrb[0].mxu0
    %v669 = vadd.f32 %v187, %v668
    %670 = vmatprep.mubr.bf16.mxu0 0
    %671 = vmatmul.mubr.bf16.gmra.mrb[0].mxu0 %v257
    %v672 = vpop.f32.mrb[0].mxu0
    %v673 = vadd.f32 %v183, %v672
    %v674 = vpop.f32.mrb[0].mxu0
    %v675 = vadd.f32 %v187, %v674
    %v676 = vpop.f32.mrb[0].mxu0
    %v677 = vadd.f32 %v183, %v676
    %v678 = vpop.f32.mrb[0].mxu0
    %v679 = vadd.f32 %v187, %v678
    %680 = vmatprep.mubr.bf16.mxu0 0
    %681 = vmatmul.mubr.bf16.gmra.mrb[0].mxu0 %v258
    %v682 = vpop.f32.mrb[0].mxu0
    %v683 = vadd.f32 %v183, %v682
    %v684 = vpop.f32.mrb[0].mxu0
    %v685 = vadd.f32 %v187, %v684
    %v686 = vpop.f32.mrb[0].mxu0
    %v687 = vadd.f32 %v183, %v686
    %v688 = vpop.f32.mrb[0].mxu0
    %v689 = vadd.f32 %v187, %v688
    %690 = vmatprep.mubr.bf16.mxu0 0
    %691 = vmatmul.mubr.bf16.gmra.mrb[0].mxu0 %v259
    %v692 = vpop.f32.mrb[0].mxu0
    %v693 = vadd.f32 %v183, %v692
    %v694 = vpop.f32.mrb[0].mxu0
    %v695 = vadd.f32 %v187, %v694
    %v696 = vpop.f32.mrb[0].mxu0
    %v697 = vadd.f32 %v183, %v696
    %v698 = vpop.f32.mrb[0].mxu0
    %v699 = vadd.f32 %v187, %v698
    %700 = vdwg.mxu0
    %701 = vmatprep.subr.bf16.mxu0 %v463
    %702 = vmatpush1.bf16.msra.mxu0 %v462
    %703 = vmatprep.subr.bf16.mxu0 %v471
    %704 = vmatpush1.bf16.msra.mxu0 %v470
    %705 = vmatprep.subr.bf16.mxu0 %v479
    %706 = vmatpush1.bf16.msra.mxu0 %v478
    %707 = vmatprep.subr.bf16.mxu0 %v487
    %708 = vmatpush1.bf16.msra.mxu0 %v486
    %709 = vmatprep.subr.bf16.mxu0 %v495
    %710 = vmatpush1.bf16.msra.mxu0 %v494
    %711 = vmatprep.subr.bf16.mxu0 %v503
    %712 = vmatpush1.bf16.msra.mxu0 %v502
    %713 = vmatprep.subr.bf16.mxu0 %v511
    %714 = vmatpush1.bf16.msra.mxu0 %v510
    %715 = vmatprep.subr.bf16.mxu0 %v519
    %716 = vmatpush1.bf16.msra.mxu0 %v518
    %717 = vmatprep.subr.bf16.mxu0 0
    %718 = vmatpush1.bf16.msra.mxu0 0
    %719 = vmatprep.subr.bf16.mxu0 0
    %720 = vmatpush1.bf16.msra.mxu0 0
    %721 = vmatprep.subr.bf16.mxu0 0
    %722 = vmatpush1.bf16.msra.mxu0 0
    %723 = vmatprep.subr.bf16.mxu0 0
    %724 = vmatpush1.bf16.msra.mxu0 0
    %725 = vmatprep.subr.bf16.mxu0 0
    %726 = vmatpush1.bf16.msra.mxu0 0
    %727 = vmatprep.subr.bf16.mxu0 0
    %728 = vmatpush1.bf16.msra.mxu0 0
    %729 = vmatprep.subr.bf16.mxu0 0
    %730 = vmatpush1.bf16.msra.mxu0 0
    %731 = vmatprep.subr.bf16.mxu0 0
    %732 = vmatpush1.bf16.msra.mxu0 0
    %733 = vmatprep.mubr.bf16.mxu0 0
    %734 = vmatmul.mubr.bf16.gmra.mrb[0].mxu0 %v252
    %v735 = vpop.f32.mrb[0].mxu0
    %v736 = vadd.f32 %v191, %v735
    %v737 = vpop.f32.mrb[0].mxu0
    %v738 = vadd.f32 %v195, %v737
    %v739 = vpop.f32.mrb[0].mxu0
    %v740 = vadd.f32 %v191, %v739
    %v741 = vpop.f32.mrb[0].mxu0
    %v742 = vadd.f32 %v195, %v741
    %743 = vmatprep.mubr.bf16.mxu0 0
    %744 = vmatmul.mubr.bf16.gmra.mrb[0].mxu0 %v253
    %v745 = vpop.f32.mrb[0].mxu0
    %v746 = vadd.f32 %v191, %v745
    %v747 = vpop.f32.mrb[0].mxu0
    %v748 = vadd.f32 %v195, %v747
    %v749 = vpop.f32.mrb[0].mxu0
    %v750 = vadd.f32 %v191, %v749
    %v751 = vpop.f32.mrb[0].mxu0
    %v752 = vadd.f32 %v195, %v751
    %753 = vmatprep.mubr.bf16.mxu0 0
    %754 = vmatmul.mubr.bf16.gmra.mrb[0].mxu0 %v254
    %v755 = vpop.f32.mrb[0].mxu0
    %v756 = vadd.f32 %v191, %v755
    %v757 = vpop.f32.mrb[0].mxu0
    %v758 = vadd.f32 %v195, %v757
    %v759 = vpop.f32.mrb[0].mxu0
    %v760 = vadd.f32 %v191, %v759
    %v761 = vpop.f32.mrb[0].mxu0
    %v762 = vadd.f32 %v195, %v761
    %763 = vmatprep.mubr.bf16.mxu0 0
    %764 = vmatmul.mubr.bf16.gmra.mrb[0].mxu0 %v255
    %v765 = vpop.f32.mrb[0].mxu0
    %v766 = vadd.f32 %v191, %v765
    %v767 = vpop.f32.mrb[0].mxu0
    %v768 = vadd.f32 %v195, %v767
    %v769 = vpop.f32.mrb[0].mxu0
    %v770 = vadd.f32 %v191, %v769
    %v771 = vpop.f32.mrb[0].mxu0
    %v772 = vadd.f32 %v195, %v771
    %773 = vmatprep.mubr.bf16.mxu0 0
    %774 = vmatmul.mubr.bf16.gmra.mrb[0].mxu0 %v256
    %v775 = vpop.f32.mrb[0].mxu0
    %v776 = vadd.f32 %v191, %v775
    %v777 = vpop.f32.mrb[0].mxu0
    %v778 = vadd.f32 %v195, %v777
    %v779 = vpop.f32.mrb[0].mxu0
    %v780 = vadd.f32 %v191, %v779
    %v781 = vpop.f32.mrb[0].mxu0
    %v782 = vadd.f32 %v195, %v781
    %783 = vmatprep.mubr.bf16.mxu0 0
    %784 = vmatmul.mubr.bf16.gmra.mrb[0].mxu0 %v257
    %v785 = vpop.f32.mrb[0].mxu0
    %v786 = vadd.f32 %v191, %v785
    %v787 = vpop.f32.mrb[0].mxu0
    %v788 = vadd.f32 %v195, %v787
    %v789 = vpop.f32.mrb[0].mxu0
    %v790 = vadd.f32 %v191, %v789
    %v791 = vpop.f32.mrb[0].mxu0
    %v792 = vadd.f32 %v195, %v791
    %793 = vmatprep.mubr.bf16.mxu0 0
    %794 = vmatmul.mubr.bf16.gmra.mrb[0].mxu0 %v258
    %v795 = vpop.f32.mrb[0].mxu0
    %v796 = vadd.f32 %v191, %v795
    %v797 = vpop.f32.mrb[0].mxu0
    %v798 = vadd.f32 %v195, %v797
    %v799 = vpop.f32.mrb[0].mxu0
    %v800 = vadd.f32 %v191, %v799
    %v801 = vpop.f32.mrb[0].mxu0
    %v802 = vadd.f32 %v195, %v801
    %803 = vmatprep.mubr.bf16.mxu0 0
    %804 = vmatmul.mubr.bf16.gmra.mrb[0].mxu0 %v259
    %v805 = vpop.f32.mrb[0].mxu0
    %v806 = vadd.f32 %v191, %v805
    %v807 = vpop.f32.mrb[0].mxu0
    %v808 = vadd.f32 %v195, %v807
    %v809 = vpop.f32.mrb[0].mxu0
    %v810 = vadd.f32 %v191, %v809
    %v811 = vpop.f32.mrb[0].mxu0
    %v812 = vadd.f32 %v195, %v811
    %813 = vdwg.mxu0
    %814 = vmatprep.subr.bf16.mxu0 %v465
    %815 = vmatpush1.bf16.msra.mxu0 %v464
    %816 = vmatprep.subr.bf16.mxu0 %v473
    %817 = vmatpush1.bf16.msra.mxu0 %v472
    %818 = vmatprep.subr.bf16.mxu0 %v481
    %819 = vmatpush1.bf16.msra.mxu0 %v480
    %820 = vmatprep.subr.bf16.mxu0 %v489
    %821 = vmatpush1.bf16.msra.mxu0 %v488
    %822 = vmatprep.subr.bf16.mxu0 %v497
    %823 = vmatpush1.bf16.msra.mxu0 %v496
    %824 = vmatprep.subr.bf16.mxu0 %v505
    %825 = vmatpush1.bf16.msra.mxu0 %v504
    %826 = vmatprep.subr.bf16.mxu0 %v513
    %827 = vmatpush1.bf16.msra.mxu0 %v512
    %828 = vmatprep.subr.bf16.mxu0 %v521
    %829 = vmatpush1.bf16.msra.mxu0 %v520
    %830 = vmatprep.subr.bf16.mxu0 0
    %831 = vmatpush1.bf16.msra.mxu0 0
    %832 = vmatprep.subr.bf16.mxu0 0
    %833 = vmatpush1.bf16.msra.mxu0 0
    %834 = vmatprep.subr.bf16.mxu0 0
    %835 = vmatpush1.bf16.msra.mxu0 0
    %836 = vmatprep.subr.bf16.mxu0 0
    %837 = vmatpush1.bf16.msra.mxu0 0
    %838 = vmatprep.subr.bf16.mxu0 0
    %839 = vmatpush1.bf16.msra.mxu0 0
    %840 = vmatprep.subr.bf16.mxu0 0
    %841 = vmatpush1.bf16.msra.mxu0 0
    %842 = vmatprep.subr.bf16.mxu0 0
    %843 = vmatpush1.bf16.msra.mxu0 0
    %844 = vmatprep.subr.bf16.mxu0 0
    %845 = vmatpush1.bf16.msra.mxu0 0
    %846 = vmatprep.mubr.bf16.mxu0 0
    %847 = vmatmul.mubr.bf16.gmra.mrb[0].mxu0 %v252
    %v848 = vpop.f32.mrb[0].mxu0
    %v849 = vadd.f32 %v199, %v848
    %v850 = vpop.f32.mrb[0].mxu0
    %v851 = vadd.f32 %v203, %v850
    %v852 = vpop.f32.mrb[0].mxu0
    %v853 = vadd.f32 %v199, %v852
    %v854 = vpop.f32.mrb[0].mxu0
    %v855 = vadd.f32 %v203, %v854
    %856 = vmatprep.mubr.bf16.mxu0 0
    %857 = vmatmul.mubr.bf16.gmra.mrb[0].mxu0 %v253
    %v858 = vpop.f32.mrb[0].mxu0
    %v859 = vadd.f32 %v199, %v858
    %v860 = vpop.f32.mrb[0].mxu0
    %v861 = vadd.f32 %v203, %v860
    %v862 = vpop.f32.mrb[0].mxu0
    %v863 = vadd.f32 %v199, %v862
    %v864 = vpop.f32.mrb[0].mxu0
    %v865 = vadd.f32 %v203, %v864
    %866 = vmatprep.mubr.bf16.mxu0 0
    %867 = vmatmul.mubr.bf16.gmra.mrb[0].mxu0 %v254
    %v868 = vpop.f32.mrb[0].mxu0
    %v869 = vadd.f32 %v199, %v868
    %v870 = vpop.f32.mrb[0].mxu0
    %v871 = vadd.f32 %v203, %v870
    %v872 = vpop.f32.mrb[0].mxu0
    %v873 = vadd.f32 %v199, %v872
    %v874 = vpop.f32.mrb[0].mxu0
    %v875 = vadd.f32 %v203, %v874
    %876 = vmatprep.mubr.bf16.mxu0 0
    %877 = vmatmul.mubr.bf16.gmra.mrb[0].mxu0 %v255
    %v878 = vpop.f32.mrb[0].mxu0
    %v879 = vadd.f32 %v199, %v878
    %v880 = vpop.f32.mrb[0].mxu0
    %v881 = vadd.f32 %v203, %v880
    %v882 = vpop.f32.mrb[0].mxu0
    %v883 = vadd.f32 %v199, %v882
    %v884 = vpop.f32.mrb[0].mxu0
    %v885 = vadd.f32 %v203, %v884
    %886 = vmatprep.mubr.bf16.mxu0 0
    %887 = vmatmul.mubr.bf16.gmra.mrb[0].mxu0 %v256
    %v888 = vpop.f32.mrb[0].mxu0
    %v889 = vadd.f32 %v199, %v888
    %v890 = vpop.f32.mrb[0].mxu0
    %v891 = vadd.f32 %v203, %v890
    %v892 = vpop.f32.mrb[0].mxu0
    %v893 = vadd.f32 %v199, %v892
    %v894 = vpop.f32.mrb[0].mxu0
    %v895 = vadd.f32 %v203, %v894
    %896 = vmatprep.mubr.bf16.mxu0 0
    %897 = vmatmul.mubr.bf16.gmra.mrb[0].mxu0 %v257
    %v898 = vpop.f32.mrb[0].mxu0
    %v899 = vadd.f32 %v199, %v898
    %v900 = vpop.f32.mrb[0].mxu0
    %v901 = vadd.f32 %v203, %v900
    %v902 = vpop.f32.mrb[0].mxu0
    %v903 = vadd.f32 %v199, %v902
    %v904 = vpop.f32.mrb[0].mxu0
    %v905 = vadd.f32 %v203, %v904
    %906 = vmatprep.mubr.bf16.mxu0 0
    %907 = vmatmul.mubr.bf16.gmra.mrb[0].mxu0 %v258
    %v908 = vpop.f32.mrb[0].mxu0
    %v909 = vadd.f32 %v199, %v908
    %v910 = vpop.f32.mrb[0].mxu0
    %v911 = vadd.f32 %v203, %v910
    %v912 = vpop.f32.mrb[0].mxu0
    %v913 = vadd.f32 %v199, %v912
    %v914 = vpop.f32.mrb[0].mxu0
    %v915 = vadd.f32 %v203, %v914
    %916 = vmatprep.mubr.bf16.mxu0 0
    %917 = vmatmul.mubr.bf16.gmra.mrb[0].mxu0 %v259
    %v918 = vpop.f32.mrb[0].mxu0
    %v919 = vadd.f32 %v199, %v918
    %v920 = vpop.f32.mrb[0].mxu0
    %v921 = vadd.f32 %v203, %v920
    %v922 = vpop.f32.mrb[0].mxu0
    %v923 = vadd.f32 %v199, %v922
    %v924 = vpop.f32.mrb[0].mxu0
    %v925 = vadd.f32 %v203, %v924
    %926 = vdwg.mxu0
    %927 = vmatprep.subr.bf16.mxu0 %v467
    %928 = vmatpush1.bf16.msra.mxu0 %v466
    %929 = vmatprep.subr.bf16.mxu0 %v475
    %930 = vmatpush1.bf16.msra.mxu0 %v474
    %931 = vmatprep.subr.bf16.mxu0 %v483
    %932 = vmatpush1.bf16.msra.mxu0 %v482
    %933 = vmatprep.subr.bf16.mxu0 %v491
    %934 = vmatpush1.bf16.msra.mxu0 %v490
    %935 = vmatprep.subr.bf16.mxu0 %v499
    %936 = vmatpush1.bf16.msra.mxu0 %v498
    %937 = vmatprep.subr.bf16.mxu0 %v507
    %938 = vmatpush1.bf16.msra.mxu0 %v506
    %939 = vmatprep.subr.bf16.mxu0 %v515
    %940 = vmatpush1.bf16.msra.mxu0 %v514
    %941 = vmatprep.subr.bf16.mxu0 %v523
    %942 = vmatpush1.bf16.msra.mxu0 %v522
    %943 = vmatprep.subr.bf16.mxu0 0
    %944 = vmatpush1.bf16.msra.mxu0 0
    %945 = vmatprep.subr.bf16.mxu0 0
    %946 = vmatpush1.bf16.msra.mxu0 0
    %947 = vmatprep.subr.bf16.mxu0 0
    %948 = vmatpush1.bf16.msra.mxu0 0
    %949 = vmatprep.subr.bf16.mxu0 0
    %950 = vmatpush1.bf16.msra.mxu0 0
    %951 = vmatprep.subr.bf16.mxu0 0
    %952 = vmatpush1.bf16.msra.mxu0 0
    %953 = vmatprep.subr.bf16.mxu0 0
    %954 = vmatpush1.bf16.msra.mxu0 0
    %955 = vmatprep.subr.bf16.mxu0 0
    %956 = vmatpush1.bf16.msra.mxu0 0
    %957 = vmatprep.subr.bf16.mxu0 0
    %958 = vmatpush1.bf16.msra.mxu0 0
    %959 = vmatprep.mubr.bf16.mxu0 0
    %960 = vmatmul.mubr.bf16.gmra.mrb[0].mxu0 %v252
    %v961 = vpop.f32.mrb[0].mxu0
    %v962 = vadd.f32 %v207, %v961
    %v963 = vpop.f32.mrb[0].mxu0
    %v964 = vadd.f32 %v211, %v963
    %v965 = vpop.f32.mrb[0].mxu0
    %v966 = vadd.f32 %v207, %v965
    %v967 = vpop.f32.mrb[0].mxu0
    %v968 = vadd.f32 %v211, %v967
    %969 = vmatprep.mubr.bf16.mxu0 0
    %970 = vmatmul.mubr.bf16.gmra.mrb[0].mxu0 %v253
    %v971 = vpop.f32.mrb[0].mxu0
    %v972 = vadd.f32 %v207, %v971
    %v973 = vpop.f32.mrb[0].mxu0
    %v974 = vadd.f32 %v211, %v973
    %v975 = vpop.f32.mrb[0].mxu0
    %v976 = vadd.f32 %v207, %v975
    %v977 = vpop.f32.mrb[0].mxu0
    %v978 = vadd.f32 %v211, %v977
    %979 = vmatprep.mubr.bf16.mxu0 0
    %980 = vmatmul.mubr.bf16.gmra.mrb[0].mxu0 %v254
    %v981 = vpop.f32.mrb[0].mxu0
    %v982 = vadd.f32 %v207, %v981
    %v983 = vpop.f32.mrb[0].mxu0
    %v984 = vadd.f32 %v211, %v983
    %v985 = vpop.f32.mrb[0].mxu0
    %v986 = vadd.f32 %v207, %v985
    %v987 = vpop.f32.mrb[0].mxu0
    %v988 = vadd.f32 %v211, %v987
    %989 = vmatprep.mubr.bf16.mxu0 0
    %990 = vmatmul.mubr.bf16.gmra.mrb[0].mxu0 %v255
    %v991 = vpop.f32.mrb[0].mxu0
    %v992 = vadd.f32 %v207, %v991
    %v993 = vpop.f32.mrb[0].mxu0
    %v994 = vadd.f32 %v211, %v993
    %v995 = vpop.f32.mrb[0].mxu0
    %v996 = vadd.f32 %v207, %v995
    %v997 = vpop.f32.mrb[0].mxu0
    %v998 = vadd.f32 %v211, %v997
    %999 = vmatprep.mubr.bf16.mxu0 0
    %1000 = vmatmul.mubr.bf16.gmra.mrb[0].mxu0 %v256
    %v1001 = vpop.f32.mrb[0].mxu0
    %v1002 = vadd.f32 %v207, %v1001
    %v1003 = vpop.f32.mrb[0].mxu0
    %v1004 = vadd.f32 %v211, %v1003
    %v1005 = vpop.f32.mrb[0].mxu0
    %v1006 = vadd.f32 %v207, %v1005
    %v1007 = vpop.f32.mrb[0].mxu0
    %v1008 = vadd.f32 %v211, %v1007
    %1009 = vmatprep.mubr.bf16.mxu0 0
    %1010 = vmatmul.mubr.bf16.gmra.mrb[0].mxu0 %v257
    %v1011 = vpop.f32.mrb[0].mxu0
    %v1012 = vadd.f32 %v207, %v1011
    %v1013 = vpop.f32.mrb[0].mxu0
    %v1014 = vadd.f32 %v211, %v1013
    %v1015 = vpop.f32.mrb[0].mxu0
    %v1016 = vadd.f32 %v207, %v1015
    %v1017 = vpop.f32.mrb[0].mxu0
    %v1018 = vadd.f32 %v211, %v1017
    %1019 = vmatprep.mubr.bf16.mxu0 0
    %1020 = vmatmul.mubr.bf16.gmra.mrb[0].mxu0 %v258
    %v1021 = vpop.f32.mrb[0].mxu0
    %v1022 = vadd.f32 %v207, %v1021
    %v1023 = vpop.f32.mrb[0].mxu0
    %v1024 = vadd.f32 %v211, %v1023
    %v1025 = vpop.f32.mrb[0].mxu0
    %v1026 = vadd.f32 %v207, %v1025
    %v1027 = vpop.f32.mrb[0].mxu0
    %v1028 = vadd.f32 %v211, %v1027
    %1029 = vmatprep.mubr.bf16.mxu0 0
    %1030 = vmatmul.mubr.bf16.gmra.mrb[0].mxu0 %v259
    %v1031 = vpop.f32.mrb[0].mxu0
    %v1032 = vadd.f32 %v207, %v1031
    %v1033 = vpop.f32.mrb[0].mxu0
    %v1034 = vadd.f32 %v211, %v1033
    %v1035 = vpop.f32.mrb[0].mxu0
    %v1036 = vadd.f32 %v207, %v1035
    %v1037 = vpop.f32.mrb[0].mxu0
    %v1038 = vadd.f32 %v211, %v1037
    %1039 = vdwg.mxu0
    %v1040 = vpack.c.bf16 %v627, %v623
    %v1041 = vpack.c.bf16 %v629, %v625
    %v1042 = vpack.c.bf16 %v740, %v736
    %v1043 = vpack.c.bf16 %v742, %v738
    %v1044 = vpack.c.bf16 %v853, %v849
    %v1045 = vpack.c.bf16 %v855, %v851
    %v1046 = vpack.c.bf16 %v966, %v962
    %v1047 = vpack.c.bf16 %v968, %v964
    %v1048 = vpack.c.bf16 %v637, %v633
    %v1049 = vpack.c.bf16 %v639, %v635
    %v1050 = vpack.c.bf16 %v750, %v746
    %v1051 = vpack.c.bf16 %v752, %v748
    %v1052 = vpack.c.bf16 %v863, %v859
    %v1053 = vpack.c.bf16 %v865, %v861
    %v1054 = vpack.c.bf16 %v976, %v972
    %v1055 = vpack.c.bf16 %v978, %v974
    %v1056 = vpack.c.bf16 %v647, %v643
    %v1057 = vpack.c.bf16 %v649, %v645
    %v1058 = vpack.c.bf16 %v760, %v756
    %v1059 = vpack.c.bf16 %v762, %v758
    %v1060 = vpack.c.bf16 %v873, %v869
    %v1061 = vpack.c.bf16 %v875, %v871
    %v1062 = vpack.c.bf16 %v986, %v982
    %v1063 = vpack.c.bf16 %v988, %v984
    %v1064 = vpack.c.bf16 %v657, %v653
    %v1065 = vpack.c.bf16 %v659, %v655
    %v1066 = vpack.c.bf16 %v770, %v766
    %v1067 = vpack.c.bf16 %v772, %v768
    %v1068 = vpack.c.bf16 %v883, %v879
    %v1069 = vpack.c.bf16 %v885, %v881
    %v1070 = vpack.c.bf16 %v996, %v992
    %v1071 = vpack.c.bf16 %v998, %v994
    %v1072 = vpack.c.bf16 %v667, %v663
    %v1073 = vpack.c.bf16 %v669, %v665
    %v1074 = vpack.c.bf16 %v780, %v776
    %v1075 = vpack.c.bf16 %v782, %v778
    %v1076 = vpack.c.bf16 %v893, %v889
    %v1077 = vpack.c.bf16 %v895, %v891
    %v1078 = vpack.c.bf16 %v1006, %v1002
    %v1079 = vpack.c.bf16 %v1008, %v1004
    %v1080 = vpack.c.bf16 %v677, %v673
    %v1081 = vpack.c.bf16 %v679, %v675
    %v1082 = vpack.c.bf16 %v790, %v786
    %v1083 = vpack.c.bf16 %v792, %v788
    %v1084 = vpack.c.bf16 %v903, %v899
    %v1085 = vpack.c.bf16 %v905, %v901
    %v1086 = vpack.c.bf16 %v1016, %v1012
    %v1087 = vpack.c.bf16 %v1018, %v1014
    %v1088 = vpack.c.bf16 %v687, %v683
    %v1089 = vpack.c.bf16 %v689, %v685
    %v1090 = vpack.c.bf16 %v800, %v796
    %v1091 = vpack.c.bf16 %v802, %v798
    %v1092 = vpack.c.bf16 %v913, %v909
    %v1093 = vpack.c.bf16 %v915, %v911
    %v1094 = vpack.c.bf16 %v1026, %v1022
    %v1095 = vpack.c.bf16 %v1028, %v1024
    %v1096 = vpack.c.bf16 %v697, %v693
    %v1097 = vpack.c.bf16 %v699, %v695
    %v1098 = vpack.c.bf16 %v810, %v806
    %v1099 = vpack.c.bf16 %v812, %v808
    %v1100 = vpack.c.bf16 %v923, %v919
    %v1101 = vpack.c.bf16 %v925, %v921
    %v1102 = vpack.c.bf16 %v1036, %v1032
    %v1103 = vpack.c.bf16 %v1038, %v1034
    %1104 = vst [vmem:[#allocation2] sm:$0xff] %v1040
    %1105 = vst [vmem:[#allocation2 + $0x8] sm:$0xff] %v1041
    %1106 = vst [vmem:[#allocation2 + $0x10] sm:$0xff] %v1042
    %1107 = vst [vmem:[#allocation2 + $0x18] sm:$0xff] %v1043
    %1108 = vst [vmem:[#allocation2 + $0x20] sm:$0xff] %v1044
    %1109 = vst [vmem:[#allocation2 + $0x28] sm:$0xff] %v1045
    %1110 = vst [vmem:[#allocation2 + $0x30] sm:$0xff] %v1046
    %1111 = vst [vmem:[#allocation2 + $0x38] sm:$0xff] %v1047
    %1112 = vst [vmem:[#allocation2 + $0x40] sm:$0xff] %v1048
    %1113 = vst [vmem:[#allocation2 + $0x48] sm:$0xff] %v1049
    %1114 = vst [vmem:[#allocation2 + $0x50] sm:$0xff] %v1050
    %1115 = vst [vmem:[#allocation2 + $0x58] sm:$0xff] %v1051
    %1116 = vst [vmem:[#allocation2 + $0x60] sm:$0xff] %v1052
    %1117 = vst [vmem:[#allocation2 + $0x68] sm:$0xff] %v1053
    %1118 = vst [vmem:[#allocation2 + $0x70] sm:$0xff] %v1054
    %1119 = vst [vmem:[#allocation2 + $0x78] sm:$0xff] %v1055
    %1120 = vst [vmem:[#allocation2 + $0x80] sm:$0xff] %v1056
    %1121 = vst [vmem:[#allocation2 + $0x88] sm:$0xff] %v1057
    %1122 = vst [vmem:[#allocation2 + $0x90] sm:$0xff] %v1058
    %1123 = vst [vmem:[#allocation2 + $0x98] sm:$0xff] %v1059
    %1124 = vst [vmem:[#allocation2 + $0xa0] sm:$0xff] %v1060
    %1125 = vst [vmem:[#allocation2 + $0xa8] sm:$0xff] %v1061
    %1126 = vst [vmem:[#allocation2 + $0xb0] sm:$0xff] %v1062
    %1127 = vst [vmem:[#allocation2 + $0xb8] sm:$0xff] %v1063
    %1128 = vst [vmem:[#allocation2 + $0xc0] sm:$0xff] %v1064
    %1129 = vst [vmem:[#allocation2 + $0xc8] sm:$0xff] %v1065
    %1130 = vst [vmem:[#allocation2 + $0xd0] sm:$0xff] %v1066
    %1131 = vst [vmem:[#allocation2 + $0xd8] sm:$0xff] %v1067
    %1132 = vst [vmem:[#allocation2 + $0xe0] sm:$0xff] %v1068
    %1133 = vst [vmem:[#allocation2 + $0xe8] sm:$0xff] %v1069
    %1134 = vst [vmem:[#allocation2 + $0xf0] sm:$0xff] %v1070
    %1135 = vst [vmem:[#allocation2 + $0xf8] sm:$0xff] %v1071
    %1136 = vst [vmem:[#allocation2 + $0x100] sm:$0xff] %v1072
    %1137 = vst [vmem:[#allocation2 + $0x108] sm:$0xff] %v1073
    %1138 = vst [vmem:[#allocation2 + $0x110] sm:$0xff] %v1074
    %1139 = vst [vmem:[#allocation2 + $0x118] sm:$0xff] %v1075
    %1140 = vst [vmem:[#allocation2 + $0x120] sm:$0xff] %v1076
    %1141 = vst [vmem:[#allocation2 + $0x128] sm:$0xff] %v1077
    %1142 = vst [vmem:[#allocation2 + $0x130] sm:$0xff] %v1078
    %1143 = vst [vmem:[#allocation2 + $0x138] sm:$0xff] %v1079
    %1144 = vst [vmem:[#allocation2 + $0x140] sm:$0xff] %v1080
    %1145 = vst [vmem:[#allocation2 + $0x148] sm:$0xff] %v1081
    %1146 = vst [vmem:[#allocation2 + $0x150] sm:$0xff] %v1082
    %1147 = vst [vmem:[#allocation2 + $0x158] sm:$0xff] %v1083
    %1148 = vst [vmem:[#allocation2 + $0x160] sm:$0xff] %v1084
    %1149 = vst [vmem:[#allocation2 + $0x168] sm:$0xff] %v1085
    %1150 = vst [vmem:[#allocation2 + $0x170] sm:$0xff] %v1086
    %1151 = vst [vmem:[#allocation2 + $0x178] sm:$0xff] %v1087
    %1152 = vst [vmem:[#allocation2 + $0x180] sm:$0xff] %v1088
    %1153 = vst [vmem:[#allocation2 + $0x188] sm:$0xff] %v1089
    %1154 = vst [vmem:[#allocation2 + $0x190] sm:$0xff] %v1090
    %1155 = vst [vmem:[#allocation2 + $0x198] sm:$0xff] %v1091
    %1156 = vst [vmem:[#allocation2 + $0x1a0] sm:$0xff] %v1092
    %1157 = vst [vmem:[#allocation2 + $0x1a8] sm:$0xff] %v1093
    %1158 = vst [vmem:[#allocation2 + $0x1b0] sm:$0xff] %v1094
    %1159 = vst [vmem:[#allocation2 + $0x1b8] sm:$0xff] %v1095
    %1160 = vst [vmem:[#allocation2 + $0x1c0] sm:$0xff] %v1096
    %1161 = vst [vmem:[#allocation2 + $0x1c8] sm:$0xff] %v1097
    %1162 = vst [vmem:[#allocation2 + $0x1d0] sm:$0xff] %v1098
    %1163 = vst [vmem:[#allocation2 + $0x1d8] sm:$0xff] %v1099
    %1164 = vst [vmem:[#allocation2 + $0x1e0] sm:$0xff] %v1100
    %1165 = vst [vmem:[#allocation2 + $0x1e8] sm:$0xff] %v1101
    %1166 = vst [vmem:[#allocation2 + $0x1f0] sm:$0xff] %v1102
    %1167 = vst [vmem:[#allocation2 + $0x1f8] sm:$0xff] %v1103
    %v1168 = vld [vmem:[#allocation10] sm:$0xff]
    %v1169 = vld [vmem:[#allocation10 + $0x8] sm:$0xff]
    %v1170 = vld [vmem:[#allocation10 + $0x10] sm:$0xff]
    %v1171 = vld [vmem:[#allocation10 + $0x18] sm:$0xff]
    %v1172 = vld [vmem:[#allocation10 + $0x20] sm:$0xff]
    %v1173 = vld [vmem:[#allocation10 + $0x28] sm:$0xff]
    %v1174 = vld [vmem:[#allocation10 + $0x30] sm:$0xff]
    %v1175 = vld [vmem:[#allocation10 + $0x38] sm:$0xff]
    %v1176 = vld [vmem:[#allocation10 + $0x40] sm:$0xff]
    %v1177 = vld [vmem:[#allocation10 + $0x48] sm:$0xff]
    %v1178 = vld [vmem:[#allocation10 + $0x50] sm:$0xff]
    %v1179 = vld [vmem:[#allocation10 + $0x58] sm:$0xff]
    %v1180 = vld [vmem:[#allocation10 + $0x60] sm:$0xff]
    %v1181 = vld [vmem:[#allocation10 + $0x68] sm:$0xff]
    %v1182 = vld [vmem:[#allocation10 + $0x70] sm:$0xff]
    %v1183 = vld [vmem:[#allocation10 + $0x78] sm:$0xff]
    %v1184 = vld [vmem:[#allocation10 + $0x80] sm:$0xff]
    %v1185 = vld [vmem:[#allocation10 + $0x88] sm:$0xff]
    %v1186 = vld [vmem:[#allocation10 + $0x90] sm:$0xff]
    %v1187 = vld [vmem:[#allocation10 + $0x98] sm:$0xff]
    %v1188 = vld [vmem:[#allocation10 + $0xa0] sm:$0xff]
    %v1189 = vld [vmem:[#allocation10 + $0xa8] sm:$0xff]
    %v1190 = vld [vmem:[#allocation10 + $0xb0] sm:$0xff]
    %v1191 = vld [vmem:[#allocation10 + $0xb8] sm:$0xff]
    %v1192 = vld [vmem:[#allocation10 + $0xc0] sm:$0xff]
    %v1193 = vld [vmem:[#allocation10 + $0xc8] sm:$0xff]
    %v1194 = vld [vmem:[#allocation10 + $0xd0] sm:$0xff]
    %v1195 = vld [vmem:[#allocation10 + $0xd8] sm:$0xff]
    %v1196 = vld [vmem:[#allocation10 + $0xe0] sm:$0xff]
    %v1197 = vld [vmem:[#allocation10 + $0xe8] sm:$0xff]
    %v1198 = vld [vmem:[#allocation10 + $0xf0] sm:$0xff]
    %v1199 = vld [vmem:[#allocation10 + $0xf8] sm:$0xff]
    %v1200 = vld [vmem:[#allocation12] sm:$0xff]
    %v1201 = vld [vmem:[#allocation12 + $0x8] sm:$0xff]
    %v1202 = vld [vmem:[#allocation12 + $0x10] sm:$0xff]
    %v1203 = vld [vmem:[#allocation12 + $0x18] sm:$0xff]
    %v1204 = vld [vmem:[#allocation12 + $0x20] sm:$0xff]
    %v1205 = vld [vmem:[#allocation12 + $0x28] sm:$0xff]
    %v1206 = vld [vmem:[#allocation12 + $0x30] sm:$0xff]
    %v1207 = vld [vmem:[#allocation12 + $0x38] sm:$0xff]
    %v1208 = vld [vmem:[#allocation12 + $0x40] sm:$0xff]
    %v1209 = vld [vmem:[#allocation12 + $0x48] sm:$0xff]
    %v1210 = vld [vmem:[#allocation12 + $0x50] sm:$0xff]
    %v1211 = vld [vmem:[#allocation12 + $0x58] sm:$0xff]
    %v1212 = vld [vmem:[#allocation12 + $0x60] sm:$0xff]
    %v1213 = vld [vmem:[#allocation12 + $0x68] sm:$0xff]
    %v1214 = vld [vmem:[#allocation12 + $0x70] sm:$0xff]
    %v1215 = vld [vmem:[#allocation12 + $0x78] sm:$0xff]
    %v1216 = vld [vmem:[#allocation12 + $0x80] sm:$0xff]
    %v1217 = vld [vmem:[#allocation12 + $0x88] sm:$0xff]
    %v1218 = vld [vmem:[#allocation12 + $0x90] sm:$0xff]
    %v1219 = vld [vmem:[#allocation12 + $0x98] sm:$0xff]
    %v1220 = vld [vmem:[#allocation12 + $0xa0] sm:$0xff]
    %v1221 = vld [vmem:[#allocation12 + $0xa8] sm:$0xff]
    %v1222 = vld [vmem:[#allocation12 + $0xb0] sm:$0xff]
    %v1223 = vld [vmem:[#allocation12 + $0xb8] sm:$0xff]
    %v1224 = vld [vmem:[#allocation12 + $0xc0] sm:$0xff]
    %v1225 = vld [vmem:[#allocation12 + $0xc8] sm:$0xff]
    %v1226 = vld [vmem:[#allocation12 + $0xd0] sm:$0xff]
    %v1227 = vld [vmem:[#allocation12 + $0xd8] sm:$0xff]
    %v1228 = vld [vmem:[#allocation12 + $0xe0] sm:$0xff]
    %v1229 = vld [vmem:[#allocation12 + $0xe8] sm:$0xff]
    %v1230 = vld [vmem:[#allocation12 + $0xf0] sm:$0xff]
    %v1231 = vld [vmem:[#allocation12 + $0xf8] sm:$0xff]
    loop: start=0, step=1, limit=8
    $region66: #{tpu_custom_call.1} parent=1 // loop_pre_header
      _
    $region67: #{tpu_custom_call.1} parent=1 // loop_header
      %s1233 = sphi 0, %s1237
      %p1234 = scmp.ge.s32.totalorder %s1233, 8
      %v1238 = vphi 0.0, %v1570
      %v1239 = vphi 0.0, %v1571
      %v1240 = vphi 0.0, %v1566
      %v1241 = vphi 0.0, %v1567
      %v1242 = vphi 0.0, %v1881
      %v1243 = vphi 0.0, %v1882
      %v1244 = vphi 0.0, %v1877
      %v1245 = vphi 0.0, %v1878
    $region68: #{tpu_custom_call.1} parent=1 // loop_header_branch
      %1236 = sbr.rel (%p1234) target = $region72
    $region69: #{tpu_custom_call.1} parent=1 // loop_body
      %s1246 = ssub.s32 7, %s1233
      %s1247 = smul.u32 %s1233, 8
      %s1248 = smul.addr %s1247, 8
      %s1249 = scalar_lea.vmem [#allocation2], %s1248
      %v1250 = vld [vmem:[%s1249] sm:$0xff]
      %v1251 = vld [vmem:[%s1249 + $0x8] sm:$0xff]
      %v1252 = vld [vmem:[%s1249 + $0x10] sm:$0xff]
      %v1253 = vld [vmem:[%s1249 + $0x18] sm:$0xff]
      %s1254 = smul.u32 %s1246, 8
      %s1255 = smul.addr %s1254, 8
      %s1256 = scalar_lea.vmem [#allocation2], %s1255
      %v1257 = vld [vmem:[%s1256 + $0x20] sm:$0xff]
      %v1258 = vld [vmem:[%s1256 + $0x28] sm:$0xff]
      %v1259 = vld [vmem:[%s1256 + $0x30] sm:$0xff]
      %v1260 = vld [vmem:[%s1256 + $0x38] sm:$0xff]
      %v1261 = vunpack.c.l.bf16 %v1250
      %v1262 = vunpack.c.l.bf16 %v1251
      %v1263 = vunpack.c.l.bf16 %v1252
      %v1264 = vunpack.c.l.bf16 %v1253
      %v1265 = vunpack.c.h.bf16 %v1250
      %v1266 = vunpack.c.h.bf16 %v1251
      %v1267 = vunpack.c.h.bf16 %v1252
      %v1268 = vunpack.c.h.bf16 %v1253
      %v1269 = vpack.c.bf16 %v1239, %v1238
      %v1302 = vunpack.c.l.b16 %v1168
      %v1303 = vunpack.c.h.b16 %v1168
      %v1304 = vunpack.c.l.b16 %v1169
      %v1305 = vunpack.c.h.b16 %v1169
      %v1306 = vunpack.c.l.b16 %v1170
      %v1307 = vunpack.c.h.b16 %v1170
      %v1308 = vunpack.c.l.b16 %v1171
      %v1309 = vunpack.c.h.b16 %v1171
      %v1310 = vunpack.c.l.b16 %v1172
      %v1311 = vunpack.c.h.b16 %v1172
      %v1312 = vunpack.c.l.b16 %v1173
      %v1313 = vunpack.c.h.b16 %v1173
      %v1314 = vunpack.c.l.b16 %v1174
      %v1315 = vunpack.c.h.b16 %v1174
      %v1316 = vunpack.c.l.b16 %v1175
      %v1317 = vunpack.c.h.b16 %v1175
      %v1318 = vunpack.c.l.b16 %v1176
      %v1319 = vunpack.c.h.b16 %v1176
      %v1320 = vunpack.c.l.b16 %v1177
      %v1321 = vunpack.c.h.b16 %v1177
      %v1322 = vunpack.c.l.b16 %v1178
      %v1323 = vunpack.c.h.b16 %v1178
      %v1324 = vunpack.c.l.b16 %v1179
      %v1325 = vunpack.c.h.b16 %v1179
      %v1326 = vunpack.c.l.b16 %v1180
      %v1327 = vunpack.c.h.b16 %v1180
      %v1328 = vunpack.c.l.b16 %v1181
      %v1329 = vunpack.c.h.b16 %v1181
      %v1330 = vunpack.c.l.b16 %v1182
      %v1331 = vunpack.c.h.b16 %v1182
      %v1332 = vunpack.c.l.b16 %v1183
      %v1333 = vunpack.c.h.b16 %v1183
      %v1334 = vunpack.c.l.b16 %v1184
      %v1335 = vunpack.c.h.b16 %v1184
      %v1336 = vunpack.c.l.b16 %v1185
      %v1337 = vunpack.c.h.b16 %v1185
      %v1338 = vunpack.c.l.b16 %v1186
      %v1339 = vunpack.c.h.b16 %v1186
      %v1340 = vunpack.c.l.b16 %v1187
      %v1341 = vunpack.c.h.b16 %v1187
      %v1342 = vunpack.c.l.b16 %v1188
      %v1343 = vunpack.c.h.b16 %v1188
      %v1344 = vunpack.c.l.b16 %v1189
      %v1345 = vunpack.c.h.b16 %v1189
      %v1346 = vunpack.c.l.b16 %v1190
      %v1347 = vunpack.c.h.b16 %v1190
      %v1348 = vunpack.c.l.b16 %v1191
      %v1349 = vunpack.c.h.b16 %v1191
      %v1350 = vunpack.c.l.b16 %v1192
      %v1351 = vunpack.c.h.b16 %v1192
      %v1352 = vunpack.c.l.b16 %v1193
      %v1353 = vunpack.c.h.b16 %v1193
      %v1354 = vunpack.c.l.b16 %v1194
      %v1355 = vunpack.c.h.b16 %v1194
      %v1356 = vunpack.c.l.b16 %v1195
      %v1357 = vunpack.c.h.b16 %v1195
      %v1358 = vunpack.c.l.b16 %v1196
      %v1359 = vunpack.c.h.b16 %v1196
      %v1360 = vunpack.c.l.b16 %v1197
      %v1361 = vunpack.c.h.b16 %v1197
      %v1362 = vunpack.c.l.b16 %v1198
      %v1363 = vunpack.c.h.b16 %v1198
      %v1364 = vunpack.c.l.b16 %v1199
      %v1365 = vunpack.c.h.b16 %v1199
      %v1366 = vpack.c.b16 %v1306, %v1302
      %v1367 = vpack.c.b16 %v1307, %v1303
      %v1368 = vpack.c.b16 %v1308, %v1304
      %v1369 = vpack.c.b16 %v1309, %v1305
      %v1370 = vpack.c.b16 %v1314, %v1310
      %v1371 = vpack.c.b16 %v1315, %v1311
      %v1372 = vpack.c.b16 %v1316, %v1312
      %v1373 = vpack.c.b16 %v1317, %v1313
      %v1374 = vpack.c.b16 %v1322, %v1318
      %v1375 = vpack.c.b16 %v1323, %v1319
      %v1376 = vpack.c.b16 %v1324, %v1320
      %v1377 = vpack.c.b16 %v1325, %v1321
      %v1378 = vpack.c.b16 %v1330, %v1326
      %v1379 = vpack.c.b16 %v1331, %v1327
      %v1380 = vpack.c.b16 %v1332, %v1328
      %v1381 = vpack.c.b16 %v1333, %v1329
      %v1382 = vpack.c.b16 %v1338, %v1334
      %v1383 = vpack.c.b16 %v1339, %v1335
      %v1384 = vpack.c.b16 %v1340, %v1336
      %v1385 = vpack.c.b16 %v1341, %v1337
      %v1386 = vpack.c.b16 %v1346, %v1342
      %v1387 = vpack.c.b16 %v1347, %v1343
      %v1388 = vpack.c.b16 %v1348, %v1344
      %v1389 = vpack.c.b16 %v1349, %v1345
      %v1390 = vpack.c.b16 %v1354, %v1350
      %v1391 = vpack.c.b16 %v1355, %v1351
      %v1392 = vpack.c.b16 %v1356, %v1352
      %v1393 = vpack.c.b16 %v1357, %v1353
      %v1394 = vpack.c.b16 %v1362, %v1358
      %v1395 = vpack.c.b16 %v1363, %v1359
      %v1396 = vpack.c.b16 %v1364, %v1360
      %v1397 = vpack.c.b16 %v1365, %v1361
      %1430 = vmatprep.subr.bf16.mxu0 %v1367
      %1431 = vmatpush1.bf16.msra.mxu0 %v1366
      %1432 = vmatprep.subr.bf16.mxu0 %v1371
      %1433 = vmatpush1.bf16.msra.mxu0 %v1370
      %1434 = vmatprep.subr.bf16.mxu0 %v1375
      %1435 = vmatpush1.bf16.msra.mxu0 %v1374
      %1436 = vmatprep.subr.bf16.mxu0 %v1379
      %1437 = vmatpush1.bf16.msra.mxu0 %v1378
      %1438 = vmatprep.subr.bf16.mxu0 %v1383
      %1439 = vmatpush1.bf16.msra.mxu0 %v1382
      %1440 = vmatprep.subr.bf16.mxu0 %v1387
      %1441 = vmatpush1.bf16.msra.mxu0 %v1386
      %1442 = vmatprep.subr.bf16.mxu0 %v1391
      %1443 = vmatpush1.bf16.msra.mxu0 %v1390
      %1444 = vmatprep.subr.bf16.mxu0 %v1395
      %1445 = vmatpush1.bf16.msra.mxu0 %v1394
      %1446 = vmatprep.subr.bf16.mxu0 0
      %1447 = vmatpush1.bf16.msra.mxu0 0
      %1448 = vmatprep.subr.bf16.mxu0 0
      %1449 = vmatpush1.bf16.msra.mxu0 0
      %1450 = vmatprep.subr.bf16.mxu0 0
      %1451 = vmatpush1.bf16.msra.mxu0 0
      %1452 = vmatprep.subr.bf16.mxu0 0
      %1453 = vmatpush1.bf16.msra.mxu0 0
      %1454 = vmatprep.subr.bf16.mxu0 0
      %1455 = vmatpush1.bf16.msra.mxu0 0
      %1456 = vmatprep.subr.bf16.mxu0 0
      %1457 = vmatpush1.bf16.msra.mxu0 0
      %1458 = vmatprep.subr.bf16.mxu0 0
      %1459 = vmatpush1.bf16.msra.mxu0 0
      %1460 = vmatprep.subr.bf16.mxu0 0
      %1461 = vmatpush1.bf16.msra.mxu0 0
      %1462 = vmatprep.mubr.bf16.mxu0 0
      %1463 = vmatmul.mubr.bf16.gmra.mrb[0].mxu0 %v1269
      %v1464 = vpop.f32.mrb[0].mxu0
      %v1465 = vadd.f32 0.0, %v1464
      %v1466 = vpop.f32.mrb[0].mxu0
      %v1467 = vadd.f32 0.0, %v1466
      %v1468 = vpop.f32.mrb[0].mxu0
      %v1469 = vadd.f32 0.0, %v1468
      %v1470 = vpop.f32.mrb[0].mxu0
      %v1471 = vadd.f32 0.0, %v1470
      %1472 = vdwg.mxu0
      %1473 = vmatprep.subr.bf16.mxu0 %v1369
      %1474 = vmatpush1.bf16.msra.mxu0 %v1368
      %1475 = vmatprep.subr.bf16.mxu0 %v1373
      %1476 = vmatpush1.bf16.msra.mxu0 %v1372
      %1477 = vmatprep.subr.bf16.mxu0 %v1377
      %1478 = vmatpush1.bf16.msra.mxu0 %v1376
      %1479 = vmatprep.subr.bf16.mxu0 %v1381
      %1480 = vmatpush1.bf16.msra.mxu0 %v1380
      %1481 = vmatprep.subr.bf16.mxu0 %v1385
      %1482 = vmatpush1.bf16.msra.mxu0 %v1384
      %1483 = vmatprep.subr.bf16.mxu0 %v1389
      %1484 = vmatpush1.bf16.msra.mxu0 %v1388
      %1485 = vmatprep.subr.bf16.mxu0 %v1393
      %1486 = vmatpush1.bf16.msra.mxu0 %v1392
      %1487 = vmatprep.subr.bf16.mxu0 %v1397
      %1488 = vmatpush1.bf16.msra.mxu0 %v1396
      %1489 = vmatprep.subr.bf16.mxu0 0
      %1490 = vmatpush1.bf16.msra.mxu0 0
      %1491 = vmatprep.subr.bf16.mxu0 0
      %1492 = vmatpush1.bf16.msra.mxu0 0
      %1493 = vmatprep.subr.bf16.mxu0 0
      %1494 = vmatpush1.bf16.msra.mxu0 0
      %1495 = vmatprep.subr.bf16.mxu0 0
      %1496 = vmatpush1.bf16.msra.mxu0 0
      %1497 = vmatprep.subr.bf16.mxu0 0
      %1498 = vmatpush1.bf16.msra.mxu0 0
      %1499 = vmatprep.subr.bf16.mxu0 0
      %1500 = vmatpush1.bf16.msra.mxu0 0
      %1501 = vmatprep.subr.bf16.mxu0 0
      %1502 = vmatpush1.bf16.msra.mxu0 0
      %1503 = vmatprep.subr.bf16.mxu0 0
      %1504 = vmatpush1.bf16.msra.mxu0 0
      %1505 = vmatprep.mubr.bf16.mxu0 0
      %1506 = vmatmul.mubr.bf16.gmra.mrb[0].mxu0 %v1269
      %v1507 = vpop.f32.mrb[0].mxu0
      %v1508 = vadd.f32 0.0, %v1507
      %v1509 = vpop.f32.mrb[0].mxu0
      %v1510 = vadd.f32 0.0, %v1509
      %v1511 = vpop.f32.mrb[0].mxu0
      %v1512 = vadd.f32 0.0, %v1511
      %v1513 = vpop.f32.mrb[0].mxu0
      %v1514 = vadd.f32 0.0, %v1513
      %1515 = vdwg.mxu0
      %v1516 = vadd.f32 %v1261, %v1465
      %v1517 = vadd.f32 %v1262, %v1467
      %v1518 = vadd.f32 %v1263, %v1508
      %v1519 = vadd.f32 %v1264, %v1510
      %v1520 = vadd.f32 %v1265, %v1469
      %v1521 = vadd.f32 %v1266, %v1471
      %v1522 = vadd.f32 %v1267, %v1512
      %v1523 = vadd.f32 %v1268, %v1514
      %v1524 = vxor.u32 %v1516, 2147483648
      %v1525 = vxor.u32 %v1520, 2147483648
      %v1526 = vmul.f32 %v1524, 1.442695
      %v1527 = vpow.pop %v1526
      %v1528 = vmul.f32 %v1525, 1.442695
      %v1529 = vpow.pop %v1528
      %v1530 = vadd.f32 %v1527, 1.0
      %v1531 = vadd.f32 %v1529, 1.0
      %v1532 = vrcp.pop %v1530
      %v1533 = vmul.f32 1.0, %v1532
      %v1534 = vrcp.pop %v1531
      %v1535 = vmul.f32 1.0, %v1534
      %v1536 = vxor.u32 %v1517, 2147483648
      %v1537 = vxor.u32 %v1521, 2147483648
      %v1538 = vmul.f32 %v1536, 1.442695
      %v1539 = vpow.pop %v1538
      %v1540 = vmul.f32 %v1537, 1.442695
      %v1541 = vpow.pop %v1540
      %v1542 = vadd.f32 %v1539, 1.0
      %v1543 = vadd.f32 %v1541, 1.0
      %v1544 = vrcp.pop %v1542
      %v1545 = vmul.f32 1.0, %v1544
      %v1546 = vrcp.pop %v1543
      %v1547 = vmul.f32 1.0, %v1546
      %v1548 = vtanh.pop %v1518
      %v1549 = vtanh.pop %v1522
      %v1550 = vxor.u32 %v1519, 2147483648
      %v1551 = vxor.u32 %v1523, 2147483648
      %v1552 = vmul.f32 %v1550, 1.442695
      %v1553 = vpow.pop %v1552
      %v1554 = vmul.f32 %v1551, 1.442695
      %v1555 = vpow.pop %v1554
      %v1556 = vadd.f32 %v1553, 1.0
      %v1557 = vadd.f32 %v1555, 1.0
      %v1558 = vrcp.pop %v1556
      %v1559 = vmul.f32 1.0, %v1558
      %v1560 = vrcp.pop %v1557
      %v1561 = vmul.f32 1.0, %v1560
      %v1562 = vmul.f32 %v1545, %v1240
      %v1563 = vmul.f32 %v1547, %v1241
      %v1564 = vmul.f32 %v1533, %v1548
      %v1565 = vmul.f32 %v1535, %v1549
      %v1566 = vadd.f32 %v1562, %v1564
      %v1567 = vadd.f32 %v1563, %v1565
      %v1568 = vtanh.pop %v1566
      %v1569 = vtanh.pop %v1567
      %v1570 = vmul.f32 %v1559, %v1568
      %v1571 = vmul.f32 %v1561, %v1569
      %v1572 = vunpack.c.l.bf16 %v1257
      %v1573 = vunpack.c.l.bf16 %v1258
      %v1574 = vunpack.c.l.bf16 %v1259
      %v1575 = vunpack.c.l.bf16 %v1260
      %v1576 = vunpack.c.h.bf16 %v1257
      %v1577 = vunpack.c.h.bf16 %v1258
      %v1578 = vunpack.c.h.bf16 %v1259
      %v1579 = vunpack.c.h.bf16 %v1260
      %v1580 = vpack.c.bf16 %v1243, %v1242
      %v1613 = vunpack.c.l.b16 %v1200
      %v1614 = vunpack.c.h.b16 %v1200
      %v1615 = vunpack.c.l.b16 %v1201
      %v1616 = vunpack.c.h.b16 %v1201
      %v1617 = vunpack.c.l.b16 %v1202
      %v1618 = vunpack.c.h.b16 %v1202
      %v1619 = vunpack.c.l.b16 %v1203
      %v1620 = vunpack.c.h.b16 %v1203
      %v1621 = vunpack.c.l.b16 %v1204
      %v1622 = vunpack.c.h.b16 %v1204
      %v1623 = vunpack.c.l.b16 %v1205
      %v1624 = vunpack.c.h.b16 %v1205
      %v1625 = vunpack.c.l.b16 %v1206
      %v1626 = vunpack.c.h.b16 %v1206
      %v1627 = vunpack.c.l.b16 %v1207
      %v1628 = vunpack.c.h.b16 %v1207
      %v1629 = vunpack.c.l.b16 %v1208
      %v1630 = vunpack.c.h.b16 %v1208
      %v1631 = vunpack.c.l.b16 %v1209
      %v1632 = vunpack.c.h.b16 %v1209
      %v1633 = vunpack.c.l.b16 %v1210
      %v1634 = vunpack.c.h.b16 %v1210
      %v1635 = vunpack.c.l.b16 %v1211
      %v1636 = vunpack.c.h.b16 %v1211
      %v1637 = vunpack.c.l.b16 %v1212
      %v1638 = vunpack.c.h.b16 %v1212
      %v1639 = vunpack.c.l.b16 %v1213
      %v1640 = vunpack.c.h.b16 %v1213
      %v1641 = vunpack.c.l.b16 %v1214
      %v1642 = vunpack.c.h.b16 %v1214
      %v1643 = vunpack.c.l.b16 %v1215
      %v1644 = vunpack.c.h.b16 %v1215
      %v1645 = vunpack.c.l.b16 %v1216
      %v1646 = vunpack.c.h.b16 %v1216
      %v1647 = vunpack.c.l.b16 %v1217
      %v1648 = vunpack.c.h.b16 %v1217
      %v1649 = vunpack.c.l.b16 %v1218
      %v1650 = vunpack.c.h.b16 %v1218
      %v1651 = vunpack.c.l.b16 %v1219
      %v1652 = vunpack.c.h.b16 %v1219
      %v1653 = vunpack.c.l.b16 %v1220
      %v1654 = vunpack.c.h.b16 %v1220
      %v1655 = vunpack.c.l.b16 %v1221
      %v1656 = vunpack.c.h.b16 %v1221
      %v1657 = vunpack.c.l.b16 %v1222
      %v1658 = vunpack.c.h.b16 %v1222
      %v1659 = vunpack.c.l.b16 %v1223
      %v1660 = vunpack.c.h.b16 %v1223
      %v1661 = vunpack.c.l.b16 %v1224
      %v1662 = vunpack.c.h.b16 %v1224
      %v1663 = vunpack.c.l.b16 %v1225
      %v1664 = vunpack.c.h.b16 %v1225
      %v1665 = vunpack.c.l.b16 %v1226
      %v1666 = vunpack.c.h.b16 %v1226
      %v1667 = vunpack.c.l.b16 %v1227
      %v1668 = vunpack.c.h.b16 %v1227
      %v1669 = vunpack.c.l.b16 %v1228
      %v1670 = vunpack.c.h.b16 %v1228
      %v1671 = vunpack.c.l.b16 %v1229
      %v1672 = vunpack.c.h.b16 %v1229
      %v1673 = vunpack.c.l.b16 %v1230
      %v1674 = vunpack.c.h.b16 %v1230
      %v1675 = vunpack.c.l.b16 %v1231
      %v1676 = vunpack.c.h.b16 %v1231
      %v1677 = vpack.c.b16 %v1617, %v1613
      %v1678 = vpack.c.b16 %v1618, %v1614
      %v1679 = vpack.c.b16 %v1619, %v1615
      %v1680 = vpack.c.b16 %v1620, %v1616
      %v1681 = vpack.c.b16 %v1625, %v1621
      %v1682 = vpack.c.b16 %v1626, %v1622
      %v1683 = vpack.c.b16 %v1627, %v1623
      %v1684 = vpack.c.b16 %v1628, %v1624
      %v1685 = vpack.c.b16 %v1633, %v1629
      %v1686 = vpack.c.b16 %v1634, %v1630
      %v1687 = vpack.c.b16 %v1635, %v1631
      %v1688 = vpack.c.b16 %v1636, %v1632
      %v1689 = vpack.c.b16 %v1641, %v1637
      %v1690 = vpack.c.b16 %v1642, %v1638
      %v1691 = vpack.c.b16 %v1643, %v1639
      %v1692 = vpack.c.b16 %v1644, %v1640
      %v1693 = vpack.c.b16 %v1649, %v1645
      %v1694 = vpack.c.b16 %v1650, %v1646
      %v1695 = vpack.c.b16 %v1651, %v1647
      %v1696 = vpack.c.b16 %v1652, %v1648
      %v1697 = vpack.c.b16 %v1657, %v1653
      %v1698 = vpack.c.b16 %v1658, %v1654
      %v1699 = vpack.c.b16 %v1659, %v1655
      %v1700 = vpack.c.b16 %v1660, %v1656
      %v1701 = vpack.c.b16 %v1665, %v1661
      %v1702 = vpack.c.b16 %v1666, %v1662
      %v1703 = vpack.c.b16 %v1667, %v1663
      %v1704 = vpack.c.b16 %v1668, %v1664
      %v1705 = vpack.c.b16 %v1673, %v1669
      %v1706 = vpack.c.b16 %v1674, %v1670
      %v1707 = vpack.c.b16 %v1675, %v1671
      %v1708 = vpack.c.b16 %v1676, %v1672
      %1741 = vmatprep.subr.bf16.mxu0 %v1678
      %1742 = vmatpush1.bf16.msra.mxu0 %v1677
      %1743 = vmatprep.subr.bf16.mxu0 %v1682
      %1744 = vmatpush1.bf16.msra.mxu0 %v1681
      %1745 = vmatprep.subr.bf16.mxu0 %v1686
      %1746 = vmatpush1.bf16.msra.mxu0 %v1685
      %1747 = vmatprep.subr.bf16.mxu0 %v1690
      %1748 = vmatpush1.bf16.msra.mxu0 %v1689
      %1749 = vmatprep.subr.bf16.mxu0 %v1694
      %1750 = vmatpush1.bf16.msra.mxu0 %v1693
      %1751 = vmatprep.subr.bf16.mxu0 %v1698
      %1752 = vmatpush1.bf16.msra.mxu0 %v1697
      %1753 = vmatprep.subr.bf16.mxu0 %v1702
      %1754 = vmatpush1.bf16.msra.mxu0 %v1701
      %1755 = vmatprep.subr.bf16.mxu0 %v1706
      %1756 = vmatpush1.bf16.msra.mxu0 %v1705
      %1757 = vmatprep.subr.bf16.mxu0 0
      %1758 = vmatpush1.bf16.msra.mxu0 0
      %1759 = vmatprep.subr.bf16.mxu0 0
      %1760 = vmatpush1.bf16.msra.mxu0 0
      %1761 = vmatprep.subr.bf16.mxu0 0
      %1762 = vmatpush1.bf16.msra.mxu0 0
      %1763 = vmatprep.subr.bf16.mxu0 0
      %1764 = vmatpush1.bf16.msra.mxu0 0
      %1765 = vmatprep.subr.bf16.mxu0 0
      %1766 = vmatpush1.bf16.msra.mxu0 0
      %1767 = vmatprep.subr.bf16.mxu0 0
      %1768 = vmatpush1.bf16.msra.mxu0 0
      %1769 = vmatprep.subr.bf16.mxu0 0
      %1770 = vmatpush1.bf16.msra.mxu0 0
      %1771 = vmatprep.subr.bf16.mxu0 0
      %1772 = vmatpush1.bf16.msra.mxu0 0
      %1773 = vmatprep.mubr.bf16.mxu0 0
      %1774 = vmatmul.mubr.bf16.gmra.mrb[0].mxu0 %v1580
      %v1775 = vpop.f32.mrb[0].mxu0
      %v1776 = vadd.f32 0.0, %v1775
      %v1777 = vpop.f32.mrb[0].mxu0
      %v1778 = vadd.f32 0.0, %v1777
      %v1779 = vpop.f32.mrb[0].mxu0
      %v1780 = vadd.f32 0.0, %v1779
      %v1781 = vpop.f32.mrb[0].mxu0
      %v1782 = vadd.f32 0.0, %v1781
      %1783 = vdwg.mxu0
      %1784 = vmatprep.subr.bf16.mxu0 %v1680
      %1785 = vmatpush1.bf16.msra.mxu0 %v1679
      %1786 = vmatprep.subr.bf16.mxu0 %v1684
      %1787 = vmatpush1.bf16.msra.mxu0 %v1683
      %1788 = vmatprep.subr.bf16.mxu0 %v1688
      %1789 = vmatpush1.bf16.msra.mxu0 %v1687
      %1790 = vmatprep.subr.bf16.mxu0 %v1692
      %1791 = vmatpush1.bf16.msra.mxu0 %v1691
      %1792 = vmatprep.subr.bf16.mxu0 %v1696
      %1793 = vmatpush1.bf16.msra.mxu0 %v1695
      %1794 = vmatprep.subr.bf16.mxu0 %v1700
      %1795 = vmatpush1.bf16.msra.mxu0 %v1699
      %1796 = vmatprep.subr.bf16.mxu0 %v1704
      %1797 = vmatpush1.bf16.msra.mxu0 %v1703
      %1798 = vmatprep.subr.bf16.mxu0 %v1708
      %1799 = vmatpush1.bf16.msra.mxu0 %v1707
      %1800 = vmatprep.subr.bf16.mxu0 0
      %1801 = vmatpush1.bf16.msra.mxu0 0
      %1802 = vmatprep.subr.bf16.mxu0 0
      %1803 = vmatpush1.bf16.msra.mxu0 0
      %1804 = vmatprep.subr.bf16.mxu0 0
      %1805 = vmatpush1.bf16.msra.mxu0 0
      %1806 = vmatprep.subr.bf16.mxu0 0
      %1807 = vmatpush1.bf16.msra.mxu0 0
      %1808 = vmatprep.subr.bf16.mxu0 0
      %1809 = vmatpush1.bf16.msra.mxu0 0
      %1810 = vmatprep.subr.bf16.mxu0 0
      %1811 = vmatpush1.bf16.msra.mxu0 0
      %1812 = vmatprep.subr.bf16.mxu0 0
      %1813 = vmatpush1.bf16.msra.mxu0 0
      %1814 = vmatprep.subr.bf16.mxu0 0
      %1815 = vmatpush1.bf16.msra.mxu0 0
      %1816 = vmatprep.mubr.bf16.mxu0 0
      %1817 = vmatmul.mubr.bf16.gmra.mrb[0].mxu0 %v1580
      %v1818 = vpop.f32.mrb[0].mxu0
      %v1819 = vadd.f32 0.0, %v1818
      %v1820 = vpop.f32.mrb[0].mxu0
      %v1821 = vadd.f32 0.0, %v1820
      %v1822 = vpop.f32.mrb[0].mxu0
      %v1823 = vadd.f32 0.0, %v1822
      %v1824 = vpop.f32.mrb[0].mxu0
      %v1825 = vadd.f32 0.0, %v1824
      %1826 = vdwg.mxu0
      %v1827 = vadd.f32 %v1572, %v1776
      %v1828 = vadd.f32 %v1573, %v1778
      %v1829 = vadd.f32 %v1574, %v1819
      %v1830 = vadd.f32 %v1575, %v1821
      %v1831 = vadd.f32 %v1576, %v1780
      %v1832 = vadd.f32 %v1577, %v1782
      %v1833 = vadd.f32 %v1578, %v1823
      %v1834 = vadd.f32 %v1579, %v1825
      %v1835 = vxor.u32 %v1827, 2147483648
      %v1836 = vxor.u32 %v1831, 2147483648
      %v1837 = vmul.f32 %v1835, 1.442695
      %v1838 = vpow.pop %v1837
      %v1839 = vmul.f32 %v1836, 1.442695
      %v1840 = vpow.pop %v1839
      %v1841 = vadd.f32 %v1838, 1.0
      %v1842 = vadd.f32 %v1840, 1.0
      %v1843 = vrcp.pop %v1841
      %v1844 = vmul.f32 1.0, %v1843
      %v1845 = vrcp.pop %v1842
      %v1846 = vmul.f32 1.0, %v1845
      %v1847 = vxor.u32 %v1828, 2147483648
      %v1848 = vxor.u32 %v1832, 2147483648
      %v1849 = vmul.f32 %v1847, 1.442695
      %v1850 = vpow.pop %v1849
      %v1851 = vmul.f32 %v1848, 1.442695
      %v1852 = vpow.pop %v1851
      %v1853 = vadd.f32 %v1850, 1.0
      %v1854 = vadd.f32 %v1852, 1.0
      %v1855 = vrcp.pop %v1853
      %v1856 = vmul.f32 1.0, %v1855
      %v1857 = vrcp.pop %v1854
      %v1858 = vmul.f32 1.0, %v1857
      %v1859 = vtanh.pop %v1829
      %v1860 = vtanh.pop %v1833
      %v1861 = vxor.u32 %v1830, 2147483648
      %v1862 = vxor.u32 %v1834, 2147483648
      %v1863 = vmul.f32 %v1861, 1.442695
      %v1864 = vpow.pop %v1863
      %v1865 = vmul.f32 %v1862, 1.442695
      %v1866 = vpow.pop %v1865
      %v1867 = vadd.f32 %v1864, 1.0
      %v1868 = vadd.f32 %v1866, 1.0
      %v1869 = vrcp.pop %v1867
      %v1870 = vmul.f32 1.0, %v1869
      %v1871 = vrcp.pop %v1868
      %v1872 = vmul.f32 1.0, %v1871
      %v1873 = vmul.f32 %v1856, %v1244
      %v1874 = vmul.f32 %v1858, %v1245
      %v1875 = vmul.f32 %v1844, %v1859
      %v1876 = vmul.f32 %v1846, %v1860
      %v1877 = vadd.f32 %v1873, %v1875
      %v1878 = vadd.f32 %v1874, %v1876
      %v1879 = vtanh.pop %v1877
      %v1880 = vtanh.pop %v1878
      %v1881 = vmul.f32 %v1870, %v1879
      %v1882 = vmul.f32 %v1872, %v1880
      %v1883 = vpack.c.bf16 %v1571, %v1570
      %s1884 = smul.addr %s1233, 8
      %s1885 = scalar_lea.vmem [#allocation3], %s1884
      %1886 = vst [vmem:[%s1885] sm:$0xff] %v1883
      %v1887 = vpack.c.bf16 %v1882, %v1881
      %s1888 = smul.addr %s1246, 8
      %s1889 = scalar_lea.vmem [#allocation4], %s1888
      %1890 = vst [vmem:[%s1889] sm:$0xff] %v1887
    $region70: #{tpu_custom_call.1} parent=1 // loop_footer
      %s1237 = sadd.s32 1, %s1233
    $region71: #{tpu_custom_call.1} parent=1 // loop_footer_branch
      %1232 = sbr.rel target = $region67
    $region72: #{tpu_custom_call.1} parent=1 // loop_exit
      _
    %v1891 = vld [vmem:[#allocation3] sm:$0xff]
    %v1892 = vld [vmem:[#allocation3 + $0x8] sm:$0xff]
    %v1893 = vld [vmem:[#allocation3 + $0x10] sm:$0xff]
    %v1894 = vld [vmem:[#allocation3 + $0x18] sm:$0xff]
    %v1895 = vld [vmem:[#allocation3 + $0x20] sm:$0xff]
    %v1896 = vld [vmem:[#allocation3 + $0x28] sm:$0xff]
    %v1897 = vld [vmem:[#allocation3 + $0x30] sm:$0xff]
    %v1898 = vld [vmem:[#allocation3 + $0x38] sm:$0xff]
    %v1899 = vld [vmem:[#allocation4] sm:$0xff]
    %v1900 = vld [vmem:[#allocation4 + $0x8] sm:$0xff]
    %v1901 = vld [vmem:[#allocation4 + $0x10] sm:$0xff]
    %v1902 = vld [vmem:[#allocation4 + $0x18] sm:$0xff]
    %v1903 = vld [vmem:[#allocation4 + $0x20] sm:$0xff]
    %v1904 = vld [vmem:[#allocation4 + $0x28] sm:$0xff]
    %v1905 = vld [vmem:[#allocation4 + $0x30] sm:$0xff]
    %v1906 = vld [vmem:[#allocation4 + $0x38] sm:$0xff]
    %v1907 = vld [vmem:[%s6] sm:$0xf]
    %v1908 = vld [vmem:[%s6 + $0x4] sm:$0xf]
    %v1909 = vld [vmem:[%s6 + $0x8] sm:$0xf]
    %v1910 = vld [vmem:[%s6 + $0xc] sm:$0xf]
    %v1911 = vld [vmem:[%s6 + $0x10] sm:$0xf]
    %v1912 = vld [vmem:[%s6 + $0x14] sm:$0xf]
    %v1913 = vld [vmem:[%s6 + $0x18] sm:$0xf]
    %v1914 = vld [vmem:[%s6 + $0x1c] sm:$0xf]
    %v1915 = vld [vmem:[%s6 + $0x20] sm:$0xf]
    %v1916 = vld [vmem:[%s6 + $0x24] sm:$0xf]
    %v1917 = vld [vmem:[%s6 + $0x28] sm:$0xf]
    %v1918 = vld [vmem:[%s6 + $0x2c] sm:$0xf]
    %v1919 = vld [vmem:[%s6 + $0x30] sm:$0xf]
    %v1920 = vld [vmem:[%s6 + $0x34] sm:$0xf]
    %v1921 = vld [vmem:[%s6 + $0x38] sm:$0xf]
    %v1922 = vld [vmem:[%s6 + $0x3c] sm:$0xf]
    %v1923 = vld [vmem:[#allocation13] sm:$0xf]
    %v1924 = vld [vmem:[#allocation13 + $0x4] sm:$0xf]
    %v1925 = vld [vmem:[#allocation13 + $0x8] sm:$0xf]
    %v1926 = vld [vmem:[#allocation13 + $0xc] sm:$0xf]
    %v1927 = vld [vmem:[#allocation13 + $0x10] sm:$0xf]
    %v1928 = vld [vmem:[#allocation13 + $0x14] sm:$0xf]
    %v1929 = vld [vmem:[#allocation13 + $0x18] sm:$0xf]
    %v1930 = vld [vmem:[#allocation13 + $0x1c] sm:$0xf]
    %v1931 = vld [vmem:[#allocation13 + $0x20] sm:$0xf]
    %v1932 = vld [vmem:[#allocation13 + $0x24] sm:$0xf]
    %v1933 = vld [vmem:[#allocation13 + $0x28] sm:$0xf]
    %v1934 = vld [vmem:[#allocation13 + $0x2c] sm:$0xf]
    %v1935 = vld [vmem:[#allocation13 + $0x30] sm:$0xf]
    %v1936 = vld [vmem:[#allocation13 + $0x34] sm:$0xf]
    %v1937 = vld [vmem:[#allocation13 + $0x38] sm:$0xf]
    %v1938 = vld [vmem:[#allocation13 + $0x3c] sm:$0xf]
    %v1955 = vunpack.c.l.b16 %v1923
    %v1956 = vunpack.c.l.b16 %v1924
    %v1957 = vunpack.c.l.b16 %v1925
    %v1958 = vunpack.c.l.b16 %v1926
    %v1959 = vunpack.c.l.b16 %v1927
    %v1960 = vunpack.c.l.b16 %v1928
    %v1961 = vunpack.c.l.b16 %v1929
    %v1962 = vunpack.c.l.b16 %v1930
    %v1963 = vunpack.c.l.b16 %v1931
    %v1964 = vunpack.c.l.b16 %v1932
    %v1965 = vunpack.c.l.b16 %v1933
    %v1966 = vunpack.c.l.b16 %v1934
    %v1967 = vunpack.c.l.b16 %v1935
    %v1968 = vunpack.c.l.b16 %v1936
    %v1969 = vunpack.c.l.b16 %v1937
    %v1970 = vunpack.c.l.b16 %v1938
    %v1971 = vpack.c.b16 %v1956, %v1955
    %v1972 = vpack.c.b16 %v1958, %v1957
    %v1973 = vpack.c.b16 %v1960, %v1959
    %v1974 = vpack.c.b16 %v1962, %v1961
    %v1975 = vpack.c.b16 %v1964, %v1963
    %v1976 = vpack.c.b16 %v1966, %v1965
    %v1977 = vpack.c.b16 %v1968, %v1967
    %v1978 = vpack.c.b16 %v1970, %v1969
    %1987 = vmatprep.subr.bf16.mxu0 0
    %1988 = vmatpush1.bf16.msra.mxu0 %v1971
    %1989 = vmatprep.subr.bf16.mxu0 0
    %1990 = vmatpush1.bf16.msra.mxu0 %v1972
    %1991 = vmatprep.subr.bf16.mxu0 0
    %1992 = vmatpush1.bf16.msra.mxu0 %v1973
    %1993 = vmatprep.subr.bf16.mxu0 0
    %1994 = vmatpush1.bf16.msra.mxu0 %v1974
    %1995 = vmatprep.subr.bf16.mxu0 0
    %1996 = vmatpush1.bf16.msra.mxu0 %v1975
    %1997 = vmatprep.subr.bf16.mxu0 0
    %1998 = vmatpush1.bf16.msra.mxu0 %v1976
    %1999 = vmatprep.subr.bf16.mxu0 0
    %2000 = vmatpush1.bf16.msra.mxu0 %v1977
    %2001 = vmatprep.subr.bf16.mxu0 0
    %2002 = vmatpush1.bf16.msra.mxu0 %v1978
    %2003 = vmatprep.subr.bf16.mxu0 0
    %2004 = vmatpush1.bf16.msra.mxu0 0
    %2005 = vmatprep.subr.bf16.mxu0 0
    %2006 = vmatpush1.bf16.msra.mxu0 0
    %2007 = vmatprep.subr.bf16.mxu0 0
    %2008 = vmatpush1.bf16.msra.mxu0 0
    %2009 = vmatprep.subr.bf16.mxu0 0
    %2010 = vmatpush1.bf16.msra.mxu0 0
    %2011 = vmatprep.subr.bf16.mxu0 0
    %2012 = vmatpush1.bf16.msra.mxu0 0
    %2013 = vmatprep.subr.bf16.mxu0 0
    %2014 = vmatpush1.bf16.msra.mxu0 0
    %2015 = vmatprep.subr.bf16.mxu0 0
    %2016 = vmatpush1.bf16.msra.mxu0 0
    %2017 = vmatprep.subr.bf16.mxu0 0
    %2018 = vmatpush1.bf16.msra.mxu0 0
    %2019 = vmatprep.mubr.bf16.mxu0 0
    %2020 = vmatmul.mubr.bf16.gmra.mrb[0].mxu0 %v1899
    %v2021 = vpop.f32.mrb[0].mxu0
    %v2022 = vadd.f32 0.0, %v2021
    %v2023 = vpop.f32.mrb[0].mxu0
    %v2024 = vpop.f32.mrb[0].mxu0
    %v2025 = vadd.f32 0.0, %v2024
    %v2026 = vpop.f32.mrb[0].mxu0
    %2027 = vmatprep.mubr.bf16.mxu0 0
    %2028 = vmatmul.mubr.bf16.gmra.mrb[0].mxu0 %v1900
    %v2029 = vpop.f32.mrb[0].mxu0
    %v2030 = vadd.f32 0.0, %v2029
    %v2031 = vpop.f32.mrb[0].mxu0
    %v2032 = vpop.f32.mrb[0].mxu0
    %v2033 = vadd.f32 0.0, %v2032
    %v2034 = vpop.f32.mrb[0].mxu0
    %2035 = vmatprep.mubr.bf16.mxu0 0
    %2036 = vmatmul.mubr.bf16.gmra.mrb[0].mxu0 %v1901
    %v2037 = vpop.f32.mrb[0].mxu0
    %v2038 = vadd.f32 0.0, %v2037
    %v2039 = vpop.f32.mrb[0].mxu0
    %v2040 = vpop.f32.mrb[0].mxu0
    %v2041 = vadd.f32 0.0, %v2040
    %v2042 = vpop.f32.mrb[0].mxu0
    %2043 = vmatprep.mubr.bf16.mxu0 0
    %2044 = vmatmul.mubr.bf16.gmra.mrb[0].mxu0 %v1902
    %v2045 = vpop.f32.mrb[0].mxu0
    %v2046 = vadd.f32 0.0, %v2045
    %v2047 = vpop.f32.mrb[0].mxu0
    %v2048 = vpop.f32.mrb[0].mxu0
    %v2049 = vadd.f32 0.0, %v2048
    %v2050 = vpop.f32.mrb[0].mxu0
    %2051 = vmatprep.mubr.bf16.mxu0 0
    %2052 = vmatmul.mubr.bf16.gmra.mrb[0].mxu0 %v1903
    %v2053 = vpop.f32.mrb[0].mxu0
    %v2054 = vadd.f32 0.0, %v2053
    %v2055 = vpop.f32.mrb[0].mxu0
    %v2056 = vpop.f32.mrb[0].mxu0
    %v2057 = vadd.f32 0.0, %v2056
    %v2058 = vpop.f32.mrb[0].mxu0
    %2059 = vmatprep.mubr.bf16.mxu0 0
    %2060 = vmatmul.mubr.bf16.gmra.mrb[0].mxu0 %v1904
    %v2061 = vpop.f32.mrb[0].mxu0
    %v2062 = vadd.f32 0.0, %v2061
    %v2063 = vpop.f32.mrb[0].mxu0
    %v2064 = vpop.f32.mrb[0].mxu0
    %v2065 = vadd.f32 0.0, %v2064
    %v2066 = vpop.f32.mrb[0].mxu0
    %2067 = vmatprep.mubr.bf16.mxu0 0
    %2068 = vmatmul.mubr.bf16.gmra.mrb[0].mxu0 %v1905
    %v2069 = vpop.f32.mrb[0].mxu0
    %v2070 = vadd.f32 0.0, %v2069
    %v2071 = vpop.f32.mrb[0].mxu0
    %v2072 = vpop.f32.mrb[0].mxu0
    %v2073 = vadd.f32 0.0, %v2072
    %v2074 = vpop.f32.mrb[0].mxu0
    %2075 = vmatprep.mubr.bf16.mxu0 0
    %2076 = vmatmul.mubr.bf16.gmra.mrb[0].mxu0 %v1906
    %v2077 = vpop.f32.mrb[0].mxu0
    %v2078 = vadd.f32 0.0, %v2077
    %v2079 = vpop.f32.mrb[0].mxu0
    %v2080 = vpop.f32.mrb[0].mxu0
    %v2081 = vadd.f32 0.0, %v2080
    %v2082 = vpop.f32.mrb[0].mxu0
    %2083 = vdwg.mxu0
    %v2100 = vunpack.c.l.b16 %v1907
    %v2101 = vunpack.c.l.b16 %v1908
    %v2102 = vunpack.c.l.b16 %v1909
    %v2103 = vunpack.c.l.b16 %v1910
    %v2104 = vunpack.c.l.b16 %v1911
    %v2105 = vunpack.c.l.b16 %v1912
    %v2106 = vunpack.c.l.b16 %v1913
    %v2107 = vunpack.c.l.b16 %v1914
    %v2108 = vunpack.c.l.b16 %v1915
    %v2109 = vunpack.c.l.b16 %v1916
    %v2110 = vunpack.c.l.b16 %v1917
    %v2111 = vunpack.c.l.b16 %v1918
    %v2112 = vunpack.c.l.b16 %v1919
    %v2113 = vunpack.c.l.b16 %v1920
    %v2114 = vunpack.c.l.b16 %v1921
    %v2115 = vunpack.c.l.b16 %v1922
    %v2116 = vpack.c.b16 %v2101, %v2100
    %v2117 = vpack.c.b16 %v2103, %v2102
    %v2118 = vpack.c.b16 %v2105, %v2104
    %v2119 = vpack.c.b16 %v2107, %v2106
    %v2120 = vpack.c.b16 %v2109, %v2108
    %v2121 = vpack.c.b16 %v2111, %v2110
    %v2122 = vpack.c.b16 %v2113, %v2112
    %v2123 = vpack.c.b16 %v2115, %v2114
    %2132 = vmatprep.subr.bf16.mxu0 0
    %2133 = vmatpush1.bf16.msra.mxu0 %v2116
    %2134 = vmatprep.subr.bf16.mxu0 0
    %2135 = vmatpush1.bf16.msra.mxu0 %v2117
    %2136 = vmatprep.subr.bf16.mxu0 0
    %2137 = vmatpush1.bf16.msra.mxu0 %v2118
    %2138 = vmatprep.subr.bf16.mxu0 0
    %2139 = vmatpush1.bf16.msra.mxu0 %v2119
    %2140 = vmatprep.subr.bf16.mxu0 0
    %2141 = vmatpush1.bf16.msra.mxu0 %v2120
    %2142 = vmatprep.subr.bf16.mxu0 0
    %2143 = vmatpush1.bf16.msra.mxu0 %v2121
    %2144 = vmatprep.subr.bf16.mxu0 0
    %2145 = vmatpush1.bf16.msra.mxu0 %v2122
    %2146 = vmatprep.subr.bf16.mxu0 0
    %2147 = vmatpush1.bf16.msra.mxu0 %v2123
    %2148 = vmatprep.subr.bf16.mxu0 0
    %2149 = vmatpush1.bf16.msra.mxu0 0
    %2150 = vmatprep.subr.bf16.mxu0 0
    %2151 = vmatpush1.bf16.msra.mxu0 0
    %2152 = vmatprep.subr.bf16.mxu0 0
    %2153 = vmatpush1.bf16.msra.mxu0 0
    %2154 = vmatprep.subr.bf16.mxu0 0
    %2155 = vmatpush1.bf16.msra.mxu0 0
    %2156 = vmatprep.subr.bf16.mxu0 0
    %2157 = vmatpush1.bf16.msra.mxu0 0
    %2158 = vmatprep.subr.bf16.mxu0 0
    %2159 = vmatpush1.bf16.msra.mxu0 0
    %2160 = vmatprep.subr.bf16.mxu0 0
    %2161 = vmatpush1.bf16.msra.mxu0 0
    %2162 = vmatprep.subr.bf16.mxu0 0
    %2163 = vmatpush1.bf16.msra.mxu0 0
    %2164 = vmatprep.mubr.bf16.mxu0 0
    %2165 = vmatmul.mubr.bf16.gmra.mrb[0].mxu0 %v1891
    %v2166 = vpop.f32.mrb[0].mxu0
    %v2167 = vadd.f32 %v2022, %v2166
    %v2168 = vpop.f32.mrb[0].mxu0
    %v2169 = vpop.f32.mrb[0].mxu0
    %v2170 = vadd.f32 %v2025, %v2169
    %v2171 = vpop.f32.mrb[0].mxu0
    %2172 = vmatprep.mubr.bf16.mxu0 0
    %2173 = vmatmul.mubr.bf16.gmra.mrb[0].mxu0 %v1892
    %v2174 = vpop.f32.mrb[0].mxu0
    %v2175 = vadd.f32 %v2030, %v2174
    %v2176 = vpop.f32.mrb[0].mxu0
    %v2177 = vpop.f32.mrb[0].mxu0
    %v2178 = vadd.f32 %v2033, %v2177
    %v2179 = vpop.f32.mrb[0].mxu0
    %2180 = vmatprep.mubr.bf16.mxu0 0
    %2181 = vmatmul.mubr.bf16.gmra.mrb[0].mxu0 %v1893
    %v2182 = vpop.f32.mrb[0].mxu0
    %v2183 = vadd.f32 %v2038, %v2182
    %v2184 = vpop.f32.mrb[0].mxu0
    %v2185 = vpop.f32.mrb[0].mxu0
    %v2186 = vadd.f32 %v2041, %v2185
    %v2187 = vpop.f32.mrb[0].mxu0
    %2188 = vmatprep.mubr.bf16.mxu0 0
    %2189 = vmatmul.mubr.bf16.gmra.mrb[0].mxu0 %v1894
    %v2190 = vpop.f32.mrb[0].mxu0
    %v2191 = vadd.f32 %v2046, %v2190
    %v2192 = vpop.f32.mrb[0].mxu0
    %v2193 = vpop.f32.mrb[0].mxu0
    %v2194 = vadd.f32 %v2049, %v2193
    %v2195 = vpop.f32.mrb[0].mxu0
    %2196 = vmatprep.mubr.bf16.mxu0 0
    %2197 = vmatmul.mubr.bf16.gmra.mrb[0].mxu0 %v1895
    %v2198 = vpop.f32.mrb[0].mxu0
    %v2199 = vadd.f32 %v2054, %v2198
    %v2200 = vpop.f32.mrb[0].mxu0
    %v2201 = vpop.f32.mrb[0].mxu0
    %v2202 = vadd.f32 %v2057, %v2201
    %v2203 = vpop.f32.mrb[0].mxu0
    %2204 = vmatprep.mubr.bf16.mxu0 0
    %2205 = vmatmul.mubr.bf16.gmra.mrb[0].mxu0 %v1896
    %v2206 = vpop.f32.mrb[0].mxu0
    %v2207 = vadd.f32 %v2062, %v2206
    %v2208 = vpop.f32.mrb[0].mxu0
    %v2209 = vpop.f32.mrb[0].mxu0
    %v2210 = vadd.f32 %v2065, %v2209
    %v2211 = vpop.f32.mrb[0].mxu0
    %2212 = vmatprep.mubr.bf16.mxu0 0
    %2213 = vmatmul.mubr.bf16.gmra.mrb[0].mxu0 %v1897
    %v2214 = vpop.f32.mrb[0].mxu0
    %v2215 = vadd.f32 %v2070, %v2214
    %v2216 = vpop.f32.mrb[0].mxu0
    %v2217 = vpop.f32.mrb[0].mxu0
    %v2218 = vadd.f32 %v2073, %v2217
    %v2219 = vpop.f32.mrb[0].mxu0
    %2220 = vmatprep.mubr.bf16.mxu0 0
    %2221 = vmatmul.mubr.bf16.gmra.mrb[0].mxu0 %v1898
    %v2222 = vpop.f32.mrb[0].mxu0
    %v2223 = vadd.f32 %v2078, %v2222
    %v2224 = vpop.f32.mrb[0].mxu0
    %v2225 = vpop.f32.mrb[0].mxu0
    %v2226 = vadd.f32 %v2081, %v2225
    %v2227 = vpop.f32.mrb[0].mxu0
    %2228 = vdwg.mxu0
    %v2229 = vld [vmem:[%s8] sm:$0x1]
    %v2231 = vlaneseq
    %v2232 = vshrl.u32 %v2231, 7
    %v2233 = vsub.s32 0, %v2232
    %v2234 = vrot.slane %v2229, %v2233
    %v2236 = vadd.f32 %v2167, %v2234
    %v2237 = vadd.f32 %v2170, %v2234
    %v2238 = vadd.f32 %v2175, %v2234
    %v2239 = vadd.f32 %v2178, %v2234
    %v2240 = vadd.f32 %v2183, %v2234
    %v2241 = vadd.f32 %v2186, %v2234
    %v2242 = vadd.f32 %v2191, %v2234
    %v2243 = vadd.f32 %v2194, %v2234
    %v2244 = vadd.f32 %v2199, %v2234
    %v2245 = vadd.f32 %v2202, %v2234
    %v2246 = vadd.f32 %v2207, %v2234
    %v2247 = vadd.f32 %v2210, %v2234
    %v2248 = vadd.f32 %v2215, %v2234
    %v2249 = vadd.f32 %v2218, %v2234
    %v2250 = vadd.f32 %v2223, %v2234
    %v2251 = vadd.f32 %v2226, %v2234
    %2252 = vst [vmem:[#allocation5] sm:$0xff] %v2236
    %2253 = vst [vmem:[#allocation5 + $0x8] sm:$0xff] %v2237
    %2254 = vst [vmem:[#allocation5 + $0x10] sm:$0xff] %v2238
    %2255 = vst [vmem:[#allocation5 + $0x18] sm:$0xff] %v2239
    %2256 = vst [vmem:[#allocation5 + $0x20] sm:$0xff] %v2240
    %2257 = vst [vmem:[#allocation5 + $0x28] sm:$0xff] %v2241
    %2258 = vst [vmem:[#allocation5 + $0x30] sm:$0xff] %v2242
    %2259 = vst [vmem:[#allocation5 + $0x38] sm:$0xff] %v2243
    %2260 = vst [vmem:[#allocation5 + $0x40] sm:$0xff] %v2244
    %2261 = vst [vmem:[#allocation5 + $0x48] sm:$0xff] %v2245
    %2262 = vst [vmem:[#allocation5 + $0x50] sm:$0xff] %v2246
    %2263 = vst [vmem:[#allocation5 + $0x58] sm:$0xff] %v2247
    %2264 = vst [vmem:[#allocation5 + $0x60] sm:$0xff] %v2248
    %2265 = vst [vmem:[#allocation5 + $0x68] sm:$0xff] %v2249
    %2266 = vst [vmem:[#allocation5 + $0x70] sm:$0xff] %v2250
    %2267 = vst [vmem:[#allocation5 + $0x78] sm:$0xff] %v2251
    %v2268 = vld [vmem:[%s9] sm:$0xff]
    %v2269 = vld [vmem:[%s10] sm:$0x1]
    %v2270 = vld [vmem:[#allocation5] sm:$0xff]
    %v2271 = vld [vmem:[#allocation5 + $0x8] sm:$0xff]
    %v2273 = vlaneseq
    %v2274 = vshrl.u32 %v2273, 7
    %v2275 = vsub.s32 0, %v2274
    %v2276 = vrot.slane %v2269, %v2275
    %v2278 = vadd.f32 %v2276, %v2270
    %v2279 = vadd.f32 %v2276, %v2271
    loop: start=1, step=1, limit=8
    $region73: #{tpu_custom_call.1} parent=1 // loop_pre_header
      _
    $region74: #{tpu_custom_call.1} parent=1 // loop_header
      %s2281 = sphi 1, %s2285
      %p2282 = scmp.ge.s32.totalorder %s2281, 8
      %v2286 = vphi %v2278, %v3204
      %v2287 = vphi %v2279, %v3205
    $region75: #{tpu_custom_call.1} parent=1 // loop_header_branch
      %2284 = sbr.rel (%p2282) target = $region79
    $region76: #{tpu_custom_call.1} parent=1 // loop_body
      %v2290 = vcombine.high %v2286, %v2286
      %v2292 = vunpack.c.l.s4 1966171168
      %v2293 = vunpack.c.0.s8 %v2292
      %v2294 = vlaneseq
      %v2295 = vshrl.u32 %v2294, 7
      %v2296 = vsub.s32 %v2293, %v2295
      %v2297 = vrot.slane %v2286, %v2296
      %v2299 = vunpack.c.l.s4 1966171168
      %v2300 = vunpack.c.0.s8 %v2299
      %v2301 = vlaneseq
      %v2302 = vshrl.u32 %v2301, 7
      %v2303 = vsub.s32 %v2300, %v2302
      %v2304 = vrot.slane %v2290, %v2303
      %v2305 = vcombine.high %v2297, %v2297
      %v2306 = vcombine.high %v2304, %v2304
      %v2308 = vunpack.c.l.s4 1966171168
      %v2309 = vunpack.c.0.s8 %v2308
      %v2310 = vlaneseq
      %v2311 = vshrl.u32 %v2310, 7
      %v2312 = vsub.s32 %v2309, %v2311
      %v2313 = vrot.slane %v2297, %v2312
      %v2315 = vunpack.c.l.s4 1966171168
      %v2316 = vunpack.c.0.s8 %v2315
      %v2317 = vlaneseq
      %v2318 = vshrl.u32 %v2317, 7
      %v2319 = vsub.s32 %v2316, %v2318
      %v2320 = vrot.slane %v2304, %v2319
      %v2322 = vunpack.c.l.s4 1966171168
      %v2323 = vunpack.c.0.s8 %v2322
      %v2324 = vlaneseq
      %v2325 = vshrl.u32 %v2324, 7
      %v2326 = vsub.s32 %v2323, %v2325
      %v2327 = vrot.slane %v2305, %v2326
      %v2329 = vunpack.c.l.s4 1966171168
      %v2330 = vunpack.c.0.s8 %v2329
      %v2331 = vlaneseq
      %v2332 = vshrl.u32 %v2331, 7
      %v2333 = vsub.s32 %v2330, %v2332
      %v2334 = vrot.slane %v2306, %v2333
      %v2335 = vcombine.high %v2313, %v2313
      %v2336 = vcombine.high %v2320, %v2320
      %v2337 = vcombine.high %v2327, %v2327
      %v2338 = vcombine.high %v2334, %v2334
      %v2339 = vcombine.high %v2287, %v2287
      %v2341 = vunpack.c.l.s4 1966171168
      %v2342 = vunpack.c.0.s8 %v2341
      %v2343 = vlaneseq
      %v2344 = vshrl.u32 %v2343, 7
      %v2345 = vsub.s32 %v2342, %v2344
      %v2346 = vrot.slane %v2287, %v2345
      %v2348 = vunpack.c.l.s4 1966171168
      %v2349 = vunpack.c.0.s8 %v2348
      %v2350 = vlaneseq
      %v2351 = vshrl.u32 %v2350, 7
      %v2352 = vsub.s32 %v2349, %v2351
      %v2353 = vrot.slane %v2339, %v2352
      %v2354 = vcombine.high %v2346, %v2346
      %v2355 = vcombine.high %v2353, %v2353
      %v2357 = vunpack.c.l.s4 1966171168
      %v2358 = vunpack.c.0.s8 %v2357
      %v2359 = vlaneseq
      %v2360 = vshrl.u32 %v2359, 7
      %v2361 = vsub.s32 %v2358, %v2360
      %v2362 = vrot.slane %v2346, %v2361
      %v2364 = vunpack.c.l.s4 1966171168
      %v2365 = vunpack.c.0.s8 %v2364
      %v2366 = vlaneseq
      %v2367 = vshrl.u32 %v2366, 7
      %v2368 = vsub.s32 %v2365, %v2367
      %v2369 = vrot.slane %v2353, %v2368
      %v2371 = vunpack.c.l.s4 1966171168
      %v2372 = vunpack.c.0.s8 %v2371
      %v2373 = vlaneseq
      %v2374 = vshrl.u32 %v2373, 7
      %v2375 = vsub.s32 %v2372, %v2374
      %v2376 = vrot.slane %v2354, %v2375
      %v2378 = vunpack.c.l.s4 1966171168
      %v2379 = vunpack.c.0.s8 %v2378
      %v2380 = vlaneseq
      %v2381 = vshrl.u32 %v2380, 7
      %v2382 = vsub.s32 %v2379, %v2381
      %v2383 = vrot.slane %v2355, %v2382
      %v2384 = vcombine.high %v2362, %v2362
      %v2385 = vcombine.high %v2369, %v2369
      %v2386 = vcombine.high %v2376, %v2376
      %v2387 = vcombine.high %v2383, %v2383
      %v2388 = vlaneseq
      %v2389 = vshrl.u32 %v2388, 7
      %v2390 = vsub.s32 0, %v2389
      %v2391 = vrot.slane %v2313, %v2390
      %v2392 = vlaneseq
      %v2393 = vshrl.u32 %v2392, 7
      %v2394 = vsub.s32 0, %v2393
      %v2395 = vrot.slane %v2327, %v2394
      %v2396 = vlaneseq
      %v2397 = vshrl.u32 %v2396, 7
      %v2398 = vsub.s32 0, %v2397
      %v2399 = vrot.slane %v2335, %v2398
      %v2400 = vlaneseq
      %v2401 = vshrl.u32 %v2400, 7
      %v2402 = vsub.s32 0, %v2401
      %v2403 = vrot.slane %v2337, %v2402
      %v2404 = vlaneseq
      %v2405 = vshrl.u32 %v2404, 7
      %v2406 = vsub.s32 0, %v2405
      %v2407 = vrot.slane %v2320, %v2406
      %v2408 = vlaneseq
      %v2409 = vshrl.u32 %v2408, 7
      %v2410 = vsub.s32 0, %v2409
      %v2411 = vrot.slane %v2334, %v2410
      %v2412 = vlaneseq
      %v2413 = vshrl.u32 %v2412, 7
      %v2414 = vsub.s32 0, %v2413
      %v2415 = vrot.slane %v2336, %v2414
      %v2416 = vlaneseq
      %v2417 = vshrl.u32 %v2416, 7
      %v2418 = vsub.s32 0, %v2417
      %v2419 = vrot.slane %v2338, %v2418
      %v2420 = vlaneseq
      %v2421 = vshrl.u32 %v2420, 7
      %v2422 = vsub.s32 0, %v2421
      %v2423 = vrot.slane %v2362, %v2422
      %v2424 = vlaneseq
      %v2425 = vshrl.u32 %v2424, 7
      %v2426 = vsub.s32 0, %v2425
      %v2427 = vrot.slane %v2376, %v2426
      %v2428 = vlaneseq
      %v2429 = vshrl.u32 %v2428, 7
      %v2430 = vsub.s32 0, %v2429
      %v2431 = vrot.slane %v2384, %v2430
      %v2432 = vlaneseq
      %v2433 = vshrl.u32 %v2432, 7
      %v2434 = vsub.s32 0, %v2433
      %v2435 = vrot.slane %v2386, %v2434
      %v2436 = vlaneseq
      %v2437 = vshrl.u32 %v2436, 7
      %v2438 = vsub.s32 0, %v2437
      %v2439 = vrot.slane %v2369, %v2438
      %v2440 = vlaneseq
      %v2441 = vshrl.u32 %v2440, 7
      %v2442 = vsub.s32 0, %v2441
      %v2443 = vrot.slane %v2383, %v2442
      %v2444 = vlaneseq
      %v2445 = vshrl.u32 %v2444, 7
      %v2446 = vsub.s32 0, %v2445
      %v2447 = vrot.slane %v2385, %v2446
      %v2448 = vlaneseq
      %v2449 = vshrl.u32 %v2448, 7
      %v2450 = vsub.s32 0, %v2449
      %v2451 = vrot.slane %v2387, %v2450
      %v2468 = vadd.f32 %v2391, %v2268
      %v2469 = vadd.f32 %v2395, %v2268
      %v2470 = vadd.f32 %v2399, %v2268
      %v2471 = vadd.f32 %v2403, %v2268
      %v2472 = vadd.f32 %v2407, %v2268
      %v2473 = vadd.f32 %v2411, %v2268
      %v2474 = vadd.f32 %v2415, %v2268
      %v2475 = vadd.f32 %v2419, %v2268
      %v2476 = vadd.f32 %v2423, %v2268
      %v2477 = vadd.f32 %v2427, %v2268
      %v2478 = vadd.f32 %v2431, %v2268
      %v2479 = vadd.f32 %v2435, %v2268
      %v2480 = vadd.f32 %v2439, %v2268
      %v2481 = vadd.f32 %v2443, %v2268
      %v2482 = vadd.f32 %v2447, %v2268
      %v2483 = vadd.f32 %v2451, %v2268
      %vm2484 = vcmask 64512
      %v2485 = vsel %vm2484, %v2468, -inf
      %2486 = vmax.xlane.f32.xlu0 %v2485
      %v2487 = vpop.xlane.xlu0 %2486
      %v2488 = vsel %vm2484, %v2469, -inf
      %2489 = vmax.xlane.f32.xlu0 %v2488
      %v2490 = vpop.xlane.xlu0 %2489
      %v2491 = vsel %vm2484, %v2470, -inf
      %2492 = vmax.xlane.f32.xlu0 %v2491
      %v2493 = vpop.xlane.xlu0 %2492
      %v2494 = vsel %vm2484, %v2471, -inf
      %2495 = vmax.xlane.f32.xlu0 %v2494
      %v2496 = vpop.xlane.xlu0 %2495
      %v2497 = vsel %vm2484, %v2472, -inf
      %2498 = vmax.xlane.f32.xlu0 %v2497
      %v2499 = vpop.xlane.xlu0 %2498
      %v2500 = vsel %vm2484, %v2473, -inf
      %2501 = vmax.xlane.f32.xlu0 %v2500
      %v2502 = vpop.xlane.xlu0 %2501
      %v2503 = vsel %vm2484, %v2474, -inf
      %2504 = vmax.xlane.f32.xlu0 %v2503
      %v2505 = vpop.xlane.xlu0 %2504
      %v2506 = vsel %vm2484, %v2475, -inf
      %2507 = vmax.xlane.f32.xlu0 %v2506
      %v2508 = vpop.xlane.xlu0 %2507
      %v2509 = vsel %vm2484, %v2476, -inf
      %2510 = vmax.xlane.f32.xlu0 %v2509
      %v2511 = vpop.xlane.xlu0 %2510
      %v2512 = vsel %vm2484, %v2477, -inf
      %2513 = vmax.xlane.f32.xlu0 %v2512
      %v2514 = vpop.xlane.xlu0 %2513
      %v2515 = vsel %vm2484, %v2478, -inf
      %2516 = vmax.xlane.f32.xlu0 %v2515
      %v2517 = vpop.xlane.xlu0 %2516
      %v2518 = vsel %vm2484, %v2479, -inf
      %2519 = vmax.xlane.f32.xlu0 %v2518
      %v2520 = vpop.xlane.xlu0 %2519
      %v2521 = vsel %vm2484, %v2480, -inf
      %2522 = vmax.xlane.f32.xlu0 %v2521
      %v2523 = vpop.xlane.xlu0 %2522
      %v2524 = vsel %vm2484, %v2481, -inf
      %2525 = vmax.xlane.f32.xlu0 %v2524
      %v2526 = vpop.xlane.xlu0 %2525
      %v2527 = vsel %vm2484, %v2482, -inf
      %2528 = vmax.xlane.f32.xlu0 %v2527
      %v2529 = vpop.xlane.xlu0 %2528
      %v2530 = vsel %vm2484, %v2483, -inf
      %2531 = vmax.xlane.f32.xlu0 %v2530
      %v2532 = vpop.xlane.xlu0 %2531
      %v2533 = vlaneseq
      %v2534 = vand.u32 %v2533, 127
      %vm2535 = vcmp.eq.f32.partialorder %v2468, %v2487
      %vm2536 = vcmp.eq.f32.partialorder %v2469, %v2490
      %vm2537 = vcmp.eq.f32.partialorder %v2470, %v2493
      %vm2538 = vcmp.eq.f32.partialorder %v2471, %v2496
      %vm2539 = vcmp.eq.f32.partialorder %v2472, %v2499
      %vm2540 = vcmp.eq.f32.partialorder %v2473, %v2502
      %vm2541 = vcmp.eq.f32.partialorder %v2474, %v2505
      %vm2542 = vcmp.eq.f32.partialorder %v2475, %v2508
      %vm2543 = vcmp.eq.f32.partialorder %v2476, %v2511
      %vm2544 = vcmp.eq.f32.partialorder %v2477, %v2514
      %vm2545 = vcmp.eq.f32.partialorder %v2478, %v2517
      %vm2546 = vcmp.eq.f32.partialorder %v2479, %v2520
      %vm2547 = vcmp.eq.f32.partialorder %v2480, %v2523
      %vm2548 = vcmp.eq.f32.partialorder %v2481, %v2526
      %vm2549 = vcmp.eq.f32.partialorder %v2482, %v2529
      %vm2550 = vcmp.eq.f32.partialorder %v2483, %v2532
      %v2551 = vsel %vm2535, %v2534, 8
      %v2552 = vsel %vm2536, %v2534, 8
      %v2553 = vsel %vm2537, %v2534, 8
      %v2554 = vsel %vm2538, %v2534, 8
      %v2555 = vsel %vm2539, %v2534, 8
      %v2556 = vsel %vm2540, %v2534, 8
      %v2557 = vsel %vm2541, %v2534, 8
      %v2558 = vsel %vm2542, %v2534, 8
      %v2559 = vsel %vm2543, %v2534, 8
      %v2560 = vsel %vm2544, %v2534, 8
      %v2561 = vsel %vm2545, %v2534, 8
      %v2562 = vsel %vm2546, %v2534, 8
      %v2563 = vsel %vm2547, %v2534, 8
      %v2564 = vsel %vm2548, %v2534, 8
      %v2565 = vsel %vm2549, %v2534, 8
      %v2566 = vsel %vm2550, %v2534, 8
      %v2567 = vsel %vm2484, %v2551, 2147483647
      %v2568 = vand.u32 %v2567, 65535
      %v2569 = vshra.s32 %v2567, 16
      %v2570 = vcvt.s32.f32 %v2568
      %v2571 = vcvt.s32.f32 %v2569
      %2572 = vmin.xlane.f32.xlu0 %v2571
      %v2573 = vpop.xlane.xlu0 %2572
      %vm2574 = vcmp.eq.f32.partialorder %v2571, %v2573
      %v2575 = vsel %vm2574, %v2570, inf
      %2576 = vmin.xlane.f32.xlu0 %v2575
      %v2577 = vpop.xlane.xlu0 %2576
      %v2578 = vcvt.f32.s32 %v2577
      %v2579 = vcvt.f32.s32 %v2573
      %v2580 = vshll.u32 %v2579, 16
      %v2581 = vadd.s32 %v2580, %v2578
      %v2582 = vsel %vm2484, %v2552, 2147483647
      %v2583 = vand.u32 %v2582, 65535
      %v2584 = vshra.s32 %v2582, 16
      %v2585 = vcvt.s32.f32 %v2583
      %v2586 = vcvt.s32.f32 %v2584
      %2587 = vmin.xlane.f32.xlu0 %v2586
      %v2588 = vpop.xlane.xlu0 %2587
      %vm2589 = vcmp.eq.f32.partialorder %v2586, %v2588
      %v2590 = vsel %vm2589, %v2585, inf
      %2591 = vmin.xlane.f32.xlu0 %v2590
      %v2592 = vpop.xlane.xlu0 %2591
      %v2593 = vcvt.f32.s32 %v2592
      %v2594 = vcvt.f32.s32 %v2588
      %v2595 = vshll.u32 %v2594, 16
      %v2596 = vadd.s32 %v2595, %v2593
      %v2597 = vsel %vm2484, %v2553, 2147483647
      %v2598 = vand.u32 %v2597, 65535
      %v2599 = vshra.s32 %v2597, 16
      %v2600 = vcvt.s32.f32 %v2598
      %v2601 = vcvt.s32.f32 %v2599
      %2602 = vmin.xlane.f32.xlu0 %v2601
      %v2603 = vpop.xlane.xlu0 %2602
      %vm2604 = vcmp.eq.f32.partialorder %v2601, %v2603
      %v2605 = vsel %vm2604, %v2600, inf
      %2606 = vmin.xlane.f32.xlu0 %v2605
      %v2607 = vpop.xlane.xlu0 %2606
      %v2608 = vcvt.f32.s32 %v2607
      %v2609 = vcvt.f32.s32 %v2603
      %v2610 = vshll.u32 %v2609, 16
      %v2611 = vadd.s32 %v2610, %v2608
      %v2612 = vsel %vm2484, %v2554, 2147483647
      %v2613 = vand.u32 %v2612, 65535
      %v2614 = vshra.s32 %v2612, 16
      %v2615 = vcvt.s32.f32 %v2613
      %v2616 = vcvt.s32.f32 %v2614
      %2617 = vmin.xlane.f32.xlu0 %v2616
      %v2618 = vpop.xlane.xlu0 %2617
      %vm2619 = vcmp.eq.f32.partialorder %v2616, %v2618
      %v2620 = vsel %vm2619, %v2615, inf
      %2621 = vmin.xlane.f32.xlu0 %v2620
      %v2622 = vpop.xlane.xlu0 %2621
      %v2623 = vcvt.f32.s32 %v2622
      %v2624 = vcvt.f32.s32 %v2618
      %v2625 = vshll.u32 %v2624, 16
      %v2626 = vadd.s32 %v2625, %v2623
      %v2627 = vsel %vm2484, %v2555, 2147483647
      %v2628 = vand.u32 %v2627, 65535
      %v2629 = vshra.s32 %v2627, 16
      %v2630 = vcvt.s32.f32 %v2628
      %v2631 = vcvt.s32.f32 %v2629
      %2632 = vmin.xlane.f32.xlu0 %v2631
      %v2633 = vpop.xlane.xlu0 %2632
      %vm2634 = vcmp.eq.f32.partialorder %v2631, %v2633
      %v2635 = vsel %vm2634, %v2630, inf
      %2636 = vmin.xlane.f32.xlu0 %v2635
      %v2637 = vpop.xlane.xlu0 %2636
      %v2638 = vcvt.f32.s32 %v2637
      %v2639 = vcvt.f32.s32 %v2633
      %v2640 = vshll.u32 %v2639, 16
      %v2641 = vadd.s32 %v2640, %v2638
      %v2642 = vsel %vm2484, %v2556, 2147483647
      %v2643 = vand.u32 %v2642, 65535
      %v2644 = vshra.s32 %v2642, 16
      %v2645 = vcvt.s32.f32 %v2643
      %v2646 = vcvt.s32.f32 %v2644
      %2647 = vmin.xlane.f32.xlu0 %v2646
      %v2648 = vpop.xlane.xlu0 %2647
      %vm2649 = vcmp.eq.f32.partialorder %v2646, %v2648
      %v2650 = vsel %vm2649, %v2645, inf
      %2651 = vmin.xlane.f32.xlu0 %v2650
      %v2652 = vpop.xlane.xlu0 %2651
      %v2653 = vcvt.f32.s32 %v2652
      %v2654 = vcvt.f32.s32 %v2648
      %v2655 = vshll.u32 %v2654, 16
      %v2656 = vadd.s32 %v2655, %v2653
      %v2657 = vsel %vm2484, %v2557, 2147483647
      %v2658 = vand.u32 %v2657, 65535
      %v2659 = vshra.s32 %v2657, 16
      %v2660 = vcvt.s32.f32 %v2658
      %v2661 = vcvt.s32.f32 %v2659
      %2662 = vmin.xlane.f32.xlu0 %v2661
      %v2663 = vpop.xlane.xlu0 %2662
      %vm2664 = vcmp.eq.f32.partialorder %v2661, %v2663
      %v2665 = vsel %vm2664, %v2660, inf
      %2666 = vmin.xlane.f32.xlu0 %v2665
      %v2667 = vpop.xlane.xlu0 %2666
      %v2668 = vcvt.f32.s32 %v2667
      %v2669 = vcvt.f32.s32 %v2663
      %v2670 = vshll.u32 %v2669, 16
      %v2671 = vadd.s32 %v2670, %v2668
      %v2672 = vsel %vm2484, %v2558, 2147483647
      %v2673 = vand.u32 %v2672, 65535
      %v2674 = vshra.s32 %v2672, 16
      %v2675 = vcvt.s32.f32 %v2673
      %v2676 = vcvt.s32.f32 %v2674
      %2677 = vmin.xlane.f32.xlu0 %v2676
      %v2678 = vpop.xlane.xlu0 %2677
      %vm2679 = vcmp.eq.f32.partialorder %v2676, %v2678
      %v2680 = vsel %vm2679, %v2675, inf
      %2681 = vmin.xlane.f32.xlu0 %v2680
      %v2682 = vpop.xlane.xlu0 %2681
      %v2683 = vcvt.f32.s32 %v2682
      %v2684 = vcvt.f32.s32 %v2678
      %v2685 = vshll.u32 %v2684, 16
      %v2686 = vadd.s32 %v2685, %v2683
      %v2687 = vsel %vm2484, %v2559, 2147483647
      %v2688 = vand.u32 %v2687, 65535
      %v2689 = vshra.s32 %v2687, 16
      %v2690 = vcvt.s32.f32 %v2688
      %v2691 = vcvt.s32.f32 %v2689
      %2692 = vmin.xlane.f32.xlu0 %v2691
      %v2693 = vpop.xlane.xlu0 %2692
      %vm2694 = vcmp.eq.f32.partialorder %v2691, %v2693
      %v2695 = vsel %vm2694, %v2690, inf
      %2696 = vmin.xlane.f32.xlu0 %v2695
      %v2697 = vpop.xlane.xlu0 %2696
      %v2698 = vcvt.f32.s32 %v2697
      %v2699 = vcvt.f32.s32 %v2693
      %v2700 = vshll.u32 %v2699, 16
      %v2701 = vadd.s32 %v2700, %v2698
      %v2702 = vsel %vm2484, %v2560, 2147483647
      %v2703 = vand.u32 %v2702, 65535
      %v2704 = vshra.s32 %v2702, 16
      %v2705 = vcvt.s32.f32 %v2703
      %v2706 = vcvt.s32.f32 %v2704
      %2707 = vmin.xlane.f32.xlu0 %v2706
      %v2708 = vpop.xlane.xlu0 %2707
      %vm2709 = vcmp.eq.f32.partialorder %v2706, %v2708
      %v2710 = vsel %vm2709, %v2705, inf
      %2711 = vmin.xlane.f32.xlu0 %v2710
      %v2712 = vpop.xlane.xlu0 %2711
      %v2713 = vcvt.f32.s32 %v2712
      %v2714 = vcvt.f32.s32 %v2708
      %v2715 = vshll.u32 %v2714, 16
      %v2716 = vadd.s32 %v2715, %v2713
      %v2717 = vsel %vm2484, %v2561, 2147483647
      %v2718 = vand.u32 %v2717, 65535
      %v2719 = vshra.s32 %v2717, 16
      %v2720 = vcvt.s32.f32 %v2718
      %v2721 = vcvt.s32.f32 %v2719
      %2722 = vmin.xlane.f32.xlu0 %v2721
      %v2723 = vpop.xlane.xlu0 %2722
      %vm2724 = vcmp.eq.f32.partialorder %v2721, %v2723
      %v2725 = vsel %vm2724, %v2720, inf
      %2726 = vmin.xlane.f32.xlu0 %v2725
      %v2727 = vpop.xlane.xlu0 %2726
      %v2728 = vcvt.f32.s32 %v2727
      %v2729 = vcvt.f32.s32 %v2723
      %v2730 = vshll.u32 %v2729, 16
      %v2731 = vadd.s32 %v2730, %v2728
      %v2732 = vsel %vm2484, %v2562, 2147483647
      %v2733 = vand.u32 %v2732, 65535
      %v2734 = vshra.s32 %v2732, 16
      %v2735 = vcvt.s32.f32 %v2733
      %v2736 = vcvt.s32.f32 %v2734
      %2737 = vmin.xlane.f32.xlu0 %v2736
      %v2738 = vpop.xlane.xlu0 %2737
      %vm2739 = vcmp.eq.f32.partialorder %v2736, %v2738
      %v2740 = vsel %vm2739, %v2735, inf
      %2741 = vmin.xlane.f32.xlu0 %v2740
      %v2742 = vpop.xlane.xlu0 %2741
      %v2743 = vcvt.f32.s32 %v2742
      %v2744 = vcvt.f32.s32 %v2738
      %v2745 = vshll.u32 %v2744, 16
      %v2746 = vadd.s32 %v2745, %v2743
      %v2747 = vsel %vm2484, %v2563, 2147483647
      %v2748 = vand.u32 %v2747, 65535
      %v2749 = vshra.s32 %v2747, 16
      %v2750 = vcvt.s32.f32 %v2748
      %v2751 = vcvt.s32.f32 %v2749
      %2752 = vmin.xlane.f32.xlu0 %v2751
      %v2753 = vpop.xlane.xlu0 %2752
      %vm2754 = vcmp.eq.f32.partialorder %v2751, %v2753
      %v2755 = vsel %vm2754, %v2750, inf
      %2756 = vmin.xlane.f32.xlu0 %v2755
      %v2757 = vpop.xlane.xlu0 %2756
      %v2758 = vcvt.f32.s32 %v2757
      %v2759 = vcvt.f32.s32 %v2753
      %v2760 = vshll.u32 %v2759, 16
      %v2761 = vadd.s32 %v2760, %v2758
      %v2762 = vsel %vm2484, %v2564, 2147483647
      %v2763 = vand.u32 %v2762, 65535
      %v2764 = vshra.s32 %v2762, 16
      %v2765 = vcvt.s32.f32 %v2763
      %v2766 = vcvt.s32.f32 %v2764
      %2767 = vmin.xlane.f32.xlu0 %v2766
      %v2768 = vpop.xlane.xlu0 %2767
      %vm2769 = vcmp.eq.f32.partialorder %v2766, %v2768
      %v2770 = vsel %vm2769, %v2765, inf
      %2771 = vmin.xlane.f32.xlu0 %v2770
      %v2772 = vpop.xlane.xlu0 %2771
      %v2773 = vcvt.f32.s32 %v2772
      %v2774 = vcvt.f32.s32 %v2768
      %v2775 = vshll.u32 %v2774, 16
      %v2776 = vadd.s32 %v2775, %v2773
      %v2777 = vsel %vm2484, %v2565, 2147483647
      %v2778 = vand.u32 %v2777, 65535
      %v2779 = vshra.s32 %v2777, 16
      %v2780 = vcvt.s32.f32 %v2778
      %v2781 = vcvt.s32.f32 %v2779
      %2782 = vmin.xlane.f32.xlu0 %v2781
      %v2783 = vpop.xlane.xlu0 %2782
      %vm2784 = vcmp.eq.f32.partialorder %v2781, %v2783
      %v2785 = vsel %vm2784, %v2780, inf
      %2786 = vmin.xlane.f32.xlu0 %v2785
      %v2787 = vpop.xlane.xlu0 %2786
      %v2788 = vcvt.f32.s32 %v2787
      %v2789 = vcvt.f32.s32 %v2783
      %v2790 = vshll.u32 %v2789, 16
      %v2791 = vadd.s32 %v2790, %v2788
      %v2792 = vsel %vm2484, %v2566, 2147483647
      %v2793 = vand.u32 %v2792, 65535
      %v2794 = vshra.s32 %v2792, 16
      %v2795 = vcvt.s32.f32 %v2793
      %v2796 = vcvt.s32.f32 %v2794
      %2797 = vmin.xlane.f32.xlu0 %v2796
      %v2798 = vpop.xlane.xlu0 %2797
      %vm2799 = vcmp.eq.f32.partialorder %v2796, %v2798
      %v2800 = vsel %vm2799, %v2795, inf
      %2801 = vmin.xlane.f32.xlu0 %v2800
      %v2802 = vpop.xlane.xlu0 %2801
      %v2803 = vcvt.f32.s32 %v2802
      %v2804 = vcvt.f32.s32 %v2798
      %v2805 = vshll.u32 %v2804, 16
      %v2806 = vadd.s32 %v2805, %v2803
      %v2807 = vlaneseq
      %v2808 = vshrl.u32 %v2807, 7
      %v2809 = vsub.s32 %v2534, %v2808
      %v2810 = vrot.slane %v2581, %v2809
      %v2811 = vlaneseq
      %v2812 = vshrl.u32 %v2811, 7
      %v2813 = vsub.s32 %v2534, %v2812
      %v2814 = vrot.slane %v2596, %v2813
      %v2815 = vlaneseq
      %v2816 = vshrl.u32 %v2815, 7
      %v2817 = vsub.s32 %v2534, %v2816
      %v2818 = vrot.slane %v2611, %v2817
      %v2819 = vlaneseq
      %v2820 = vshrl.u32 %v2819, 7
      %v2821 = vsub.s32 %v2534, %v2820
      %v2822 = vrot.slane %v2626, %v2821
      %v2823 = vlaneseq
      %v2824 = vshrl.u32 %v2823, 7
      %v2825 = vsub.s32 %v2534, %v2824
      %v2826 = vrot.slane %v2641, %v2825
      %v2827 = vlaneseq
      %v2828 = vshrl.u32 %v2827, 7
      %v2829 = vsub.s32 %v2534, %v2828
      %v2830 = vrot.slane %v2656, %v2829
      %v2831 = vlaneseq
      %v2832 = vshrl.u32 %v2831, 7
      %v2833 = vsub.s32 %v2534, %v2832
      %v2834 = vrot.slane %v2671, %v2833
      %v2835 = vlaneseq
      %v2836 = vshrl.u32 %v2835, 7
      %v2837 = vsub.s32 %v2534, %v2836
      %v2838 = vrot.slane %v2686, %v2837
      %v2839 = vlaneseq
      %v2840 = vshrl.u32 %v2839, 7
      %v2841 = vsub.s32 %v2534, %v2840
      %v2842 = vrot.slane %v2701, %v2841
      %v2843 = vlaneseq
      %v2844 = vshrl.u32 %v2843, 7
      %v2845 = vsub.s32 %v2534, %v2844
      %v2846 = vrot.slane %v2716, %v2845
      %v2847 = vlaneseq
      %v2848 = vshrl.u32 %v2847, 7
      %v2849 = vsub.s32 %v2534, %v2848
      %v2850 = vrot.slane %v2731, %v2849
      %v2851 = vlaneseq
      %v2852 = vshrl.u32 %v2851, 7
      %v2853 = vsub.s32 %v2534, %v2852
      %v2854 = vrot.slane %v2746, %v2853
      %v2855 = vlaneseq
      %v2856 = vshrl.u32 %v2855, 7
      %v2857 = vsub.s32 %v2534, %v2856
      %v2858 = vrot.slane %v2761, %v2857
      %v2859 = vlaneseq
      %v2860 = vshrl.u32 %v2859, 7
      %v2861 = vsub.s32 %v2534, %v2860
      %v2862 = vrot.slane %v2776, %v2861
      %v2863 = vlaneseq
      %v2864 = vshrl.u32 %v2863, 7
      %v2865 = vsub.s32 %v2534, %v2864
      %v2866 = vrot.slane %v2791, %v2865
      %v2867 = vlaneseq
      %v2868 = vshrl.u32 %v2867, 7
      %v2869 = vsub.s32 %v2534, %v2868
      %v2870 = vrot.slane %v2806, %v2869
      %vm2871 = vcmask 1041409
      %v2872 = vsel %vm2871, %v2814, %v2810
      %vm2873 = vcmask 1042434
      %v2874 = vsel %vm2873, %v2818, %v2872
      %vm2875 = vcmask 1043459
      %v2876 = vsel %vm2875, %v2822, %v2874
      %vm2877 = vcmask 1044484
      %v2878 = vsel %vm2877, %v2826, %v2876
      %vm2879 = vcmask 1045509
      %v2880 = vsel %vm2879, %v2830, %v2878
      %vm2881 = vcmask 1046534
      %v2882 = vsel %vm2881, %v2834, %v2880
      %vm2883 = vcmask 1047559
      %v2884 = vsel %vm2883, %v2838, %v2882
      %v2885 = vsel %vm2871, %v2846, %v2842
      %v2886 = vsel %vm2873, %v2850, %v2885
      %v2887 = vsel %vm2875, %v2854, %v2886
      %v2888 = vsel %vm2877, %v2858, %v2887
      %v2889 = vsel %vm2879, %v2862, %v2888
      %v2890 = vsel %vm2881, %v2866, %v2889
      %v2891 = vsel %vm2883, %v2870, %v2890
      %s2892 = smul.u32 %s2281, 16
      %s2893 = scalar_lea.vmem [#allocation6], %s2892
      %2894 = vst.msk [vmem:[%s2893] sm:$0xff] %vm2484, %v2884
      %2895 = vst.msk [vmem:[%s2893 + $0x8] sm:$0xff] %vm2484, %v2891
      %s2896 = scalar_lea.vmem [#allocation5], %s2892
      %v2897 = vld [vmem:[%s2896] sm:$0xff]
      %v2898 = vld [vmem:[%s2896 + $0x8] sm:$0xff]
      %v2901 = vlaneseq
      %v2902 = vshrl.u32 %v2901, 7
      %v2903 = vsub.s32 0, %v2902
      %v2904 = vrot.slane %v2897, %v2903
      %2906 = vbcast.lane.b32.xlu0 %v2904, 256
      %v2907 = vpop.permute.xlu0 %2906
      %v2908 = vlaneseq
      %v2909 = vshrl.u32 %v2908, 7
      %v2910 = vsub.s32 1, %v2909
      %v2911 = vrot.slane %v2897, %v2910
      %2913 = vbcast.lane.b32.xlu0 %v2911, 256
      %v2914 = vpop.permute.xlu0 %2913
      %v2915 = vlaneseq
      %v2916 = vshrl.u32 %v2915, 7
      %v2917 = vsub.s32 2, %v2916
      %v2918 = vrot.slane %v2897, %v2917
      %2920 = vbcast.lane.b32.xlu0 %v2918, 256
      %v2921 = vpop.permute.xlu0 %2920
      %v2922 = vlaneseq
      %v2923 = vshrl.u32 %v2922, 7
      %v2924 = vsub.s32 3, %v2923
      %v2925 = vrot.slane %v2897, %v2924
      %2927 = vbcast.lane.b32.xlu0 %v2925, 256
      %v2928 = vpop.permute.xlu0 %2927
      %v2929 = vlaneseq
      %v2930 = vshrl.u32 %v2929, 7
      %v2931 = vsub.s32 4, %v2930
      %v2932 = vrot.slane %v2897, %v2931
      %2934 = vbcast.lane.b32.xlu0 %v2932, 256
      %v2935 = vpop.permute.xlu0 %2934
      %v2936 = vlaneseq
      %v2937 = vshrl.u32 %v2936, 7
      %v2938 = vsub.s32 5, %v2937
      %v2939 = vrot.slane %v2897, %v2938
      %2941 = vbcast.lane.b32.xlu0 %v2939, 256
      %v2942 = vpop.permute.xlu0 %2941
      %v2943 = vlaneseq
      %v2944 = vshrl.u32 %v2943, 7
      %v2945 = vsub.s32 6, %v2944
      %v2946 = vrot.slane %v2897, %v2945
      %2948 = vbcast.lane.b32.xlu0 %v2946, 256
      %v2949 = vpop.permute.xlu0 %2948
      %v2950 = vlaneseq
      %v2951 = vshrl.u32 %v2950, 7
      %v2952 = vsub.s32 7, %v2951
      %v2953 = vrot.slane %v2897, %v2952
      %2955 = vbcast.lane.b32.xlu0 %v2953, 256
      %v2956 = vpop.permute.xlu0 %2955
      %v2957 = vlaneseq
      %v2958 = vshrl.u32 %v2957, 7
      %v2959 = vsub.s32 0, %v2958
      %v2960 = vrot.slane %v2898, %v2959
      %2962 = vbcast.lane.b32.xlu0 %v2960, 256
      %v2963 = vpop.permute.xlu0 %2962
      %v2964 = vlaneseq
      %v2965 = vshrl.u32 %v2964, 7
      %v2966 = vsub.s32 1, %v2965
      %v2967 = vrot.slane %v2898, %v2966
      %2969 = vbcast.lane.b32.xlu0 %v2967, 256
      %v2970 = vpop.permute.xlu0 %2969
      %v2971 = vlaneseq
      %v2972 = vshrl.u32 %v2971, 7
      %v2973 = vsub.s32 2, %v2972
      %v2974 = vrot.slane %v2898, %v2973
      %2976 = vbcast.lane.b32.xlu0 %v2974, 256
      %v2977 = vpop.permute.xlu0 %2976
      %v2978 = vlaneseq
      %v2979 = vshrl.u32 %v2978, 7
      %v2980 = vsub.s32 3, %v2979
      %v2981 = vrot.slane %v2898, %v2980
      %2983 = vbcast.lane.b32.xlu0 %v2981, 256
      %v2984 = vpop.permute.xlu0 %2983
      %v2985 = vlaneseq
      %v2986 = vshrl.u32 %v2985, 7
      %v2987 = vsub.s32 4, %v2986
      %v2988 = vrot.slane %v2898, %v2987
      %2990 = vbcast.lane.b32.xlu0 %v2988, 256
      %v2991 = vpop.permute.xlu0 %2990
      %v2992 = vlaneseq
      %v2993 = vshrl.u32 %v2992, 7
      %v2994 = vsub.s32 5, %v2993
      %v2995 = vrot.slane %v2898, %v2994
      %2997 = vbcast.lane.b32.xlu0 %v2995, 256
      %v2998 = vpop.permute.xlu0 %2997
      %v2999 = vlaneseq
      %v3000 = vshrl.u32 %v2999, 7
      %v3001 = vsub.s32 6, %v3000
      %v3002 = vrot.slane %v2898, %v3001
      %3004 = vbcast.lane.b32.xlu0 %v3002, 256
      %v3005 = vpop.permute.xlu0 %3004
      %v3006 = vlaneseq
      %v3007 = vshrl.u32 %v3006, 7
      %v3008 = vsub.s32 7, %v3007
      %v3009 = vrot.slane %v2898, %v3008
      %3011 = vbcast.lane.b32.xlu0 %v3009, 256
      %v3012 = vpop.permute.xlu0 %3011
      %v3029 = vadd.f32 %v2487, %v2907
      %v3030 = vadd.f32 %v2490, %v2914
      %v3031 = vadd.f32 %v2493, %v2921
      %v3032 = vadd.f32 %v2496, %v2928
      %v3033 = vadd.f32 %v2499, %v2935
      %v3034 = vadd.f32 %v2502, %v2942
      %v3035 = vadd.f32 %v2505, %v2949
      %v3036 = vadd.f32 %v2508, %v2956
      %v3037 = vadd.f32 %v2511, %v2963
      %v3038 = vadd.f32 %v2514, %v2970
      %v3039 = vadd.f32 %v2517, %v2977
      %v3040 = vadd.f32 %v2520, %v2984
      %v3041 = vadd.f32 %v2523, %v2991
      %v3042 = vadd.f32 %v2526, %v2998
      %v3043 = vadd.f32 %v2529, %v3005
      %v3044 = vadd.f32 %v2532, %v3012
      %s3045 = scalar_lea.vmem %s1, %s2892
      %v3046 = vld [vmem:[%s3045] sm:$0xff]
      %v3047 = vld [vmem:[%s3045 + $0x8] sm:$0xff]
      %vm3048 = vcmp.gt.f32.partialorder %v3046, 0.0
      %vm3049 = vcmp.gt.f32.partialorder %v3047, 0.0
      %v3050 = vsel %vm3048, 1, 0
      %v3051 = vsel %vm3049, 1, 0
      %3052 = vset.pattern.permute.xlu0 0
      %3053 = vperm.xlu0 %3052, %v3050
      %v3054 = vpop.permute.xlu0 %3053
      %3055 = vset.pattern.permute.xlu0 0
      %3056 = vperm.xlu0 %3055, %v3051
      %v3057 = vpop.permute.xlu0 %3056
      %vm3058 = vcmp.eq.s32.totalorder %v3054, 1
      %vm3059 = vcmp.eq.s32.totalorder %v3057, 1
      %3076 = vset.pattern.permute.xlu0 0
      %3077 = vperm.xlu0 %3076, %v3029
      %v3078 = vpop.permute.xlu0 %3077
      %3079 = vset.pattern.permute.xlu0 0
      %3080 = vperm.xlu0 %3079, %v3030
      %v3081 = vpop.permute.xlu0 %3080
      %3082 = vset.pattern.permute.xlu0 0
      %3083 = vperm.xlu0 %3082, %v3031
      %v3084 = vpop.permute.xlu0 %3083
      %3085 = vset.pattern.permute.xlu0 0
      %3086 = vperm.xlu0 %3085, %v3032
      %v3087 = vpop.permute.xlu0 %3086
      %3088 = vset.pattern.permute.xlu0 0
      %3089 = vperm.xlu0 %3088, %v3033
      %v3090 = vpop.permute.xlu0 %3089
      %3091 = vset.pattern.permute.xlu0 0
      %3092 = vperm.xlu0 %3091, %v3034
      %v3093 = vpop.permute.xlu0 %3092
      %3094 = vset.pattern.permute.xlu0 0
      %3095 = vperm.xlu0 %3094, %v3035
      %v3096 = vpop.permute.xlu0 %3095
      %3097 = vset.pattern.permute.xlu0 0
      %3098 = vperm.xlu0 %3097, %v3036
      %v3099 = vpop.permute.xlu0 %3098
      %3100 = vset.pattern.permute.xlu0 0
      %3101 = vperm.xlu0 %3100, %v3037
      %v3102 = vpop.permute.xlu0 %3101
      %3103 = vset.pattern.permute.xlu0 0
      %3104 = vperm.xlu0 %3103, %v3038
      %v3105 = vpop.permute.xlu0 %3104
      %3106 = vset.pattern.permute.xlu0 0
      %3107 = vperm.xlu0 %3106, %v3039
      %v3108 = vpop.permute.xlu0 %3107
      %3109 = vset.pattern.permute.xlu0 0
      %3110 = vperm.xlu0 %3109, %v3040
      %v3111 = vpop.permute.xlu0 %3110
      %3112 = vset.pattern.permute.xlu0 0
      %3113 = vperm.xlu0 %3112, %v3041
      %v3114 = vpop.permute.xlu0 %3113
      %3115 = vset.pattern.permute.xlu0 0
      %3116 = vperm.xlu0 %3115, %v3042
      %v3117 = vpop.permute.xlu0 %3116
      %3118 = vset.pattern.permute.xlu0 0
      %3119 = vperm.xlu0 %3118, %v3043
      %v3120 = vpop.permute.xlu0 %3119
      %3121 = vset.pattern.permute.xlu0 0
      %3122 = vperm.xlu0 %3121, %v3044
      %v3123 = vpop.permute.xlu0 %3122
      %v3124 = vlaneseq
      %v3125 = vshrl.u32 %v3124, 7
      %v3126 = vsub.s32 %v2534, %v3125
      %v3127 = vrot.slane %v3078, %v3126
      %v3128 = vlaneseq
      %v3129 = vshrl.u32 %v3128, 7
      %v3130 = vsub.s32 %v2534, %v3129
      %v3131 = vrot.slane %v3081, %v3130
      %v3132 = vlaneseq
      %v3133 = vshrl.u32 %v3132, 7
      %v3134 = vsub.s32 %v2534, %v3133
      %v3135 = vrot.slane %v3084, %v3134
      %v3136 = vlaneseq
      %v3137 = vshrl.u32 %v3136, 7
      %v3138 = vsub.s32 %v2534, %v3137
      %v3139 = vrot.slane %v3087, %v3138
      %v3140 = vlaneseq
      %v3141 = vshrl.u32 %v3140, 7
      %v3142 = vsub.s32 %v2534, %v3141
      %v3143 = vrot.slane %v3090, %v3142
      %v3144 = vlaneseq
      %v3145 = vshrl.u32 %v3144, 7
      %v3146 = vsub.s32 %v2534, %v3145
      %v3147 = vrot.slane %v3093, %v3146
      %v3148 = vlaneseq
      %v3149 = vshrl.u32 %v3148, 7
      %v3150 = vsub.s32 %v2534, %v3149
      %v3151 = vrot.slane %v3096, %v3150
      %v3152 = vlaneseq
      %v3153 = vshrl.u32 %v3152, 7
      %v3154 = vsub.s32 %v2534, %v3153
      %v3155 = vrot.slane %v3099, %v3154
      %v3156 = vlaneseq
      %v3157 = vshrl.u32 %v3156, 7
      %v3158 = vsub.s32 %v2534, %v3157
      %v3159 = vrot.slane %v3102, %v3158
      %v3160 = vlaneseq
      %v3161 = vshrl.u32 %v3160, 7
      %v3162 = vsub.s32 %v2534, %v3161
      %v3163 = vrot.slane %v3105, %v3162
      %v3164 = vlaneseq
      %v3165 = vshrl.u32 %v3164, 7
      %v3166 = vsub.s32 %v2534, %v3165
      %v3167 = vrot.slane %v3108, %v3166
      %v3168 = vlaneseq
      %v3169 = vshrl.u32 %v3168, 7
      %v3170 = vsub.s32 %v2534, %v3169
      %v3171 = vrot.slane %v3111, %v3170
      %v3172 = vlaneseq
      %v3173 = vshrl.u32 %v3172, 7
      %v3174 = vsub.s32 %v2534, %v3173
      %v3175 = vrot.slane %v3114, %v3174
      %v3176 = vlaneseq
      %v3177 = vshrl.u32 %v3176, 7
      %v3178 = vsub.s32 %v2534, %v3177
      %v3179 = vrot.slane %v3117, %v3178
      %v3180 = vlaneseq
      %v3181 = vshrl.u32 %v3180, 7
      %v3182 = vsub.s32 %v2534, %v3181
      %v3183 = vrot.slane %v3120, %v3182
      %v3184 = vlaneseq
      %v3185 = vshrl.u32 %v3184, 7
      %v3186 = vsub.s32 %v2534, %v3185
      %v3187 = vrot.slane %v3123, %v3186
      %v3188 = vsel %vm2871, %v3131, %v3127
      %v3189 = vsel %vm2873, %v3135, %v3188
      %v3190 = vsel %vm2875, %v3139, %v3189
      %v3191 = vsel %vm2877, %v3143, %v3190
      %v3192 = vsel %vm2879, %v3147, %v3191
      %v3193 = vsel %vm2881, %v3151, %v3192
      %v3194 = vsel %vm2883, %v3155, %v3193
      %v3195 = vsel %vm2871, %v3163, %v3159
      %v3196 = vsel %vm2873, %v3167, %v3195
      %v3197 = vsel %vm2875, %v3171, %v3196
      %v3198 = vsel %vm2877, %v3175, %v3197
      %v3199 = vsel %vm2879, %v3179, %v3198
      %v3200 = vsel %vm2881, %v3183, %v3199
      %v3201 = vsel %vm2883, %v3187, %v3200
      %v3204 = vsel %vm3058, %v3194, %v2286
      %v3205 = vsel %vm3059, %v3201, %v2287
    $region77: #{tpu_custom_call.1} parent=1 // loop_footer
      %s2285 = sadd.s32 1, %s2281
    $region78: #{tpu_custom_call.1} parent=1 // loop_footer_branch
      %2280 = sbr.rel target = $region74
    $region79: #{tpu_custom_call.1} parent=1 // loop_exit
      _
    %v3206 = vld [vmem:[%s11] sm:$0x1]
    %v3208 = vlaneseq
    %v3209 = vshrl.u32 %v3208, 7
    %v3210 = vsub.s32 0, %v3209
    %v3211 = vrot.slane %v3206, %v3210
    %v3213 = vadd.f32 %v2286, %v3211
    %v3214 = vadd.f32 %v2287, %v3211
    %v3215 = vlaneseq
    %v3216 = vand.u32 %v3215, 127
    %vm3217 = vcmask 64512
    %v3218 = vsel %vm3217, %v3213, -inf
    %3219 = vmax.xlane.f32.xlu0 %v3218
    %v3220 = vpop.xlane.xlu0 %3219
    %v3221 = vsel %vm3217, %v3214, -inf
    %3222 = vmax.xlane.f32.xlu0 %v3221
    %v3223 = vpop.xlane.xlu0 %3222
    %vm3224 = vcmp.eq.f32.partialorder %v3213, %v3220
    %vm3225 = vcmp.eq.f32.partialorder %v3214, %v3223
    %v3226 = vsel %vm3224, %v3216, 8
    %v3227 = vsel %vm3225, %v3216, 8
    %v3228 = vsel %vm3217, %v3226, 2147483647
    %v3229 = vand.u32 %v3228, 65535
    %v3230 = vshra.s32 %v3228, 16
    %v3231 = vcvt.s32.f32 %v3229
    %v3232 = vcvt.s32.f32 %v3230
    %3233 = vmin.xlane.f32.xlu0 %v3232
    %v3234 = vpop.xlane.xlu0 %3233
    %vm3235 = vcmp.eq.f32.partialorder %v3232, %v3234
    %v3236 = vsel %vm3235, %v3231, inf
    %3237 = vmin.xlane.f32.xlu0 %v3236
    %v3238 = vpop.xlane.xlu0 %3237
    %v3239 = vcvt.f32.s32 %v3238
    %v3240 = vcvt.f32.s32 %v3234
    %v3241 = vshll.u32 %v3240, 16
    %v3242 = vadd.s32 %v3241, %v3239
    %v3243 = vsel %vm3217, %v3227, 2147483647
    %v3244 = vand.u32 %v3243, 65535
    %v3245 = vshra.s32 %v3243, 16
    %v3246 = vcvt.s32.f32 %v3244
    %v3247 = vcvt.s32.f32 %v3245
    %3248 = vmin.xlane.f32.xlu0 %v3247
    %v3249 = vpop.xlane.xlu0 %3248
    %vm3250 = vcmp.eq.f32.partialorder %v3247, %v3249
    %v3251 = vsel %vm3250, %v3246, inf
    %3252 = vmin.xlane.f32.xlu0 %v3251
    %v3253 = vpop.xlane.xlu0 %3252
    %v3254 = vcvt.f32.s32 %v3253
    %v3255 = vcvt.f32.s32 %v3249
    %v3256 = vshll.u32 %v3255, 16
    %v3257 = vadd.s32 %v3256, %v3254
    %vm3258 = vcmp.eq.s32.totalorder %v3216, 7
    %v3259 = vsel %vm3258, %v3242, 0
    %v3260 = vsel %vm3258, %v3257, 0
    loop: start=0, step=1, limit=7
    $region80: #{tpu_custom_call.1} parent=1 // loop_pre_header
      _
    $region81: #{tpu_custom_call.1} parent=1 // loop_header
      %s3262 = sphi 0, %s3266
      %p3263 = scmp.ge.s32.totalorder %s3262, 7
      %v3267 = vphi %v3242, %v3317
      %v3268 = vphi %v3257, %v3318
      %v3269 = vphi %v3259, %v3328
      %v3270 = vphi %v3260, %v3329
    $region82: #{tpu_custom_call.1} parent=1 // loop_header_branch
      %3265 = sbr.rel (%p3263) target = $region86
    $region83: #{tpu_custom_call.1} parent=1 // loop_body
      %s3271 = ssub.s32 7, %s3262
      %s3272 = smul.u32 %s3271, 16
      %s3273 = scalar_lea.vmem [#allocation6], %s3272
      %v3274 = vld [vmem:[%s3273] sm:$0xff]
      %v3275 = vld [vmem:[%s3273 + $0x8] sm:$0xff]
      %3276 = vset.pattern.permute.xlu0 0
      %3277 = vperm.xlu0 %3276, %v3267
      %v3278 = vpop.permute.xlu0 %3277
      %3279 = vset.pattern.permute.xlu0 0
      %3280 = vperm.xlu0 %3279, %v3268
      %v3281 = vpop.permute.xlu0 %3280
      %vm3282 = vcmp.eq.s32.totalorder %v3216, %v3278
      %vm3283 = vcmp.eq.s32.totalorder %v3216, %v3281
      %v3284 = vsel %vm3282, %v3274, 0
      %v3285 = vsel %vm3283, %v3275, 0
      %v3286 = vsel %vm3217, %v3284, 0
      %v3287 = vand.u32 %v3286, 65535
      %v3288 = vshrl.u32 %v3286, 16
      %v3289 = vcvt.s32.f32 %v3287
      %v3290 = vcvt.s32.f32 %v3288
      %3291 = vadd.xlane.f32.xlu0 %v3289
      %v3292 = vpop.xlane.xlu0 %3291
      %3293 = vadd.xlane.f32.xlu0 %v3290
      %v3294 = vpop.xlane.xlu0 %3293
      %v3295 = vcvt.f32.s32 %v3292
      %v3296 = vcvt.f32.s32 %v3294
      %v3297 = vshll.u32 %v3296, 16
      %v3298 = vadd.s32 %v3297, %v3295
      %v3299 = vsel %vm3217, %v3285, 0
      %v3300 = vand.u32 %v3299, 65535
      %v3301 = vshrl.u32 %v3299, 16
      %v3302 = vcvt.s32.f32 %v3300
      %v3303 = vcvt.s32.f32 %v3301
      %3304 = vadd.xlane.f32.xlu0 %v3302
      %v3305 = vpop.xlane.xlu0 %3304
      %3306 = vadd.xlane.f32.xlu0 %v3303
      %v3307 = vpop.xlane.xlu0 %3306
      %v3308 = vcvt.f32.s32 %v3305
      %v3309 = vcvt.f32.s32 %v3307
      %v3310 = vshll.u32 %v3309, 16
      %v3311 = vadd.s32 %v3310, %v3308
      %s3312 = scalar_lea.vmem %s1, %s3272
      %v3313 = vld [vmem:[%s3312] sm:$0xff]
      %v3314 = vld [vmem:[%s3312 + $0x8] sm:$0xff]
      %vm3315 = vcmp.gt.f32.partialorder %v3313, 0.0
      %vm3316 = vcmp.gt.f32.partialorder %v3314, 0.0
      %v3317 = vsel %vm3315, %v3298, %v3267
      %v3318 = vsel %vm3316, %v3311, %v3268
      %s3319 = ssub.s32 6, %s3262
      %v3320 = vstv %s3319
      %vm3321 = vcmp.eq.s32.totalorder %v3216, %v3320
      %3322 = vset.pattern.permute.xlu0 0
      %3323 = vperm.xlu0 %3322, %v3317
      %v3324 = vpop.permute.xlu0 %3323
      %3325 = vset.pattern.permute.xlu0 0
      %3326 = vperm.xlu0 %3325, %v3318
      %v3327 = vpop.permute.xlu0 %3326
      %v3328 = vsel %vm3321, %v3324, %v3269
      %v3329 = vsel %vm3321, %v3327, %v3270
    $region84: #{tpu_custom_call.1} parent=1 // loop_footer
      %s3266 = sadd.s32 1, %s3262
    $region85: #{tpu_custom_call.1} parent=1 // loop_footer_branch
      %3261 = sbr.rel target = $region81
    $region86: #{tpu_custom_call.1} parent=1 // loop_exit
      _
    %3330 = vst [vmem:[#allocation15] sm:$0xff] %v3269
    %3331 = vst [vmem:[#allocation15 + $0x8] sm:$0xff] %v3270
    // Predicated region
    $region87: #{tpu_custom_call.1} parent=1 // pred_check
      _
    $region88: #{tpu_custom_call.1} parent=1 // pred_check_branch
      %3333 = sbr.rel (0) target = $region90
    $region89: #{tpu_custom_call.1} parent=1 // pred_region
      %s3335 = ssub.s32 256, 256
      %3336 = vsyncadd [#allocation9], %s3335
      %s3337 = sshll.u32 [#allocation15], 4
      %s3338 = int_to_ptr.vmem [resolvable:$true] %s3337
      %3343 = dma.vmem_to_hbm [thread:$0]  %s3338, 256, %s12, [#allocation9], 128, 128, 8
    $region90: #{tpu_custom_call.1} parent=1 // pred_fallthru
      _
    // Predicated region
    $region91: #{tpu_custom_call.1} parent=1 // pred_check
      _
    $region92: #{tpu_custom_call.1} parent=1 // pred_check_branch
      %3345 = sbr.rel (0) target = $region94
    $region93: #{tpu_custom_call.1} parent=1 // pred_region
      %3346 = dma.done [#allocation9], 256
    $region94: #{tpu_custom_call.1} parent=1 // pred_fallthru
      _
    %3347 = vsyncpa [#allocation8], 1
    %3348 = vsyncpa [#allocation11], 1
    %3349 = vsyncpa [#allocation14], 1
    %3350 = vsyncpa [#allocation9], 1

</llo_original>
